<compile_context>
chip_gen: v7x
topology: tpu7x:2x2x1
jax: 0.10.0
libtpu: 0.0.40
codegen_flags: <defaults>
</compile_context>

<pallas_src>
import functools

import jax
import jax.numpy as jnp
from jax.experimental import pallas as pl
from jax.experimental.pallas import tpu as pltpu

LANE = 128


# ----------------------------------------------------------------------------
# Pallas kernel: fused (bf16 matmul + per-output-channel shift + activation)
# ----------------------------------------------------------------------------
def _mm_shift_act_kernel(p_ref, w_ref, shift_ref, o_ref, *, act):
    # bf16 x bf16 -> f32 accumulation on the MXU
    y = jnp.dot(p_ref[...], w_ref[...], preferred_element_type=jnp.float32)
    y = y + shift_ref[...]                  # folded BN shift / conv bias (f32)
    if act == "leaky":                      # nn.LeakyReLU(negative_slope=0.01)
        y = jnp.where(y > 0, y, 0.01 * y)
    elif act == "sigmoid":                  # nn.Sigmoid
        y = jax.nn.sigmoid(y)
    o_ref[...] = y.astype(o_ref.dtype)


def _choose_tile_m(M, max_tile=512):
    """Pick a row tile that (a) divides M when possible (no pad copy) and
    (b) keeps >= 2 grid steps so both v7x TensorCores get work."""
    tile = min(max_tile, M)
    if tile == M and M >= 16:
        tile = pl.cdiv(M, 2)
    tile = max(8, ((tile + 7) // 8) * 8)
    return tile


def matmul_shift_act(patches, w2, shift, act):
    """out = act(patches @ w2 + shift), tiled over M, lane-dense over Cout."""
    M, K = patches.shape
    Cout = w2.shape[1]

    # lane-dense output: pad Cout up to a multiple of 128 with zero columns
    Coutp = pl.cdiv(Cout, LANE) * LANE
    if Coutp != Cout:
        w2 = jnp.pad(w2, ((0, 0), (0, Coutp - Cout)))
        shift = jnp.pad(shift, (0, Coutp - Cout))

    tile_m = _choose_tile_m(M)
    Mp = pl.cdiv(M, tile_m) * tile_m
    if Mp != M:  # only taken if tile_m does not divide M
        patches = jnp.pad(patches, ((0, Mp - M), (0, 0)))

    patches_bf = patches.astype(jnp.bfloat16)
    w2_bf = w2.astype(jnp.bfloat16)
    shift = shift.astype(jnp.float32).reshape(1, Coutp)

    kernel = functools.partial(_mm_shift_act_kernel, act=act)
    out = pl.pallas_call(
        kernel,
        out_shape=jax.ShapeDtypeStruct((Mp, Coutp), jnp.float32),
        grid=(Mp // tile_m,),
        in_specs=[
            pl.BlockSpec((tile_m, K), lambda i: (i, 0)),
            pl.BlockSpec((K, Coutp), lambda i: (0, 0)),
            pl.BlockSpec((1, Coutp), lambda i: (0, 0)),
        ],
        out_specs=pl.BlockSpec((tile_m, Coutp), lambda i: (i, 0)),
        compiler_params=pltpu.CompilerParams(dimension_semantics=("parallel",)),
    )(patches_bf, w2_bf, shift)
    return out[:M, :Cout]


# ----------------------------------------------------------------------------
# Conv2d wrapper (im2col glue in plain JAX; matmul hot path in Pallas)
# ----------------------------------------------------------------------------
def conv2d(x, w, *, stride=1, padding=1, pad_mode="reflect",
           scale=None, shift=None, act="none"):
    """x: (N, H, W, Cin) NHWC.  w: (Cout, Cin, KH, KW) (PyTorch layout)."""
    Cout, Cin, KH, KW = w.shape
    if padding > 0:
        xp = jnp.pad(x, ((0, 0), (padding, padding), (padding, padding), (0, 0)),
                     mode=pad_mode)
    else:
        xp = x
    N, Hp, Wp, _ = xp.shape
    Ho = (Hp - KH) // stride + 1
    Wo = (Wp - KW) // stride + 1

    cols = []
    for dy in range(KH):
        for dx in range(KW):
            cols.append(xp[:, dy:dy + stride * (Ho - 1) + 1:stride,
                            dx:dx + stride * (Wo - 1) + 1:stride, :])
    patches = jnp.stack(cols, axis=3)                    # (N, Ho, Wo, KH*KW, Cin)
    patches = patches.reshape(N * Ho * Wo, KH * KW * Cin)

    # weight -> (KH, KW, Cin, Cout) -> (KH*KW*Cin, Cout) to match patch ordering
    w2 = jnp.transpose(w, (2, 3, 1, 0)).reshape(KH * KW * Cin, Cout)
    if scale is not None:                                # fold BN scale into W
        w2 = w2 * scale[None, :]
    if shift is None:
        shift = jnp.zeros((Cout,), jnp.float32)

    out = matmul_shift_act(patches, w2, shift, act)
    return out.reshape(N, Ho, Wo, Cout)


def bn_fold(gamma, beta, mean, var, eps=1e-5):
    scale = gamma / jnp.sqrt(var + eps)
    shift = beta - mean * scale
    return scale, shift


# ----------------------------------------------------------------------------
# UNet blocks
# ----------------------------------------------------------------------------
def conv_block(x, p):
    s1, b1 = bn_fold(*p["bn1"])
    x = conv2d(x, p["w1"], stride=1, padding=1, pad_mode="reflect",
               scale=s1, shift=b1, act="leaky")
    s2, b2 = bn_fold(*p["bn2"])
    x = conv2d(x, p["w2"], stride=1, padding=1, pad_mode="reflect",
               scale=s2, shift=b2, act="leaky")
    return x


def downsample(x, p):
    s, b = bn_fold(*p["bn"])
    return conv2d(x, p["w"], stride=2, padding=1, pad_mode="reflect",
                  scale=s, shift=b, act="leaky")


def upsample(x, feature_map, p):
    # 1x1 conv commutes with nearest-neighbor upsample: conv(up(x)) == up(conv(x)).
    # Running the conv at low resolution cuts the matmul rows by 4x (exact result).
    out = conv2d(x, p["w"], stride=1, padding=0, shift=p["b"], act="none")
    up = jnp.repeat(jnp.repeat(out, 2, axis=1), 2, axis=2)  # F.interpolate nearest x2
    return jnp.concatenate([up, feature_map], axis=-1)      # cat along channels


def unet_forward(x_nchw, params):
    x = jnp.transpose(x_nchw, (0, 2, 3, 1))               # NCHW -> NHWC
    R1 = conv_block(x, params["c1"])
    R2 = conv_block(downsample(R1, params["d1"]), params["c2"])
    O4 = conv_block(upsample(R2, R1, params["u4"]), params["c9"])
    y = conv2d(O4, params["out_w"], stride=1, padding=1, pad_mode="constant",
               shift=params["out_b"], act="sigmoid")
    return jnp.transpose(y, (0, 3, 1, 2))                  # NHWC -> NCHW


# ----------------------------------------------------------------------------
# Deterministic parameter initialization (synthetic, matches module shapes)
# ----------------------------------------------------------------------------
def _init_params(key):
    keys = iter(jax.random.split(key, 64))

    def conv_w(co, ci, k):
        return 0.1 * jax.random.normal(next(keys), (co, ci, k, k), jnp.float32)

    def bn(c):
        gamma = 1.0 + 0.1 * jax.random.normal(next(keys), (c,), jnp.float32)
        beta = 0.1 * jax.random.normal(next(keys), (c,), jnp.float32)
        mean = 0.1 * jax.random.normal(next(keys), (c,), jnp.float32)
        var = 0.5 + jnp.abs(jax.random.normal(next(keys), (c,), jnp.float32))
        return (gamma, beta, mean, var)

    def cblock(ci, co):
        return {"w1": conv_w(co, ci, 3), "bn1": bn(co),
                "w2": conv_w(co, co, 3), "bn2": bn(co)}

    params = {
        "c1": cblock(3, 5),
        "d1": {"w": conv_w(5, 5, 3), "bn": bn(5)},
        "c2": cblock(5, 20),
        "u4": {"w": conv_w(20, 20, 1),
               "b": 0.1 * jax.random.normal(next(keys), (20,), jnp.float32)},
        "c9": cblock(25, 5),
        "out_w": conv_w(1, 5, 3),
        "out_b": 0.1 * jax.random.normal(next(keys), (1,), jnp.float32),
    }
    return params


if __name__ == "__main__":
    key = jax.random.PRNGKey(0)
    k_param, k_x = jax.random.split(key)
    params = _init_params(k_param)

    # small NCHW input consistent with UNet.forward (3 input channels)
    x = jax.random.normal(k_x, (2, 3, 16, 16), jnp.float32)

    y = jax.jit(unet_forward)(x, params)
    y = jax.block_until_ready(y)

    assert y.shape == (2, 1, 16, 16), y.shape
    assert bool(jnp.all(jnp.isfinite(y)))
    assert bool(jnp.all((y >= 0.0) & (y <= 1.0)))          # sigmoid output range
    print("KERNEL_OK")
</pallas_src>

<mosaic_0001>
module attributes {stable_mosaic.version = 11 : i64} {
  func.func @_mm_shift_act_kernel(%arg0: i32, %arg1: memref<256x27xbf16, #tpu.memory_space<vmem>>, %arg2: memref<27x128xbf16, #tpu.memory_space<vmem>>, %arg3: memref<1x128xf32, #tpu.memory_space<vmem>>, %arg4: memref<256x128xf32, #tpu.memory_space<vmem>>) attributes {dimension_semantics = [#tpu.dimension_semantics<parallel>], iteration_bounds = array<i64: 2>, scalar_prefetch = 0 : i64, scratch_operands = 0 : i64, tpu.core_type = #tpu.core_type<tc>, window_params = [{transform_indices = @transform_0, window_bounds = array<i64: 256, 27>}, {pipeline_mode = #tpu.pipeline_mode<synchronous>, transform_indices = @transform_1, window_bounds = array<i64: 27, 128>}, {pipeline_mode = #tpu.pipeline_mode<synchronous>, transform_indices = @transform_2, window_bounds = array<i64: 1, 128>}, {transform_indices = @transform_3, window_bounds = array<i64: 256, 128>}]} {
    %c0 = arith.constant 0 : index
    %c0_0 = arith.constant 0 : index
    %0 = vector.load %arg1[%c0, %c0_0] : memref<256x27xbf16, #tpu.memory_space<vmem>>, vector<256x27xbf16>
    %c0_1 = arith.constant 0 : index
    %c0_2 = arith.constant 0 : index
    %1 = vector.load %arg2[%c0_1, %c0_2] : memref<27x128xbf16, #tpu.memory_space<vmem>>, vector<27x128xbf16>
    %cst = arith.constant dense<0.000000e+00> : vector<256x128xf32>
    %2 = tpu.matmul %0, %1, %cst {dimension_numbers = #tpu.dot_dimension_numbers<[1], [0], [0], [1], [0, 0, 1, 1], [], []>} : vector<256x27xbf16>, vector<27x128xbf16>, vector<256x128xf32> -> vector<256x128xf32>
    %c0_3 = arith.constant 0 : index
    %c0_4 = arith.constant 0 : index
    %3 = vector.load %arg3[%c0_3, %c0_4] : memref<1x128xf32, #tpu.memory_space<vmem>>, vector<1x128xf32>
    %4 = vector.broadcast %3 : vector<1x128xf32> to vector<256x128xf32>
    %5 = arith.addf %2, %4 : vector<256x128xf32>
    %cst_5 = arith.constant 0.000000e+00 : f32
    %6 = vector.broadcast %cst_5 : f32 to vector<256x128xf32>
    %7 = arith.cmpf ogt, %5, %6 : vector<256x128xf32>
    %cst_6 = arith.constant 0.00999999977 : f32
    %8 = vector.broadcast %cst_6 : f32 to vector<256x128xf32>
    %9 = arith.mulf %8, %5 : vector<256x128xf32>
    %10 = arith.select %7, %5, %9 : vector<256x128xi1>, vector<256x128xf32>
    %c0_7 = arith.constant 0 : index
    %c0_8 = arith.constant 0 : index
    %11 = vector.load %arg4[%c0_7, %c0_8] : memref<256x128xf32, #tpu.memory_space<vmem>>, vector<256x128xf32>
    tpu.vector_store %arg4[%c0_7, %c0_8], %10 {strides = array<i32>} : memref<256x128xf32, #tpu.memory_space<vmem>>, vector<256x128xf32>,
    return
  }
  func.func @transform_0(%arg0: i32) -> (i32, i32) {
    %c0_i32 = arith.constant 0 : i32
    %c0_i32_0 = arith.constant 0 : i32
    return %arg0, %c0_i32 : i32, i32
  }
  func.func @transform_1(%arg0: i32) -> (i32, i32) {
    %c0_i32 = arith.constant 0 : i32
    %c0_i32_0 = arith.constant 0 : i32
    %c0_i32_1 = arith.constant 0 : i32
    return %c0_i32, %c0_i32_0 : i32, i32
  }
  func.func @transform_2(%arg0: i32) -> (i32, i32) {
    %c0_i32 = arith.constant 0 : i32
    %c0_i32_0 = arith.constant 0 : i32
    %c0_i32_1 = arith.constant 0 : i32
    return %c0_i32, %c0_i32_0 : i32, i32
  }
  func.func @transform_3(%arg0: i32) -> (i32, i32) {
    %c0_i32 = arith.constant 0 : i32
    %c0_i32_0 = arith.constant 0 : i32
    return %arg0, %c0_i32 : i32, i32
  }
}

module attributes {stable_mosaic.version = 11 : i64} {
  func.func @_mm_shift_act_kernel(%arg0: i32, %arg1: memref<256x45xbf16, #tpu.memory_space<vmem>>, %arg2: memref<45x128xbf16, #tpu.memory_space<vmem>>, %arg3: memref<1x128xf32, #tpu.memory_space<vmem>>, %arg4: memref<256x128xf32, #tpu.memory_space<vmem>>) attributes {dimension_semantics = [#tpu.dimension_semantics<parallel>], iteration_bounds = array<i64: 2>, scalar_prefetch = 0 : i64, scratch_operands = 0 : i64, tpu.core_type = #tpu.core_type<tc>, window_params = [{transform_indices = @transform_0, window_bounds = array<i64: 256, 45>}, {pipeline_mode = #tpu.pipeline_mode<synchronous>, transform_indices = @transform_1, window_bounds = array<i64: 45, 128>}, {pipeline_mode = #tpu.pipeline_mode<synchronous>, transform_indices = @transform_2, window_bounds = array<i64: 1, 128>}, {transform_indices = @transform_3, window_bounds = array<i64: 256, 128>}]} {
    %c0 = arith.constant 0 : index
    %c0_0 = arith.constant 0 : index
    %0 = vector.load %arg1[%c0, %c0_0] : memref<256x45xbf16, #tpu.memory_space<vmem>>, vector<256x45xbf16>
    %c0_1 = arith.constant 0 : index
    %c0_2 = arith.constant 0 : index
    %1 = vector.load %arg2[%c0_1, %c0_2] : memref<45x128xbf16, #tpu.memory_space<vmem>>, vector<45x128xbf16>
    %cst = arith.constant dense<0.000000e+00> : vector<256x128xf32>
    %2 = tpu.matmul %0, %1, %cst {dimension_numbers = #tpu.dot_dimension_numbers<[1], [0], [0], [1], [0, 0, 1, 1], [], []>} : vector<256x45xbf16>, vector<45x128xbf16>, vector<256x128xf32> -> vector<256x128xf32>
    %c0_3 = arith.constant 0 : index
    %c0_4 = arith.constant 0 : index
    %3 = vector.load %arg3[%c0_3, %c0_4] : memref<1x128xf32, #tpu.memory_space<vmem>>, vector<1x128xf32>
    %4 = vector.broadcast %3 : vector<1x128xf32> to vector<256x128xf32>
    %5 = arith.addf %2, %4 : vector<256x128xf32>
    %cst_5 = arith.constant 0.000000e+00 : f32
    %6 = vector.broadcast %cst_5 : f32 to vector<256x128xf32>
    %7 = arith.cmpf ogt, %5, %6 : vector<256x128xf32>
    %cst_6 = arith.constant 0.00999999977 : f32
    %8 = vector.broadcast %cst_6 : f32 to vector<256x128xf32>
    %9 = arith.mulf %8, %5 : vector<256x128xf32>
    %10 = arith.select %7, %5, %9 : vector<256x128xi1>, vector<256x128xf32>
    %c0_7 = arith.constant 0 : index
    %c0_8 = arith.constant 0 : index
    %11 = vector.load %arg4[%c0_7, %c0_8] : memref<256x128xf32, #tpu.memory_space<vmem>>, vector<256x128xf32>
    tpu.vector_store %arg4[%c0_7, %c0_8], %10 {strides = array<i32>} : memref<256x128xf32, #tpu.memory_space<vmem>>, vector<256x128xf32>,
    return
  }
  func.func @transform_0(%arg0: i32) -> (i32, i32) {
    %c0_i32 = arith.constant 0 : i32
    %c0_i32_0 = arith.constant 0 : i32
    return %arg0, %c0_i32 : i32, i32
  }
  func.func @transform_1(%arg0: i32) -> (i32, i32) {
    %c0_i32 = arith.constant 0 : i32
    %c0_i32_0 = arith.constant 0 : i32
    %c0_i32_1 = arith.constant 0 : i32
    return %c0_i32, %c0_i32_0 : i32, i32
  }
  func.func @transform_2(%arg0: i32) -> (i32, i32) {
    %c0_i32 = arith.constant 0 : i32
    %c0_i32_0 = arith.constant 0 : i32
    %c0_i32_1 = arith.constant 0 : i32
    return %c0_i32, %c0_i32_0 : i32, i32
  }
  func.func @transform_3(%arg0: i32) -> (i32, i32) {
    %c0_i32 = arith.constant 0 : i32
    %c0_i32_0 = arith.constant 0 : i32
    return %arg0, %c0_i32 : i32, i32
  }
}

module attributes {stable_mosaic.version = 11 : i64} {
  func.func @_mm_shift_act_kernel(%arg0: i32, %arg1: memref<64x45xbf16, #tpu.memory_space<vmem>>, %arg2: memref<45x128xbf16, #tpu.memory_space<vmem>>, %arg3: memref<1x128xf32, #tpu.memory_space<vmem>>, %arg4: memref<64x128xf32, #tpu.memory_space<vmem>>) attributes {dimension_semantics = [#tpu.dimension_semantics<parallel>], iteration_bounds = array<i64: 2>, scalar_prefetch = 0 : i64, scratch_operands = 0 : i64, tpu.core_type = #tpu.core_type<tc>, window_params = [{transform_indices = @transform_0, window_bounds = array<i64: 64, 45>}, {pipeline_mode = #tpu.pipeline_mode<synchronous>, transform_indices = @transform_1, window_bounds = array<i64: 45, 128>}, {pipeline_mode = #tpu.pipeline_mode<synchronous>, transform_indices = @transform_2, window_bounds = array<i64: 1, 128>}, {transform_indices = @transform_3, window_bounds = array<i64: 64, 128>}]} {
    %c0 = arith.constant 0 : index
    %c0_0 = arith.constant 0 : index
    %0 = vector.load %arg1[%c0, %c0_0] : memref<64x45xbf16, #tpu.memory_space<vmem>>, vector<64x45xbf16>
    %c0_1 = arith.constant 0 : index
    %c0_2 = arith.constant 0 : index
    %1 = vector.load %arg2[%c0_1, %c0_2] : memref<45x128xbf16, #tpu.memory_space<vmem>>, vector<45x128xbf16>
    %cst = arith.constant dense<0.000000e+00> : vector<64x128xf32>
    %2 = tpu.matmul %0, %1, %cst {dimension_numbers = #tpu.dot_dimension_numbers<[1], [0], [0], [1], [0, 0, 1, 1], [], []>} : vector<64x45xbf16>, vector<45x128xbf16>, vector<64x128xf32> -> vector<64x128xf32>
    %c0_3 = arith.constant 0 : index
    %c0_4 = arith.constant 0 : index
    %3 = vector.load %arg3[%c0_3, %c0_4] : memref<1x128xf32, #tpu.memory_space<vmem>>, vector<1x128xf32>
    %4 = vector.broadcast %3 : vector<1x128xf32> to vector<64x128xf32>
    %5 = arith.addf %2, %4 : vector<64x128xf32>
    %cst_5 = arith.constant 0.000000e+00 : f32
    %6 = vector.broadcast %cst_5 : f32 to vector<64x128xf32>
    %7 = arith.cmpf ogt, %5, %6 : vector<64x128xf32>
    %cst_6 = arith.constant 0.00999999977 : f32
    %8 = vector.broadcast %cst_6 : f32 to vector<64x128xf32>
    %9 = arith.mulf %8, %5 : vector<64x128xf32>
    %10 = arith.select %7, %5, %9 : vector<64x128xi1>, vector<64x128xf32>
    %c0_7 = arith.constant 0 : index
    %c0_8 = arith.constant 0 : index
    %11 = vector.load %arg4[%c0_7, %c0_8] : memref<64x128xf32, #tpu.memory_space<vmem>>, vector<64x128xf32>
    tpu.vector_store %arg4[%c0_7, %c0_8], %10 {strides = array<i32>} : memref<64x128xf32, #tpu.memory_space<vmem>>, vector<64x128xf32>,
    return
  }
  func.func @transform_0(%arg0: i32) -> (i32, i32) {
    %c0_i32 = arith.constant 0 : i32
    %c0_i32_0 = arith.constant 0 : i32
    return %arg0, %c0_i32 : i32, i32
  }
  func.func @transform_1(%arg0: i32) -> (i32, i32) {
    %c0_i32 = arith.constant 0 : i32
    %c0_i32_0 = arith.constant 0 : i32
    %c0_i32_1 = arith.constant 0 : i32
    return %c0_i32, %c0_i32_0 : i32, i32
  }
  func.func @transform_2(%arg0: i32) -> (i32, i32) {
    %c0_i32 = arith.constant 0 : i32
    %c0_i32_0 = arith.constant 0 : i32
    %c0_i32_1 = arith.constant 0 : i32
    return %c0_i32, %c0_i32_0 : i32, i32
  }
  func.func @transform_3(%arg0: i32) -> (i32, i32) {
    %c0_i32 = arith.constant 0 : i32
    %c0_i32_0 = arith.constant 0 : i32
    return %arg0, %c0_i32 : i32, i32
  }
}

module attributes {stable_mosaic.version = 11 : i64} {
  func.func @_mm_shift_act_kernel(%arg0: i32, %arg1: memref<64x180xbf16, #tpu.memory_space<vmem>>, %arg2: memref<180x128xbf16, #tpu.memory_space<vmem>>, %arg3: memref<1x128xf32, #tpu.memory_space<vmem>>, %arg4: memref<64x128xf32, #tpu.memory_space<vmem>>) attributes {dimension_semantics = [#tpu.dimension_semantics<parallel>], iteration_bounds = array<i64: 2>, scalar_prefetch = 0 : i64, scratch_operands = 0 : i64, tpu.core_type = #tpu.core_type<tc>, window_params = [{transform_indices = @transform_0, window_bounds = array<i64: 64, 180>}, {pipeline_mode = #tpu.pipeline_mode<synchronous>, transform_indices = @transform_1, window_bounds = array<i64: 180, 128>}, {pipeline_mode = #tpu.pipeline_mode<synchronous>, transform_indices = @transform_2, window_bounds = array<i64: 1, 128>}, {transform_indices = @transform_3, window_bounds = array<i64: 64, 128>}]} {
    %c0 = arith.constant 0 : index
    %c0_0 = arith.constant 0 : index
    %0 = vector.load %arg1[%c0, %c0_0] : memref<64x180xbf16, #tpu.memory_space<vmem>>, vector<64x180xbf16>
    %c0_1 = arith.constant 0 : index
    %c0_2 = arith.constant 0 : index
    %1 = vector.load %arg2[%c0_1, %c0_2] : memref<180x128xbf16, #tpu.memory_space<vmem>>, vector<180x128xbf16>
    %cst = arith.constant dense<0.000000e+00> : vector<64x128xf32>
    %2 = tpu.matmul %0, %1, %cst {dimension_numbers = #tpu.dot_dimension_numbers<[1], [0], [0], [1], [0, 0, 1, 1], [], []>} : vector<64x180xbf16>, vector<180x128xbf16>, vector<64x128xf32> -> vector<64x128xf32>
    %c0_3 = arith.constant 0 : index
    %c0_4 = arith.constant 0 : index
    %3 = vector.load %arg3[%c0_3, %c0_4] : memref<1x128xf32, #tpu.memory_space<vmem>>, vector<1x128xf32>
    %4 = vector.broadcast %3 : vector<1x128xf32> to vector<64x128xf32>
    %5 = arith.addf %2, %4 : vector<64x128xf32>
    %cst_5 = arith.constant 0.000000e+00 : f32
    %6 = vector.broadcast %cst_5 : f32 to vector<64x128xf32>
    %7 = arith.cmpf ogt, %5, %6 : vector<64x128xf32>
    %cst_6 = arith.constant 0.00999999977 : f32
    %8 = vector.broadcast %cst_6 : f32 to vector<64x128xf32>
    %9 = arith.mulf %8, %5 : vector<64x128xf32>
    %10 = arith.select %7, %5, %9 : vector<64x128xi1>, vector<64x128xf32>
    %c0_7 = arith.constant 0 : index
    %c0_8 = arith.constant 0 : index
    %11 = vector.load %arg4[%c0_7, %c0_8] : memref<64x128xf32, #tpu.memory_space<vmem>>, vector<64x128xf32>
    tpu.vector_store %arg4[%c0_7, %c0_8], %10 {strides = array<i32>} : memref<64x128xf32, #tpu.memory_space<vmem>>, vector<64x128xf32>,
    return
  }
  func.func @transform_0(%arg0: i32) -> (i32, i32) {
    %c0_i32 = arith.constant 0 : i32
    %c0_i32_0 = arith.constant 0 : i32
    return %arg0, %c0_i32 : i32, i32
  }
  func.func @transform_1(%arg0: i32) -> (i32, i32) {
    %c0_i32 = arith.constant 0 : i32
    %c0_i32_0 = arith.constant 0 : i32
    %c0_i32_1 = arith.constant 0 : i32
    return %c0_i32, %c0_i32_0 : i32, i32
  }
  func.func @transform_2(%arg0: i32) -> (i32, i32) {
    %c0_i32 = arith.constant 0 : i32
    %c0_i32_0 = arith.constant 0 : i32
    %c0_i32_1 = arith.constant 0 : i32
    return %c0_i32, %c0_i32_0 : i32, i32
  }
  func.func @transform_3(%arg0: i32) -> (i32, i32) {
    %c0_i32 = arith.constant 0 : i32
    %c0_i32_0 = arith.constant 0 : i32
    return %arg0, %c0_i32 : i32, i32
  }
}

module attributes {stable_mosaic.version = 11 : i64} {
  func.func @_mm_shift_act_kernel(%arg0: i32, %arg1: memref<64x20xbf16, #tpu.memory_space<vmem>>, %arg2: memref<20x128xbf16, #tpu.memory_space<vmem>>, %arg3: memref<1x128xf32, #tpu.memory_space<vmem>>, %arg4: memref<64x128xf32, #tpu.memory_space<vmem>>) attributes {dimension_semantics = [#tpu.dimension_semantics<parallel>], iteration_bounds = array<i64: 2>, scalar_prefetch = 0 : i64, scratch_operands = 0 : i64, tpu.core_type = #tpu.core_type<tc>, window_params = [{transform_indices = @transform_0, window_bounds = array<i64: 64, 20>}, {pipeline_mode = #tpu.pipeline_mode<synchronous>, transform_indices = @transform_1, window_bounds = array<i64: 20, 128>}, {pipeline_mode = #tpu.pipeline_mode<synchronous>, transform_indices = @transform_2, window_bounds = array<i64: 1, 128>}, {transform_indices = @transform_3, window_bounds = array<i64: 64, 128>}]} {
    %c0 = arith.constant 0 : index
    %c0_0 = arith.constant 0 : index
    %0 = vector.load %arg1[%c0, %c0_0] : memref<64x20xbf16, #tpu.memory_space<vmem>>, vector<64x20xbf16>
    %c0_1 = arith.constant 0 : index
    %c0_2 = arith.constant 0 : index
    %1 = vector.load %arg2[%c0_1, %c0_2] : memref<20x128xbf16, #tpu.memory_space<vmem>>, vector<20x128xbf16>
    %cst = arith.constant dense<0.000000e+00> : vector<64x128xf32>
    %2 = tpu.matmul %0, %1, %cst {dimension_numbers = #tpu.dot_dimension_numbers<[1], [0], [0], [1], [0, 0, 1, 1], [], []>} : vector<64x20xbf16>, vector<20x128xbf16>, vector<64x128xf32> -> vector<64x128xf32>
    %c0_3 = arith.constant 0 : index
    %c0_4 = arith.constant 0 : index
    %3 = vector.load %arg3[%c0_3, %c0_4] : memref<1x128xf32, #tpu.memory_space<vmem>>, vector<1x128xf32>
    %4 = vector.broadcast %3 : vector<1x128xf32> to vector<64x128xf32>
    %5 = arith.addf %2, %4 : vector<64x128xf32>
    %c0_5 = arith.constant 0 : index
    %c0_6 = arith.constant 0 : index
    %6 = vector.load %arg4[%c0_5, %c0_6] : memref<64x128xf32, #tpu.memory_space<vmem>>, vector<64x128xf32>
    tpu.vector_store %arg4[%c0_5, %c0_6], %5 {strides = array<i32>} : memref<64x128xf32, #tpu.memory_space<vmem>>, vector<64x128xf32>,
    return
  }
  func.func @transform_0(%arg0: i32) -> (i32, i32) {
    %c0_i32 = arith.constant 0 : i32
    %c0_i32_0 = arith.constant 0 : i32
    return %arg0, %c0_i32 : i32, i32
  }
  func.func @transform_1(%arg0: i32) -> (i32, i32) {
    %c0_i32 = arith.constant 0 : i32
    %c0_i32_0 = arith.constant 0 : i32
    %c0_i32_1 = arith.constant 0 : i32
    return %c0_i32, %c0_i32_0 : i32, i32
  }
  func.func @transform_2(%arg0: i32) -> (i32, i32) {
    %c0_i32 = arith.constant 0 : i32
    %c0_i32_0 = arith.constant 0 : i32
    %c0_i32_1 = arith.constant 0 : i32
    return %c0_i32, %c0_i32_0 : i32, i32
  }
  func.func @transform_3(%arg0: i32) -> (i32, i32) {
    %c0_i32 = arith.constant 0 : i32
    %c0_i32_0 = arith.constant 0 : i32
    return %arg0, %c0_i32 : i32, i32
  }
}

module attributes {stable_mosaic.version = 11 : i64} {
  func.func @_mm_shift_act_kernel(%arg0: i32, %arg1: memref<256x225xbf16, #tpu.memory_space<vmem>>, %arg2: memref<225x128xbf16, #tpu.memory_space<vmem>>, %arg3: memref<1x128xf32, #tpu.memory_space<vmem>>, %arg4: memref<256x128xf32, #tpu.memory_space<vmem>>) attributes {dimension_semantics = [#tpu.dimension_semantics<parallel>], iteration_bounds = array<i64: 2>, scalar_prefetch = 0 : i64, scratch_operands = 0 : i64, tpu.core_type = #tpu.core_type<tc>, window_params = [{transform_indices = @transform_0, window_bounds = array<i64: 256, 225>}, {pipeline_mode = #tpu.pipeline_mode<synchronous>, transform_indices = @transform_1, window_bounds = array<i64: 225, 128>}, {pipeline_mode = #tpu.pipeline_mode<synchronous>, transform_indices = @transform_2, window_bounds = array<i64: 1, 128>}, {transform_indices = @transform_3, window_bounds = array<i64: 256, 128>}]} {
    %c0 = arith.constant 0 : index
    %c0_0 = arith.constant 0 : index
    %0 = vector.load %arg1[%c0, %c0_0] : memref<256x225xbf16, #tpu.memory_space<vmem>>, vector<256x225xbf16>
    %c0_1 = arith.constant 0 : index
    %c0_2 = arith.constant 0 : index
    %1 = vector.load %arg2[%c0_1, %c0_2] : memref<225x128xbf16, #tpu.memory_space<vmem>>, vector<225x128xbf16>
    %cst = arith.constant dense<0.000000e+00> : vector<256x128xf32>
    %2 = tpu.matmul %0, %1, %cst {dimension_numbers = #tpu.dot_dimension_numbers<[1], [0], [0], [1], [0, 0, 1, 1], [], []>} : vector<256x225xbf16>, vector<225x128xbf16>, vector<256x128xf32> -> vector<256x128xf32>
    %c0_3 = arith.constant 0 : index
    %c0_4 = arith.constant 0 : index
    %3 = vector.load %arg3[%c0_3, %c0_4] : memref<1x128xf32, #tpu.memory_space<vmem>>, vector<1x128xf32>
    %4 = vector.broadcast %3 : vector<1x128xf32> to vector<256x128xf32>
    %5 = arith.addf %2, %4 : vector<256x128xf32>
    %cst_5 = arith.constant 0.000000e+00 : f32
    %6 = vector.broadcast %cst_5 : f32 to vector<256x128xf32>
    %7 = arith.cmpf ogt, %5, %6 : vector<256x128xf32>
    %cst_6 = arith.constant 0.00999999977 : f32
    %8 = vector.broadcast %cst_6 : f32 to vector<256x128xf32>
    %9 = arith.mulf %8, %5 : vector<256x128xf32>
    %10 = arith.select %7, %5, %9 : vector<256x128xi1>, vector<256x128xf32>
    %c0_7 = arith.constant 0 : index
    %c0_8 = arith.constant 0 : index
    %11 = vector.load %arg4[%c0_7, %c0_8] : memref<256x128xf32, #tpu.memory_space<vmem>>, vector<256x128xf32>
    tpu.vector_store %arg4[%c0_7, %c0_8], %10 {strides = array<i32>} : memref<256x128xf32, #tpu.memory_space<vmem>>, vector<256x128xf32>,
    return
  }
  func.func @transform_0(%arg0: i32) -> (i32, i32) {
    %c0_i32 = arith.constant 0 : i32
    %c0_i32_0 = arith.constant 0 : i32
    return %arg0, %c0_i32 : i32, i32
  }
  func.func @transform_1(%arg0: i32) -> (i32, i32) {
    %c0_i32 = arith.constant 0 : i32
    %c0_i32_0 = arith.constant 0 : i32
    %c0_i32_1 = arith.constant 0 : i32
    return %c0_i32, %c0_i32_0 : i32, i32
  }
  func.func @transform_2(%arg0: i32) -> (i32, i32) {
    %c0_i32 = arith.constant 0 : i32
    %c0_i32_0 = arith.constant 0 : i32
    %c0_i32_1 = arith.constant 0 : i32
    return %c0_i32, %c0_i32_0 : i32, i32
  }
  func.func @transform_3(%arg0: i32) -> (i32, i32) {
    %c0_i32 = arith.constant 0 : i32
    %c0_i32_0 = arith.constant 0 : i32
    return %arg0, %c0_i32 : i32, i32
  }
}

module attributes {stable_mosaic.version = 11 : i64} {
  func.func @_mm_shift_act_kernel(%arg0: i32, %arg1: memref<256x45xbf16, #tpu.memory_space<vmem>>, %arg2: memref<45x128xbf16, #tpu.memory_space<vmem>>, %arg3: memref<1x128xf32, #tpu.memory_space<vmem>>, %arg4: memref<256x128xf32, #tpu.memory_space<vmem>>) attributes {dimension_semantics = [#tpu.dimension_semantics<parallel>], iteration_bounds = array<i64: 2>, scalar_prefetch = 0 : i64, scratch_operands = 0 : i64, tpu.core_type = #tpu.core_type<tc>, window_params = [{transform_indices = @transform_0, window_bounds = array<i64: 256, 45>}, {pipeline_mode = #tpu.pipeline_mode<synchronous>, transform_indices = @transform_1, window_bounds = array<i64: 45, 128>}, {pipeline_mode = #tpu.pipeline_mode<synchronous>, transform_indices = @transform_2, window_bounds = array<i64: 1, 128>}, {transform_indices = @transform_3, window_bounds = array<i64: 256, 128>}]} {
    %c0 = arith.constant 0 : index
    %c0_0 = arith.constant 0 : index
    %0 = vector.load %arg1[%c0, %c0_0] : memref<256x45xbf16, #tpu.memory_space<vmem>>, vector<256x45xbf16>
    %c0_1 = arith.constant 0 : index
    %c0_2 = arith.constant 0 : index
    %1 = vector.load %arg2[%c0_1, %c0_2] : memref<45x128xbf16, #tpu.memory_space<vmem>>, vector<45x128xbf16>
    %cst = arith.constant dense<0.000000e+00> : vector<256x128xf32>
    %2 = tpu.matmul %0, %1, %cst {dimension_numbers = #tpu.dot_dimension_numbers<[1], [0], [0], [1], [0, 0, 1, 1], [], []>} : vector<256x45xbf16>, vector<45x128xbf16>, vector<256x128xf32> -> vector<256x128xf32>
    %c0_3 = arith.constant 0 : index
    %c0_4 = arith.constant 0 : index
    %3 = vector.load %arg3[%c0_3, %c0_4] : memref<1x128xf32, #tpu.memory_space<vmem>>, vector<1x128xf32>
    %4 = vector.broadcast %3 : vector<1x128xf32> to vector<256x128xf32>
    %5 = arith.addf %2, %4 : vector<256x128xf32>
    %6 = arith.negf %5 : vector<256x128xf32>
    %7 = math.exp %6 : vector<256x128xf32>
    %cst_5 = arith.constant 1.000000e+00 : f32
    %8 = vector.broadcast %cst_5 : f32 to vector<256x128xf32>
    %9 = arith.addf %8, %7 : vector<256x128xf32>
    %10 = arith.divf %8, %9 : vector<256x128xf32>
    %c0_6 = arith.constant 0 : index
    %c0_7 = arith.constant 0 : index
    %11 = vector.load %arg4[%c0_6, %c0_7] : memref<256x128xf32, #tpu.memory_space<vmem>>, vector<256x128xf32>
    tpu.vector_store %arg4[%c0_6, %c0_7], %10 {strides = array<i32>} : memref<256x128xf32, #tpu.memory_space<vmem>>, vector<256x128xf32>,
    return
  }
  func.func @transform_0(%arg0: i32) -> (i32, i32) {
    %c0_i32 = arith.constant 0 : i32
    %c0_i32_0 = arith.constant 0 : i32
    return %arg0, %c0_i32 : i32, i32
  }
  func.func @transform_1(%arg0: i32) -> (i32, i32) {
    %c0_i32 = arith.constant 0 : i32
    %c0_i32_0 = arith.constant 0 : i32
    %c0_i32_1 = arith.constant 0 : i32
    return %c0_i32, %c0_i32_0 : i32, i32
  }
  func.func @transform_2(%arg0: i32) -> (i32, i32) {
    %c0_i32 = arith.constant 0 : i32
    %c0_i32_0 = arith.constant 0 : i32
    %c0_i32_1 = arith.constant 0 : i32
    return %c0_i32, %c0_i32_0 : i32, i32
  }
  func.func @transform_3(%arg0: i32) -> (i32, i32) {
    %c0_i32 = arith.constant 0 : i32
    %c0_i32_0 = arith.constant 0 : i32
    return %arg0, %c0_i32 : i32, i32
  }
}

</mosaic_0001>

<llo_original>
// kernel: unet_forward.9
$region0: #{unet_forward.9}
  #allocation0 [shape = 'u32[]', space=smem, size = 0x4, offset = 0x4, fixed_abs, tag = 'smem constant byte address 0x4 - core index']
  #allocation1 [shape = 'u32[144,128]{1,0:T(1,128)}', space=vmem, size = 0x12000, scoped, tag = 'internal scratch']
  %s0 = inlined_call_operand.vmem [shape: bf16[512,27], index: 0, kind: input, shape index: {}]
  %s1 = inlined_call_operand.vmem [shape: bf16[27,128], index: 1, kind: input, shape index: {}]
  %s2 = inlined_call_operand.vmem [shape: f32[1,128], index: 2, kind: input, shape index: {}]
  %s3 = inlined_call_operand.vmem [shape: f32[512,128], index: 3, kind: output, shape index: {}]
  %s4 = sld [smem:[#allocation0]]
  $region45: #{unet_forward.9} parent=0
    _
  %s6 = ssub.s32 1, %s4
  %s7 = scalar_select 0, %s6, %s4
  loop: start=0, step=1, limit=4
  $region2: #{unet_forward.9} parent=0 // loop_pre_header
    _
  $region3: #{unet_forward.9} parent=0 // loop_header
    %s9 = sphi 0, %s13
    %p10 = scmp.ge.s32.totalorder %s9, 4
    %s19 = sphi 0, %s21
    %s22 = sphi 0, %s19
    %s23 = sphi 0, %s22
    %s39 = sphi 0, %s23
    %s43 = sphi 0, %s43
    %s45 = sphi 0, %s43
    %s46 = sphi 0, %s45
    %s60 = sphi 0, %s46
    %s64 = sphi 0, %s64
    %s66 = sphi 0, %s64
    %s67 = sphi 0, %s66
    %s81 = sphi 0, %s67
    %s87 = sphi 0, %s89
    %s90 = sphi 0, %s87
    %s91 = sphi 0, %s90
    %s107 = sphi 0, %s91
  $region4: #{unet_forward.9} parent=0 // loop_header_branch
    %12 = sbr.rel (%p10) target = $region8
  $region5: #{unet_forward.9} parent=0 // loop_body
    %s14 = ssub.s32 %s9, 1
    %s15 = ssub.s32 %s9, 2
    %s16 = sadd.s32 %s9, 1
    %s17 = ssub.s32 %s9, %s16
    %p18 = scmp.eq.s32.totalorder %s17, 0
    %s20 = sadd.s32 %s19, 1
    %s21 = scalar_select %p18, %s19, %s20
    %p24 = pneg %p18
    %p25 = scmp.eq.s32.totalorder %s9, 1
    %p26 = por %p24, %p25
    %p27 = scmp.ne.s32.totalorder %s19, %s22
    %p28 = scmp.eq.s32.totalorder %s9, 0
    %p29 = por %p27, %p28
    %p30 = scmp.ne.s32.totalorder %s19, %s22
    %p31 = scmp.eq.s32.totalorder %s14, 1
    %p32 = por %p30, %p31
    %p33 = scmp.ne.s32.totalorder %s22, %s23
    %p34 = scmp.eq.s32.totalorder %s14, 0
    %p35 = por %p33, %p34
    %p36 = scmp.ne.s32.totalorder %s22, %s23
    %p37 = scmp.eq.s32.totalorder %s15, 1
    %p38 = por %p36, %p37
    %p40 = scmp.ne.s32.totalorder %s23, %s39
    %p41 = scmp.eq.s32.totalorder %s15, 0
    %p42 = por %p40, %p41
    %s44 = sadd.s32 %s43, 1
    %p47 = scmp.eq.s32.totalorder %s9, 1
    %p48 = scmp.ne.s32.totalorder %s43, %s45
    %p49 = scmp.eq.s32.totalorder %s9, 0
    %p50 = por %p48, %p49
    %p51 = scmp.ne.s32.totalorder %s43, %s45
    %p52 = scmp.eq.s32.totalorder %s14, 1
    %p53 = por %p51, %p52
    %p54 = scmp.ne.s32.totalorder %s45, %s46
    %p55 = scmp.eq.s32.totalorder %s14, 0
    %p56 = por %p54, %p55
    %p57 = scmp.ne.s32.totalorder %s45, %s46
    %p58 = scmp.eq.s32.totalorder %s15, 1
    %p59 = por %p57, %p58
    %p61 = scmp.ne.s32.totalorder %s46, %s60
    %p62 = scmp.eq.s32.totalorder %s15, 0
    %p63 = por %p61, %p62
    %s65 = sadd.s32 %s64, 1
    %p68 = scmp.eq.s32.totalorder %s9, 1
    %p69 = scmp.ne.s32.totalorder %s64, %s66
    %p70 = scmp.eq.s32.totalorder %s9, 0
    %p71 = por %p69, %p70
    %p72 = scmp.ne.s32.totalorder %s64, %s66
    %p73 = scmp.eq.s32.totalorder %s14, 1
    %p74 = por %p72, %p73
    %p75 = scmp.ne.s32.totalorder %s66, %s67
    %p76 = scmp.eq.s32.totalorder %s14, 0
    %p77 = por %p75, %p76
    %p78 = scmp.ne.s32.totalorder %s66, %s67
    %p79 = scmp.eq.s32.totalorder %s15, 1
    %p80 = por %p78, %p79
    %p82 = scmp.ne.s32.totalorder %s67, %s81
    %p83 = scmp.eq.s32.totalorder %s15, 0
    %p84 = por %p82, %p83
    %s85 = ssub.s32 %s9, %s16
    %p86 = scmp.eq.s32.totalorder %s85, 0
    %s88 = sadd.s32 %s87, 1
    %s89 = scalar_select %p86, %s87, %s88
    %p92 = pneg %p86
    %p93 = scmp.eq.s32.totalorder %s9, 1
    %p94 = por %p92, %p93
    %p95 = scmp.ne.s32.totalorder %s87, %s90
    %p96 = scmp.eq.s32.totalorder %s9, 0
    %p97 = por %p95, %p96
    %p98 = scmp.ne.s32.totalorder %s87, %s90
    %p99 = scmp.eq.s32.totalorder %s14, 1
    %p100 = por %p98, %p99
    %p101 = scmp.ne.s32.totalorder %s90, %s91
    %p102 = scmp.eq.s32.totalorder %s14, 0
    %p103 = por %p101, %p102
    %p104 = scmp.ne.s32.totalorder %s90, %s91
    %p105 = scmp.eq.s32.totalorder %s15, 1
    %p106 = por %p104, %p105
    %p108 = scmp.ne.s32.totalorder %s91, %s107
    %p109 = scmp.eq.s32.totalorder %s15, 0
    %p110 = por %p108, %p109
    %p111 = scmp.le.s32.totalorder 1, %s9
    %p112 = scmp.lt.s32.totalorder %s9, 3
    %p113 = pnand %p111, %p112
    %p114 = pneg %p113
    // Predicated region
    $region9: #{unet_forward.9} parent=5 // pred_check
      _
    $region10: #{unet_forward.9} parent=5 // pred_check_branch
      %116 = sbr.rel (%p113) target = $region12
    $region11: #{unet_forward.9} parent=5 // pred_region
      %s117 = ssub.s32 %s9, 1
      // Predicated region
      $region13: #{unet_forward.9} parent=11 // pred_check
        %p118 = pneg %p56
      $region14: #{unet_forward.9} parent=11 // pred_check_branch
        %120 = sbr.rel (%p118) target = $region16
      $region15: #{unet_forward.9} parent=11 // pred_region
        _
      $region16: #{unet_forward.9} parent=11 // pred_fallthru
        _
      // Predicated region
      $region17: #{unet_forward.9} parent=11 // pred_check
        %p121 = pneg %p77
      $region18: #{unet_forward.9} parent=11 // pred_check_branch
        %123 = sbr.rel (%p121) target = $region20
      $region19: #{unet_forward.9} parent=11 // pred_region
        _
      $region20: #{unet_forward.9} parent=11 // pred_fallthru
        _
    $region12: #{unet_forward.9} parent=5 // pred_fallthru
      _
    %p124 = scmp.lt.s32.totalorder %s9, 2
    // Predicated region
    $region21: #{unet_forward.9} parent=5 // pred_check
      %p125 = pneg %p124
    $region22: #{unet_forward.9} parent=5 // pred_check_branch
      %127 = sbr.rel (%p125) target = $region24
    $region23: #{unet_forward.9} parent=5 // pred_region
      // Predicated region
      $region25: #{unet_forward.9} parent=23 // pred_check
        %p128 = pneg %p29
      $region26: #{unet_forward.9} parent=23 // pred_check_branch
        %130 = sbr.rel (%p128) target = $region28
      $region27: #{unet_forward.9} parent=23 // pred_region
        %s131 = smul.u32 32, %s9
        %p132 = scmp.lt.s32.totalorder %s131, 63
        %s133 = scalar_select %p132, %s131, 63
        %s134 = smul.addr %s133, 4
        %s135 = scalar_lea.vmem %s0, %s134
        %s136 = smul.u32 32, %s9
      $region28: #{unet_forward.9} parent=23 // pred_fallthru
        _
    $region24: #{unet_forward.9} parent=5 // pred_fallthru
      _
    %p137 = scmp.le.s32.totalorder 1, %s9
    %p138 = scmp.lt.s32.totalorder %s9, 3
    %p139 = pnand %p137, %p138
    %p140 = pneg %p139
    // Predicated region
    $region29: #{unet_forward.9} parent=5 // pred_check
      _
    $region30: #{unet_forward.9} parent=5 // pred_check_branch
      %142 = sbr.rel (%p139) target = $region32
    $region31: #{unet_forward.9} parent=5 // pred_region
      %s143 = ssub.s32 %s9, 1
      %s144 = smul.u32 32, %s14
      %p145 = scmp.lt.s32.totalorder %s144, 63
      %s146 = scalar_select %p145, %s144, 63
      %s147 = smul.addr %s146, 4
      %s148 = scalar_lea.vmem %s0, %s147
      %p149 = pneg %p35
      %p150 = pneg %p32
      %p151 = pneg %p56
      %p152 = pneg %p53
      %p153 = pneg %p77
      %p154 = pneg %p74
      %p155 = pneg %p103
      %p156 = pneg %p100
      %s157 = smul.u32 32, %s14
      %p158 = scmp.lt.s32.totalorder %s157, 63
      %s159 = scalar_select %p158, %s157, 63
      %s160 = smul.addr %s159, 8
      %s161 = scalar_lea.vmem %s3, %s160
      %s162 = smul.u32 32, %s14
      %p163 = scmp.lt.s32.totalorder %s162, 63
      %s164 = scalar_select %p163, %s162, 63
      %s165 = smul.addr %s164, 4
      %s166 = scalar_lea.vmem %s0, %s165
      %s167 = smul.u32 32, %s14
      %s168 = smul.u32 32, %s14
      %p169 = scmp.lt.s32.totalorder %s168, 63
      %s170 = scalar_select %p169, %s168, 63
      %s171 = smul.addr %s170, 8
      %s172 = scalar_lea.vmem %s3, %s171
      %s173 = smul.u32 32, %s14
      %v175 = vld [vmem:[%s166] sm:$0xf]
      %v176 = vld [vmem:[%s166 + $0x4] sm:$0xf]
      %v177 = vld [vmem:[%s166 + $0x8] sm:$0xf]
      %v178 = vld [vmem:[%s166 + $0xc] sm:$0xf]
      %v179 = vld [vmem:[%s166 + $0x10] sm:$0xf]
      %v180 = vld [vmem:[%s166 + $0x14] sm:$0xf]
      %v181 = vld [vmem:[%s166 + $0x18] sm:$0xf]
      %v182 = vld [vmem:[%s166 + $0x1c] sm:$0xf]
      %v183 = vld [vmem:[%s166 + $0x20] sm:$0xf]
      %v184 = vld [vmem:[%s166 + $0x24] sm:$0xf]
      %v185 = vld [vmem:[%s166 + $0x28] sm:$0xf]
      %v186 = vld [vmem:[%s166 + $0x2c] sm:$0xf]
      %v187 = vld [vmem:[%s166 + $0x30] sm:$0xf]
      %v188 = vld [vmem:[%s166 + $0x34] sm:$0xf]
      %v189 = vld [vmem:[%s166 + $0x38] sm:$0xf]
      %v190 = vld [vmem:[%s166 + $0x3c] sm:$0xf]
      %v191 = vld [vmem:[%s166 + $0x40] sm:$0xf]
      %v192 = vld [vmem:[%s166 + $0x44] sm:$0xf]
      %v193 = vld [vmem:[%s166 + $0x48] sm:$0xf]
      %v194 = vld [vmem:[%s166 + $0x4c] sm:$0xf]
      %v195 = vld [vmem:[%s166 + $0x50] sm:$0xf]
      %v196 = vld [vmem:[%s166 + $0x54] sm:$0xf]
      %v197 = vld [vmem:[%s166 + $0x58] sm:$0xf]
      %v198 = vld [vmem:[%s166 + $0x5c] sm:$0xf]
      %v199 = vld [vmem:[%s166 + $0x60] sm:$0xf]
      %v200 = vld [vmem:[%s166 + $0x64] sm:$0xf]
      %v201 = vld [vmem:[%s166 + $0x68] sm:$0xf]
      %v202 = vld [vmem:[%s166 + $0x6c] sm:$0xf]
      %v203 = vld [vmem:[%s166 + $0x70] sm:$0xf]
      %v204 = vld [vmem:[%s166 + $0x74] sm:$0xf]
      %v205 = vld [vmem:[%s166 + $0x78] sm:$0xf]
      %v206 = vld [vmem:[%s166 + $0x7c] sm:$0xf]
      %v207 = vld [vmem:[%s1] sm:$0xf]
      %v208 = vld [vmem:[%s1 + $0x4] sm:$0xf]
      %v209 = vld [vmem:[%s1 + $0x8] sm:$0xf]
      %v210 = vld [vmem:[%s1 + $0xc] sm:$0x3]
      %v211 = vld [vmem:[%s2] sm:$0x1]
      %v213 = vlaneseq
      %v214 = vshrl.u32 %v213, 7
      %v215 = vsub.s32 0, %v214
      %v216 = vrot.slane %v211, %v215
      %v250 = vunpack.c.l.b16 %v175
      %v251 = vunpack.c.l.b16 %v176
      %v252 = vunpack.c.l.b16 %v177
      %v253 = vunpack.c.l.b16 %v178
      %v254 = vunpack.c.l.b16 %v179
      %v255 = vunpack.c.l.b16 %v180
      %v256 = vunpack.c.l.b16 %v181
      %v257 = vunpack.c.l.b16 %v182
      %v258 = vunpack.c.l.b16 %v183
      %v259 = vunpack.c.l.b16 %v184
      %v260 = vunpack.c.l.b16 %v185
      %v261 = vunpack.c.l.b16 %v186
      %v262 = vunpack.c.l.b16 %v187
      %v263 = vunpack.c.l.b16 %v188
      %v264 = vunpack.c.l.b16 %v189
      %v265 = vunpack.c.l.b16 %v190
      %v266 = vunpack.c.l.b16 %v191
      %v267 = vunpack.c.l.b16 %v192
      %v268 = vunpack.c.l.b16 %v193
      %v269 = vunpack.c.l.b16 %v194
      %v270 = vunpack.c.l.b16 %v195
      %v271 = vunpack.c.l.b16 %v196
      %v272 = vunpack.c.l.b16 %v197
      %v273 = vunpack.c.l.b16 %v198
      %v274 = vunpack.c.l.b16 %v199
      %v275 = vunpack.c.l.b16 %v200
      %v276 = vunpack.c.l.b16 %v201
      %v277 = vunpack.c.l.b16 %v202
      %v278 = vunpack.c.l.b16 %v203
      %v279 = vunpack.c.l.b16 %v204
      %v280 = vunpack.c.l.b16 %v205
      %v281 = vunpack.c.l.b16 %v206
      %v282 = vpack.c.b16 %v251, %v250
      %v283 = vpack.c.b16 %v253, %v252
      %v284 = vpack.c.b16 %v255, %v254
      %v285 = vpack.c.b16 %v257, %v256
      %v286 = vpack.c.b16 %v259, %v258
      %v287 = vpack.c.b16 %v261, %v260
      %v288 = vpack.c.b16 %v263, %v262
      %v289 = vpack.c.b16 %v265, %v264
      %v290 = vpack.c.b16 %v267, %v266
      %v291 = vpack.c.b16 %v269, %v268
      %v292 = vpack.c.b16 %v271, %v270
      %v293 = vpack.c.b16 %v273, %v272
      %v294 = vpack.c.b16 %v275, %v274
      %v295 = vpack.c.b16 %v277, %v276
      %v296 = vpack.c.b16 %v279, %v278
      %v297 = vpack.c.b16 %v281, %v280
      %v302 = vunpack.c.l.b16 %v207
      %v303 = vunpack.c.l.b16 %v208
      %v304 = vunpack.c.l.b16 %v209
      %v305 = vunpack.c.l.b16 %v210
      %v306 = vpack.c.b16 %v303, %v302
      %v307 = vpack.c.b16 %v305, %v304
      %vm309 = vcmask 220160
      %v311 = vsel %vm309, %v282, 0
      %v314 = vsel %vm309, %v283, 0
      %v317 = vsel %vm309, %v284, 0
      %v320 = vsel %vm309, %v285, 0
      %v323 = vsel %vm309, %v286, 0
      %v326 = vsel %vm309, %v287, 0
      %v329 = vsel %vm309, %v288, 0
      %v332 = vsel %vm309, %v289, 0
      %v335 = vsel %vm309, %v290, 0
      %v338 = vsel %vm309, %v291, 0
      %v341 = vsel %vm309, %v292, 0
      %v344 = vsel %vm309, %v293, 0
      %v347 = vsel %vm309, %v294, 0
      %v350 = vsel %vm309, %v295, 0
      %v353 = vsel %vm309, %v296, 0
      %v356 = vsel %vm309, %v297, 0
      %vm358 = vcmask 1044480
      %vm359 = vcmask 1045504
      %v360 = vsel %vm358, 4294967295, 65535
      %v361 = vsel %vm359, %v360, 0
      %v363 = vand.u32 %v307, %v361
      %365 = vmatprep.subr.bf16.mxu0 0
      %366 = vmatpush1.bf16.msra.mxu0 %v306
      %367 = vmatprep.subr.bf16.mxu0 0
      %368 = vmatpush1.bf16.msra.mxu0 %v363
      %369 = vmatprep.subr.bf16.mxu0 0
      %370 = vmatpush1.bf16.msra.mxu0 0
      %371 = vmatprep.subr.bf16.mxu0 0
      %372 = vmatpush1.bf16.msra.mxu0 0
      %373 = vmatprep.subr.bf16.mxu0 0
      %374 = vmatpush1.bf16.msra.mxu0 0
      %375 = vmatprep.subr.bf16.mxu0 0
      %376 = vmatpush1.bf16.msra.mxu0 0
      %377 = vmatprep.subr.bf16.mxu0 0
      %378 = vmatpush1.bf16.msra.mxu0 0
      %379 = vmatprep.subr.bf16.mxu0 0
      %380 = vmatpush1.bf16.msra.mxu0 0
      %381 = vmatprep.subr.bf16.mxu0 0
      %382 = vmatpush1.bf16.msra.mxu0 0
      %383 = vmatprep.subr.bf16.mxu0 0
      %384 = vmatpush1.bf16.msra.mxu0 0
      %385 = vmatprep.subr.bf16.mxu0 0
      %386 = vmatpush1.bf16.msra.mxu0 0
      %387 = vmatprep.subr.bf16.mxu0 0
      %388 = vmatpush1.bf16.msra.mxu0 0
      %389 = vmatprep.subr.bf16.mxu0 0
      %390 = vmatpush1.bf16.msra.mxu0 0
      %391 = vmatprep.subr.bf16.mxu0 0
      %392 = vmatpush1.bf16.msra.mxu0 0
      %393 = vmatprep.subr.bf16.mxu0 0
      %394 = vmatpush1.bf16.msra.mxu0 0
      %395 = vmatprep.subr.bf16.mxu0 0
      %396 = vmatpush1.bf16.msra.mxu0 0
      %397 = vmatprep.mubr.bf16.mxu0 0
      %398 = vmatmul.mubr.bf16.gmra.mrb[0].mxu0 %v311
      %v399 = vpop.f32.mrb[0].mxu0
      %v400 = vadd.f32 %v216, %v399
      %v401 = vpop.f32.mrb[0].mxu0
      %v402 = vpop.f32.mrb[0].mxu0
      %v403 = vadd.f32 %v216, %v402
      %v404 = vpop.f32.mrb[0].mxu0
      %405 = vmatprep.mubr.bf16.mxu0 0
      %406 = vmatmul.mubr.bf16.gmra.mrb[0].mxu0 %v314
      %v407 = vpop.f32.mrb[0].mxu0
      %v408 = vadd.f32 %v216, %v407
      %v409 = vpop.f32.mrb[0].mxu0
      %v410 = vpop.f32.mrb[0].mxu0
      %v411 = vadd.f32 %v216, %v410
      %v412 = vpop.f32.mrb[0].mxu0
      %413 = vmatprep.mubr.bf16.mxu0 0
      %414 = vmatmul.mubr.bf16.gmra.mrb[0].mxu0 %v317
      %v415 = vpop.f32.mrb[0].mxu0
      %v416 = vadd.f32 %v216, %v415
      %v417 = vpop.f32.mrb[0].mxu0
      %v418 = vpop.f32.mrb[0].mxu0
      %v419 = vadd.f32 %v216, %v418
      %v420 = vpop.f32.mrb[0].mxu0
      %421 = vmatprep.mubr.bf16.mxu0 0
      %422 = vmatmul.mubr.bf16.gmra.mrb[0].mxu0 %v320
      %v423 = vpop.f32.mrb[0].mxu0
      %v424 = vadd.f32 %v216, %v423
      %v425 = vpop.f32.mrb[0].mxu0
      %v426 = vpop.f32.mrb[0].mxu0
      %v427 = vadd.f32 %v216, %v426
      %v428 = vpop.f32.mrb[0].mxu0
      %429 = vmatprep.mubr.bf16.mxu0 0
      %430 = vmatmul.mubr.bf16.gmra.mrb[0].mxu0 %v323
      %v431 = vpop.f32.mrb[0].mxu0
      %v432 = vadd.f32 %v216, %v431
      %v433 = vpop.f32.mrb[0].mxu0
      %v434 = vpop.f32.mrb[0].mxu0
      %v435 = vadd.f32 %v216, %v434
      %v436 = vpop.f32.mrb[0].mxu0
      %437 = vmatprep.mubr.bf16.mxu0 0
      %438 = vmatmul.mubr.bf16.gmra.mrb[0].mxu0 %v326
      %v439 = vpop.f32.mrb[0].mxu0
      %v440 = vadd.f32 %v216, %v439
      %v441 = vpop.f32.mrb[0].mxu0
      %v442 = vpop.f32.mrb[0].mxu0
      %v443 = vadd.f32 %v216, %v442
      %v444 = vpop.f32.mrb[0].mxu0
      %445 = vmatprep.mubr.bf16.mxu0 0
      %446 = vmatmul.mubr.bf16.gmra.mrb[0].mxu0 %v329
      %v447 = vpop.f32.mrb[0].mxu0
      %v448 = vadd.f32 %v216, %v447
      %v449 = vpop.f32.mrb[0].mxu0
      %v450 = vpop.f32.mrb[0].mxu0
      %v451 = vadd.f32 %v216, %v450
      %v452 = vpop.f32.mrb[0].mxu0
      %453 = vmatprep.mubr.bf16.mxu0 0
      %454 = vmatmul.mubr.bf16.gmra.mrb[0].mxu0 %v332
      %v455 = vpop.f32.mrb[0].mxu0
      %v456 = vadd.f32 %v216, %v455
      %v457 = vpop.f32.mrb[0].mxu0
      %v458 = vpop.f32.mrb[0].mxu0
      %v459 = vadd.f32 %v216, %v458
      %v460 = vpop.f32.mrb[0].mxu0
      %461 = vmatprep.mubr.bf16.mxu0 0
      %462 = vmatmul.mubr.bf16.gmra.mrb[0].mxu0 %v335
      %v463 = vpop.f32.mrb[0].mxu0
      %v464 = vadd.f32 %v216, %v463
      %v465 = vpop.f32.mrb[0].mxu0
      %v466 = vpop.f32.mrb[0].mxu0
      %v467 = vadd.f32 %v216, %v466
      %v468 = vpop.f32.mrb[0].mxu0
      %469 = vmatprep.mubr.bf16.mxu0 0
      %470 = vmatmul.mubr.bf16.gmra.mrb[0].mxu0 %v338
      %v471 = vpop.f32.mrb[0].mxu0
      %v472 = vadd.f32 %v216, %v471
      %v473 = vpop.f32.mrb[0].mxu0
      %v474 = vpop.f32.mrb[0].mxu0
      %v475 = vadd.f32 %v216, %v474
      %v476 = vpop.f32.mrb[0].mxu0
      %477 = vmatprep.mubr.bf16.mxu0 0
      %478 = vmatmul.mubr.bf16.gmra.mrb[0].mxu0 %v341
      %v479 = vpop.f32.mrb[0].mxu0
      %v480 = vadd.f32 %v216, %v479
      %v481 = vpop.f32.mrb[0].mxu0
      %v482 = vpop.f32.mrb[0].mxu0
      %v483 = vadd.f32 %v216, %v482
      %v484 = vpop.f32.mrb[0].mxu0
      %485 = vmatprep.mubr.bf16.mxu0 0
      %486 = vmatmul.mubr.bf16.gmra.mrb[0].mxu0 %v344
      %v487 = vpop.f32.mrb[0].mxu0
      %v488 = vadd.f32 %v216, %v487
      %v489 = vpop.f32.mrb[0].mxu0
      %v490 = vpop.f32.mrb[0].mxu0
      %v491 = vadd.f32 %v216, %v490
      %v492 = vpop.f32.mrb[0].mxu0
      %493 = vmatprep.mubr.bf16.mxu0 0
      %494 = vmatmul.mubr.bf16.gmra.mrb[0].mxu0 %v347
      %v495 = vpop.f32.mrb[0].mxu0
      %v496 = vadd.f32 %v216, %v495
      %v497 = vpop.f32.mrb[0].mxu0
      %v498 = vpop.f32.mrb[0].mxu0
      %v499 = vadd.f32 %v216, %v498
      %v500 = vpop.f32.mrb[0].mxu0
      %501 = vmatprep.mubr.bf16.mxu0 0
      %502 = vmatmul.mubr.bf16.gmra.mrb[0].mxu0 %v350
      %v503 = vpop.f32.mrb[0].mxu0
      %v504 = vadd.f32 %v216, %v503
      %v505 = vpop.f32.mrb[0].mxu0
      %v506 = vpop.f32.mrb[0].mxu0
      %v507 = vadd.f32 %v216, %v506
      %v508 = vpop.f32.mrb[0].mxu0
      %509 = vmatprep.mubr.bf16.mxu0 0
      %510 = vmatmul.mubr.bf16.gmra.mrb[0].mxu0 %v353
      %v511 = vpop.f32.mrb[0].mxu0
      %v512 = vadd.f32 %v216, %v511
      %v513 = vpop.f32.mrb[0].mxu0
      %v514 = vpop.f32.mrb[0].mxu0
      %v515 = vadd.f32 %v216, %v514
      %v516 = vpop.f32.mrb[0].mxu0
      %517 = vmatprep.mubr.bf16.mxu0 0
      %518 = vmatmul.mubr.bf16.gmra.mrb[0].mxu0 %v356
      %v519 = vpop.f32.mrb[0].mxu0
      %v520 = vadd.f32 %v216, %v519
      %v521 = vpop.f32.mrb[0].mxu0
      %v522 = vpop.f32.mrb[0].mxu0
      %v523 = vadd.f32 %v216, %v522
      %v524 = vpop.f32.mrb[0].mxu0
      %525 = vdwg.mxu0
      %vm526 = vcmp.gt.f32.partialorder %v400, 0.0
      %vm527 = vcmp.gt.f32.partialorder %v403, 0.0
      %vm528 = vcmp.gt.f32.partialorder %v408, 0.0
      %vm529 = vcmp.gt.f32.partialorder %v411, 0.0
      %vm530 = vcmp.gt.f32.partialorder %v416, 0.0
      %vm531 = vcmp.gt.f32.partialorder %v419, 0.0
      %vm532 = vcmp.gt.f32.partialorder %v424, 0.0
      %vm533 = vcmp.gt.f32.partialorder %v427, 0.0
      %vm534 = vcmp.gt.f32.partialorder %v432, 0.0
      %vm535 = vcmp.gt.f32.partialorder %v435, 0.0
      %vm536 = vcmp.gt.f32.partialorder %v440, 0.0
      %vm537 = vcmp.gt.f32.partialorder %v443, 0.0
      %vm538 = vcmp.gt.f32.partialorder %v448, 0.0
      %vm539 = vcmp.gt.f32.partialorder %v451, 0.0
      %vm540 = vcmp.gt.f32.partialorder %v456, 0.0
      %vm541 = vcmp.gt.f32.partialorder %v459, 0.0
      %vm542 = vcmp.gt.f32.partialorder %v464, 0.0
      %vm543 = vcmp.gt.f32.partialorder %v467, 0.0
      %vm544 = vcmp.gt.f32.partialorder %v472, 0.0
      %vm545 = vcmp.gt.f32.partialorder %v475, 0.0
      %vm546 = vcmp.gt.f32.partialorder %v480, 0.0
      %vm547 = vcmp.gt.f32.partialorder %v483, 0.0
      %vm548 = vcmp.gt.f32.partialorder %v488, 0.0
      %vm549 = vcmp.gt.f32.partialorder %v491, 0.0
      %vm550 = vcmp.gt.f32.partialorder %v496, 0.0
      %vm551 = vcmp.gt.f32.partialorder %v499, 0.0
      %vm552 = vcmp.gt.f32.partialorder %v504, 0.0
      %vm553 = vcmp.gt.f32.partialorder %v507, 0.0
      %vm554 = vcmp.gt.f32.partialorder %v512, 0.0
      %vm555 = vcmp.gt.f32.partialorder %v515, 0.0
      %vm556 = vcmp.gt.f32.partialorder %v520, 0.0
      %vm557 = vcmp.gt.f32.partialorder %v523, 0.0
      %v558 = vmul.f32 %v400, 0.01
      %v559 = vmul.f32 %v403, 0.01
      %v560 = vmul.f32 %v408, 0.01
      %v561 = vmul.f32 %v411, 0.01
      %v562 = vmul.f32 %v416, 0.01
      %v563 = vmul.f32 %v419, 0.01
      %v564 = vmul.f32 %v424, 0.01
      %v565 = vmul.f32 %v427, 0.01
      %v566 = vmul.f32 %v432, 0.01
      %v567 = vmul.f32 %v435, 0.01
      %v568 = vmul.f32 %v440, 0.01
      %v569 = vmul.f32 %v443, 0.01
      %v570 = vmul.f32 %v448, 0.01
      %v571 = vmul.f32 %v451, 0.01
      %v572 = vmul.f32 %v456, 0.01
      %v573 = vmul.f32 %v459, 0.01
      %v574 = vmul.f32 %v464, 0.01
      %v575 = vmul.f32 %v467, 0.01
      %v576 = vmul.f32 %v472, 0.01
      %v577 = vmul.f32 %v475, 0.01
      %v578 = vmul.f32 %v480, 0.01
      %v579 = vmul.f32 %v483, 0.01
      %v580 = vmul.f32 %v488, 0.01
      %v581 = vmul.f32 %v491, 0.01
      %v582 = vmul.f32 %v496, 0.01
      %v583 = vmul.f32 %v499, 0.01
      %v584 = vmul.f32 %v504, 0.01
      %v585 = vmul.f32 %v507, 0.01
      %v586 = vmul.f32 %v512, 0.01
      %v587 = vmul.f32 %v515, 0.01
      %v588 = vmul.f32 %v520, 0.01
      %v589 = vmul.f32 %v523, 0.01
      %v590 = vsel %vm526, %v400, %v558
      %v591 = vsel %vm527, %v403, %v559
      %v592 = vsel %vm528, %v408, %v560
      %v593 = vsel %vm529, %v411, %v561
      %v594 = vsel %vm530, %v416, %v562
      %v595 = vsel %vm531, %v419, %v563
      %v596 = vsel %vm532, %v424, %v564
      %v597 = vsel %vm533, %v427, %v565
      %v598 = vsel %vm534, %v432, %v566
      %v599 = vsel %vm535, %v435, %v567
      %v600 = vsel %vm536, %v440, %v568
      %v601 = vsel %vm537, %v443, %v569
      %v602 = vsel %vm538, %v448, %v570
      %v603 = vsel %vm539, %v451, %v571
      %v604 = vsel %vm540, %v456, %v572
      %v605 = vsel %vm541, %v459, %v573
      %v606 = vsel %vm542, %v464, %v574
      %v607 = vsel %vm543, %v467, %v575
      %v608 = vsel %vm544, %v472, %v576
      %v609 = vsel %vm545, %v475, %v577
      %v610 = vsel %vm546, %v480, %v578
      %v611 = vsel %vm547, %v483, %v579
      %v612 = vsel %vm548, %v488, %v580
      %v613 = vsel %vm549, %v491, %v581
      %v614 = vsel %vm550, %v496, %v582
      %v615 = vsel %vm551, %v499, %v583
      %v616 = vsel %vm552, %v504, %v584
      %v617 = vsel %vm553, %v507, %v585
      %v618 = vsel %vm554, %v512, %v586
      %v619 = vsel %vm555, %v515, %v587
      %v620 = vsel %vm556, %v520, %v588
      %v621 = vsel %vm557, %v523, %v589
      %622 = vst [vmem:[%s172] sm:$0xff] %v590
      %623 = vst [vmem:[%s172 + $0x8] sm:$0xff] %v591
      %624 = vst [vmem:[%s172 + $0x10] sm:$0xff] %v592
      %625 = vst [vmem:[%s172 + $0x18] sm:$0xff] %v593
      %626 = vst [vmem:[%s172 + $0x20] sm:$0xff] %v594
      %627 = vst [vmem:[%s172 + $0x28] sm:$0xff] %v595
      %628 = vst [vmem:[%s172 + $0x30] sm:$0xff] %v596
      %629 = vst [vmem:[%s172 + $0x38] sm:$0xff] %v597
      %630 = vst [vmem:[%s172 + $0x40] sm:$0xff] %v598
      %631 = vst [vmem:[%s172 + $0x48] sm:$0xff] %v599
      %632 = vst [vmem:[%s172 + $0x50] sm:$0xff] %v600
      %633 = vst [vmem:[%s172 + $0x58] sm:$0xff] %v601
      %634 = vst [vmem:[%s172 + $0x60] sm:$0xff] %v602
      %635 = vst [vmem:[%s172 + $0x68] sm:$0xff] %v603
      %636 = vst [vmem:[%s172 + $0x70] sm:$0xff] %v604
      %637 = vst [vmem:[%s172 + $0x78] sm:$0xff] %v605
      %638 = vst [vmem:[%s172 + $0x80] sm:$0xff] %v606
      %639 = vst [vmem:[%s172 + $0x88] sm:$0xff] %v607
      %640 = vst [vmem:[%s172 + $0x90] sm:$0xff] %v608
      %641 = vst [vmem:[%s172 + $0x98] sm:$0xff] %v609
      %642 = vst [vmem:[%s172 + $0xa0] sm:$0xff] %v610
      %643 = vst [vmem:[%s172 + $0xa8] sm:$0xff] %v611
      %644 = vst [vmem:[%s172 + $0xb0] sm:$0xff] %v612
      %645 = vst [vmem:[%s172 + $0xb8] sm:$0xff] %v613
      %646 = vst [vmem:[%s172 + $0xc0] sm:$0xff] %v614
      %647 = vst [vmem:[%s172 + $0xc8] sm:$0xff] %v615
      %648 = vst [vmem:[%s172 + $0xd0] sm:$0xff] %v616
      %649 = vst [vmem:[%s172 + $0xd8] sm:$0xff] %v617
      %650 = vst [vmem:[%s172 + $0xe0] sm:$0xff] %v618
      %651 = vst [vmem:[%s172 + $0xe8] sm:$0xff] %v619
      %652 = vst [vmem:[%s172 + $0xf0] sm:$0xff] %v620
      %653 = vst [vmem:[%s172 + $0xf8] sm:$0xff] %v621
      %s654 = smul.u32 32, %s14
      %p655 = scmp.lt.s32.totalorder %s654, 63
      %s656 = scalar_select %p655, %s654, 63
      %s657 = smul.addr %s656, 8
      %s658 = scalar_lea.vmem %s3, %s657
      // Predicated region
      $region33: #{unet_forward.9} parent=31 // pred_check
        %p659 = pneg %p100
      $region34: #{unet_forward.9} parent=31 // pred_check_branch
        %661 = sbr.rel (%p659) target = $region36
      $region35: #{unet_forward.9} parent=31 // pred_region
        %s662 = smul.u32 32, %s14
      $region36: #{unet_forward.9} parent=31 // pred_fallthru
        _
    $region32: #{unet_forward.9} parent=5 // pred_fallthru
      _
    %p663 = scmp.le.s32.totalorder 2, %s9
    // Predicated region
    $region37: #{unet_forward.9} parent=5 // pred_check
      %p664 = pneg %p663
    $region38: #{unet_forward.9} parent=5 // pred_check_branch
      %666 = sbr.rel (%p664) target = $region40
    $region39: #{unet_forward.9} parent=5 // pred_region
      %s667 = ssub.s32 %s9, 2
      // Predicated region
      $region41: #{unet_forward.9} parent=39 // pred_check
        %p668 = pneg %p106
      $region42: #{unet_forward.9} parent=39 // pred_check_branch
        %670 = sbr.rel (%p668) target = $region44
      $region43: #{unet_forward.9} parent=39 // pred_region
        %s671 = smul.u32 32, %s15
        %p672 = scmp.lt.s32.totalorder %s671, 63
        %s673 = scalar_select %p672, %s671, 63
        %s674 = smul.addr %s673, 8
        %s675 = scalar_lea.vmem %s3, %s674
      $region44: #{unet_forward.9} parent=39 // pred_fallthru
        _
    $region40: #{unet_forward.9} parent=5 // pred_fallthru
      _
  $region6: #{unet_forward.9} parent=0 // loop_footer
    %s13 = sadd.s32 1, %s9
  $region7: #{unet_forward.9} parent=0 // loop_footer_branch
    %8 = sbr.rel target = $region3
  $region8: #{unet_forward.9} parent=0 // loop_exit
    _

// kernel: unet_forward.10
$region0: #{unet_forward.10}
  #allocation0 [shape = 'u32[]', space=smem, size = 0x4, offset = 0x4, fixed_abs, tag = 'smem constant byte address 0x4 - core index']
  #allocation1 [shape = 'u32[144,128]{1,0:T(1,128)}', space=vmem, size = 0x12000, scoped, tag = 'internal scratch']
  %s0 = inlined_call_operand.vmem [shape: bf16[512,45], index: 0, kind: input, shape index: {}]
  %s1 = inlined_call_operand.vmem [shape: bf16[45,128], index: 1, kind: input, shape index: {}]
  %s2 = inlined_call_operand.vmem [shape: f32[1,128], index: 2, kind: input, shape index: {}]
  %s3 = inlined_call_operand.vmem [shape: f32[512,128], index: 3, kind: output, shape index: {}]
  %s4 = sld [smem:[#allocation0]]
  $region45: #{unet_forward.10} parent=0
    _
  %s6 = ssub.s32 1, %s4
  %s7 = scalar_select 0, %s6, %s4
  loop: start=0, step=1, limit=4
  $region2: #{unet_forward.10} parent=0 // loop_pre_header
    _
  $region3: #{unet_forward.10} parent=0 // loop_header
    %s9 = sphi 0, %s13
    %p10 = scmp.ge.s32.totalorder %s9, 4
    %s19 = sphi 0, %s21
    %s22 = sphi 0, %s19
    %s23 = sphi 0, %s22
    %s39 = sphi 0, %s23
    %s43 = sphi 0, %s43
    %s45 = sphi 0, %s43
    %s46 = sphi 0, %s45
    %s60 = sphi 0, %s46
    %s64 = sphi 0, %s64
    %s66 = sphi 0, %s64
    %s67 = sphi 0, %s66
    %s81 = sphi 0, %s67
    %s87 = sphi 0, %s89
    %s90 = sphi 0, %s87
    %s91 = sphi 0, %s90
    %s107 = sphi 0, %s91
  $region4: #{unet_forward.10} parent=0 // loop_header_branch
    %12 = sbr.rel (%p10) target = $region8
  $region5: #{unet_forward.10} parent=0 // loop_body
    %s14 = ssub.s32 %s9, 1
    %s15 = ssub.s32 %s9, 2
    %s16 = sadd.s32 %s9, 1
    %s17 = ssub.s32 %s9, %s16
    %p18 = scmp.eq.s32.totalorder %s17, 0
    %s20 = sadd.s32 %s19, 1
    %s21 = scalar_select %p18, %s19, %s20
    %p24 = pneg %p18
    %p25 = scmp.eq.s32.totalorder %s9, 1
    %p26 = por %p24, %p25
    %p27 = scmp.ne.s32.totalorder %s19, %s22
    %p28 = scmp.eq.s32.totalorder %s9, 0
    %p29 = por %p27, %p28
    %p30 = scmp.ne.s32.totalorder %s19, %s22
    %p31 = scmp.eq.s32.totalorder %s14, 1
    %p32 = por %p30, %p31
    %p33 = scmp.ne.s32.totalorder %s22, %s23
    %p34 = scmp.eq.s32.totalorder %s14, 0
    %p35 = por %p33, %p34
    %p36 = scmp.ne.s32.totalorder %s22, %s23
    %p37 = scmp.eq.s32.totalorder %s15, 1
    %p38 = por %p36, %p37
    %p40 = scmp.ne.s32.totalorder %s23, %s39
    %p41 = scmp.eq.s32.totalorder %s15, 0
    %p42 = por %p40, %p41
    %s44 = sadd.s32 %s43, 1
    %p47 = scmp.eq.s32.totalorder %s9, 1
    %p48 = scmp.ne.s32.totalorder %s43, %s45
    %p49 = scmp.eq.s32.totalorder %s9, 0
    %p50 = por %p48, %p49
    %p51 = scmp.ne.s32.totalorder %s43, %s45
    %p52 = scmp.eq.s32.totalorder %s14, 1
    %p53 = por %p51, %p52
    %p54 = scmp.ne.s32.totalorder %s45, %s46
    %p55 = scmp.eq.s32.totalorder %s14, 0
    %p56 = por %p54, %p55
    %p57 = scmp.ne.s32.totalorder %s45, %s46
    %p58 = scmp.eq.s32.totalorder %s15, 1
    %p59 = por %p57, %p58
    %p61 = scmp.ne.s32.totalorder %s46, %s60
    %p62 = scmp.eq.s32.totalorder %s15, 0
    %p63 = por %p61, %p62
    %s65 = sadd.s32 %s64, 1
    %p68 = scmp.eq.s32.totalorder %s9, 1
    %p69 = scmp.ne.s32.totalorder %s64, %s66
    %p70 = scmp.eq.s32.totalorder %s9, 0
    %p71 = por %p69, %p70
    %p72 = scmp.ne.s32.totalorder %s64, %s66
    %p73 = scmp.eq.s32.totalorder %s14, 1
    %p74 = por %p72, %p73
    %p75 = scmp.ne.s32.totalorder %s66, %s67
    %p76 = scmp.eq.s32.totalorder %s14, 0
    %p77 = por %p75, %p76
    %p78 = scmp.ne.s32.totalorder %s66, %s67
    %p79 = scmp.eq.s32.totalorder %s15, 1
    %p80 = por %p78, %p79
    %p82 = scmp.ne.s32.totalorder %s67, %s81
    %p83 = scmp.eq.s32.totalorder %s15, 0
    %p84 = por %p82, %p83
    %s85 = ssub.s32 %s9, %s16
    %p86 = scmp.eq.s32.totalorder %s85, 0
    %s88 = sadd.s32 %s87, 1
    %s89 = scalar_select %p86, %s87, %s88
    %p92 = pneg %p86
    %p93 = scmp.eq.s32.totalorder %s9, 1
    %p94 = por %p92, %p93
    %p95 = scmp.ne.s32.totalorder %s87, %s90
    %p96 = scmp.eq.s32.totalorder %s9, 0
    %p97 = por %p95, %p96
    %p98 = scmp.ne.s32.totalorder %s87, %s90
    %p99 = scmp.eq.s32.totalorder %s14, 1
    %p100 = por %p98, %p99
    %p101 = scmp.ne.s32.totalorder %s90, %s91
    %p102 = scmp.eq.s32.totalorder %s14, 0
    %p103 = por %p101, %p102
    %p104 = scmp.ne.s32.totalorder %s90, %s91
    %p105 = scmp.eq.s32.totalorder %s15, 1
    %p106 = por %p104, %p105
    %p108 = scmp.ne.s32.totalorder %s91, %s107
    %p109 = scmp.eq.s32.totalorder %s15, 0
    %p110 = por %p108, %p109
    %p111 = scmp.le.s32.totalorder 1, %s9
    %p112 = scmp.lt.s32.totalorder %s9, 3
    %p113 = pnand %p111, %p112
    %p114 = pneg %p113
    // Predicated region
    $region9: #{unet_forward.10} parent=5 // pred_check
      _
    $region10: #{unet_forward.10} parent=5 // pred_check_branch
      %116 = sbr.rel (%p113) target = $region12
    $region11: #{unet_forward.10} parent=5 // pred_region
      %s117 = ssub.s32 %s9, 1
      // Predicated region
      $region13: #{unet_forward.10} parent=11 // pred_check
        %p118 = pneg %p56
      $region14: #{unet_forward.10} parent=11 // pred_check_branch
        %120 = sbr.rel (%p118) target = $region16
      $region15: #{unet_forward.10} parent=11 // pred_region
        _
      $region16: #{unet_forward.10} parent=11 // pred_fallthru
        _
      // Predicated region
      $region17: #{unet_forward.10} parent=11 // pred_check
        %p121 = pneg %p77
      $region18: #{unet_forward.10} parent=11 // pred_check_branch
        %123 = sbr.rel (%p121) target = $region20
      $region19: #{unet_forward.10} parent=11 // pred_region
        _
      $region20: #{unet_forward.10} parent=11 // pred_fallthru
        _
    $region12: #{unet_forward.10} parent=5 // pred_fallthru
      _
    %p124 = scmp.lt.s32.totalorder %s9, 2
    // Predicated region
    $region21: #{unet_forward.10} parent=5 // pred_check
      %p125 = pneg %p124
    $region22: #{unet_forward.10} parent=5 // pred_check_branch
      %127 = sbr.rel (%p125) target = $region24
    $region23: #{unet_forward.10} parent=5 // pred_region
      // Predicated region
      $region25: #{unet_forward.10} parent=23 // pred_check
        %p128 = pneg %p29
      $region26: #{unet_forward.10} parent=23 // pred_check_branch
        %130 = sbr.rel (%p128) target = $region28
      $region27: #{unet_forward.10} parent=23 // pred_region
        %s131 = smul.u32 32, %s9
        %p132 = scmp.lt.s32.totalorder %s131, 63
        %s133 = scalar_select %p132, %s131, 63
        %s134 = smul.addr %s133, 4
        %s135 = scalar_lea.vmem %s0, %s134
        %s136 = smul.u32 32, %s9
      $region28: #{unet_forward.10} parent=23 // pred_fallthru
        _
    $region24: #{unet_forward.10} parent=5 // pred_fallthru
      _
    %p137 = scmp.le.s32.totalorder 1, %s9
    %p138 = scmp.lt.s32.totalorder %s9, 3
    %p139 = pnand %p137, %p138
    %p140 = pneg %p139
    // Predicated region
    $region29: #{unet_forward.10} parent=5 // pred_check
      _
    $region30: #{unet_forward.10} parent=5 // pred_check_branch
      %142 = sbr.rel (%p139) target = $region32
    $region31: #{unet_forward.10} parent=5 // pred_region
      %s143 = ssub.s32 %s9, 1
      %s144 = smul.u32 32, %s14
      %p145 = scmp.lt.s32.totalorder %s144, 63
      %s146 = scalar_select %p145, %s144, 63
      %s147 = smul.addr %s146, 4
      %s148 = scalar_lea.vmem %s0, %s147
      %p149 = pneg %p35
      %p150 = pneg %p32
      %p151 = pneg %p56
      %p152 = pneg %p53
      %p153 = pneg %p77
      %p154 = pneg %p74
      %p155 = pneg %p103
      %p156 = pneg %p100
      %s157 = smul.u32 32, %s14
      %p158 = scmp.lt.s32.totalorder %s157, 63
      %s159 = scalar_select %p158, %s157, 63
      %s160 = smul.addr %s159, 8
      %s161 = scalar_lea.vmem %s3, %s160
      %s162 = smul.u32 32, %s14
      %p163 = scmp.lt.s32.totalorder %s162, 63
      %s164 = scalar_select %p163, %s162, 63
      %s165 = smul.addr %s164, 4
      %s166 = scalar_lea.vmem %s0, %s165
      %s167 = smul.u32 32, %s14
      %s168 = smul.u32 32, %s14
      %p169 = scmp.lt.s32.totalorder %s168, 63
      %s170 = scalar_select %p169, %s168, 63
      %s171 = smul.addr %s170, 8
      %s172 = scalar_lea.vmem %s3, %s171
      %s173 = smul.u32 32, %s14
      %v175 = vld [vmem:[%s166] sm:$0xf]
      %v176 = vld [vmem:[%s166 + $0x4] sm:$0xf]
      %v177 = vld [vmem:[%s166 + $0x8] sm:$0xf]
      %v178 = vld [vmem:[%s166 + $0xc] sm:$0xf]
      %v179 = vld [vmem:[%s166 + $0x10] sm:$0xf]
      %v180 = vld [vmem:[%s166 + $0x14] sm:$0xf]
      %v181 = vld [vmem:[%s166 + $0x18] sm:$0xf]
      %v182 = vld [vmem:[%s166 + $0x1c] sm:$0xf]
      %v183 = vld [vmem:[%s166 + $0x20] sm:$0xf]
      %v184 = vld [vmem:[%s166 + $0x24] sm:$0xf]
      %v185 = vld [vmem:[%s166 + $0x28] sm:$0xf]
      %v186 = vld [vmem:[%s166 + $0x2c] sm:$0xf]
      %v187 = vld [vmem:[%s166 + $0x30] sm:$0xf]
      %v188 = vld [vmem:[%s166 + $0x34] sm:$0xf]
      %v189 = vld [vmem:[%s166 + $0x38] sm:$0xf]
      %v190 = vld [vmem:[%s166 + $0x3c] sm:$0xf]
      %v191 = vld [vmem:[%s166 + $0x40] sm:$0xf]
      %v192 = vld [vmem:[%s166 + $0x44] sm:$0xf]
      %v193 = vld [vmem:[%s166 + $0x48] sm:$0xf]
      %v194 = vld [vmem:[%s166 + $0x4c] sm:$0xf]
      %v195 = vld [vmem:[%s166 + $0x50] sm:$0xf]
      %v196 = vld [vmem:[%s166 + $0x54] sm:$0xf]
      %v197 = vld [vmem:[%s166 + $0x58] sm:$0xf]
      %v198 = vld [vmem:[%s166 + $0x5c] sm:$0xf]
      %v199 = vld [vmem:[%s166 + $0x60] sm:$0xf]
      %v200 = vld [vmem:[%s166 + $0x64] sm:$0xf]
      %v201 = vld [vmem:[%s166 + $0x68] sm:$0xf]
      %v202 = vld [vmem:[%s166 + $0x6c] sm:$0xf]
      %v203 = vld [vmem:[%s166 + $0x70] sm:$0xf]
      %v204 = vld [vmem:[%s166 + $0x74] sm:$0xf]
      %v205 = vld [vmem:[%s166 + $0x78] sm:$0xf]
      %v206 = vld [vmem:[%s166 + $0x7c] sm:$0xf]
      %v207 = vld [vmem:[%s1] sm:$0xf]
      %v208 = vld [vmem:[%s1 + $0x4] sm:$0xf]
      %v209 = vld [vmem:[%s1 + $0x8] sm:$0xf]
      %v210 = vld [vmem:[%s1 + $0xc] sm:$0xf]
      %v211 = vld [vmem:[%s1 + $0x10] sm:$0xf]
      %v212 = vld [vmem:[%s1 + $0x14] sm:$0x7]
      %v213 = vld [vmem:[%s2] sm:$0x1]
      %v215 = vlaneseq
      %v216 = vshrl.u32 %v215, 7
      %v217 = vsub.s32 0, %v216
      %v218 = vrot.slane %v213, %v217
      %v252 = vunpack.c.l.b16 %v175
      %v253 = vunpack.c.l.b16 %v176
      %v254 = vunpack.c.l.b16 %v177
      %v255 = vunpack.c.l.b16 %v178
      %v256 = vunpack.c.l.b16 %v179
      %v257 = vunpack.c.l.b16 %v180
      %v258 = vunpack.c.l.b16 %v181
      %v259 = vunpack.c.l.b16 %v182
      %v260 = vunpack.c.l.b16 %v183
      %v261 = vunpack.c.l.b16 %v184
      %v262 = vunpack.c.l.b16 %v185
      %v263 = vunpack.c.l.b16 %v186
      %v264 = vunpack.c.l.b16 %v187
      %v265 = vunpack.c.l.b16 %v188
      %v266 = vunpack.c.l.b16 %v189
      %v267 = vunpack.c.l.b16 %v190
      %v268 = vunpack.c.l.b16 %v191
      %v269 = vunpack.c.l.b16 %v192
      %v270 = vunpack.c.l.b16 %v193
      %v271 = vunpack.c.l.b16 %v194
      %v272 = vunpack.c.l.b16 %v195
      %v273 = vunpack.c.l.b16 %v196
      %v274 = vunpack.c.l.b16 %v197
      %v275 = vunpack.c.l.b16 %v198
      %v276 = vunpack.c.l.b16 %v199
      %v277 = vunpack.c.l.b16 %v200
      %v278 = vunpack.c.l.b16 %v201
      %v279 = vunpack.c.l.b16 %v202
      %v280 = vunpack.c.l.b16 %v203
      %v281 = vunpack.c.l.b16 %v204
      %v282 = vunpack.c.l.b16 %v205
      %v283 = vunpack.c.l.b16 %v206
      %v284 = vpack.c.b16 %v253, %v252
      %v285 = vpack.c.b16 %v255, %v254
      %v286 = vpack.c.b16 %v257, %v256
      %v287 = vpack.c.b16 %v259, %v258
      %v288 = vpack.c.b16 %v261, %v260
      %v289 = vpack.c.b16 %v263, %v262
      %v290 = vpack.c.b16 %v265, %v264
      %v291 = vpack.c.b16 %v267, %v266
      %v292 = vpack.c.b16 %v269, %v268
      %v293 = vpack.c.b16 %v271, %v270
      %v294 = vpack.c.b16 %v273, %v272
      %v295 = vpack.c.b16 %v275, %v274
      %v296 = vpack.c.b16 %v277, %v276
      %v297 = vpack.c.b16 %v279, %v278
      %v298 = vpack.c.b16 %v281, %v280
      %v299 = vpack.c.b16 %v283, %v282
      %v306 = vunpack.c.l.b16 %v207
      %v307 = vunpack.c.l.b16 %v208
      %v308 = vunpack.c.l.b16 %v209
      %v309 = vunpack.c.l.b16 %v210
      %v310 = vunpack.c.l.b16 %v211
      %v311 = vunpack.c.l.b16 %v212
      %v312 = vpack.c.b16 %v307, %v306
      %v313 = vpack.c.b16 %v309, %v308
      %v314 = vpack.c.b16 %v311, %v310
      %vm317 = vcmask 367616
      %v319 = vsel %vm317, %v284, 0
      %v322 = vsel %vm317, %v285, 0
      %v325 = vsel %vm317, %v286, 0
      %v328 = vsel %vm317, %v287, 0
      %v331 = vsel %vm317, %v288, 0
      %v334 = vsel %vm317, %v289, 0
      %v337 = vsel %vm317, %v290, 0
      %v340 = vsel %vm317, %v291, 0
      %v343 = vsel %vm317, %v292, 0
      %v346 = vsel %vm317, %v293, 0
      %v349 = vsel %vm317, %v294, 0
      %v352 = vsel %vm317, %v295, 0
      %v355 = vsel %vm317, %v296, 0
      %v358 = vsel %vm317, %v297, 0
      %v361 = vsel %vm317, %v298, 0
      %v364 = vsel %vm317, %v299, 0
      %vm366 = vcmask 1045504
      %vm367 = vcmask 1046528
      %v368 = vsel %vm366, 4294967295, 65535
      %v369 = vsel %vm367, %v368, 0
      %v371 = vand.u32 %v314, %v369
      %373 = vmatprep.subr.bf16.mxu0 0
      %374 = vmatpush1.bf16.msra.mxu0 %v312
      %375 = vmatprep.subr.bf16.mxu0 0
      %376 = vmatpush1.bf16.msra.mxu0 %v313
      %377 = vmatprep.subr.bf16.mxu0 0
      %378 = vmatpush1.bf16.msra.mxu0 %v371
      %379 = vmatprep.subr.bf16.mxu0 0
      %380 = vmatpush1.bf16.msra.mxu0 0
      %381 = vmatprep.subr.bf16.mxu0 0
      %382 = vmatpush1.bf16.msra.mxu0 0
      %383 = vmatprep.subr.bf16.mxu0 0
      %384 = vmatpush1.bf16.msra.mxu0 0
      %385 = vmatprep.subr.bf16.mxu0 0
      %386 = vmatpush1.bf16.msra.mxu0 0
      %387 = vmatprep.subr.bf16.mxu0 0
      %388 = vmatpush1.bf16.msra.mxu0 0
      %389 = vmatprep.subr.bf16.mxu0 0
      %390 = vmatpush1.bf16.msra.mxu0 0
      %391 = vmatprep.subr.bf16.mxu0 0
      %392 = vmatpush1.bf16.msra.mxu0 0
      %393 = vmatprep.subr.bf16.mxu0 0
      %394 = vmatpush1.bf16.msra.mxu0 0
      %395 = vmatprep.subr.bf16.mxu0 0
      %396 = vmatpush1.bf16.msra.mxu0 0
      %397 = vmatprep.subr.bf16.mxu0 0
      %398 = vmatpush1.bf16.msra.mxu0 0
      %399 = vmatprep.subr.bf16.mxu0 0
      %400 = vmatpush1.bf16.msra.mxu0 0
      %401 = vmatprep.subr.bf16.mxu0 0
      %402 = vmatpush1.bf16.msra.mxu0 0
      %403 = vmatprep.subr.bf16.mxu0 0
      %404 = vmatpush1.bf16.msra.mxu0 0
      %405 = vmatprep.mubr.bf16.mxu0 0
      %406 = vmatmul.mubr.bf16.gmra.mrb[0].mxu0 %v319
      %v407 = vpop.f32.mrb[0].mxu0
      %v408 = vadd.f32 %v218, %v407
      %v409 = vpop.f32.mrb[0].mxu0
      %v410 = vpop.f32.mrb[0].mxu0
      %v411 = vadd.f32 %v218, %v410
      %v412 = vpop.f32.mrb[0].mxu0
      %413 = vmatprep.mubr.bf16.mxu0 0
      %414 = vmatmul.mubr.bf16.gmra.mrb[0].mxu0 %v322
      %v415 = vpop.f32.mrb[0].mxu0
      %v416 = vadd.f32 %v218, %v415
      %v417 = vpop.f32.mrb[0].mxu0
      %v418 = vpop.f32.mrb[0].mxu0
      %v419 = vadd.f32 %v218, %v418
      %v420 = vpop.f32.mrb[0].mxu0
      %421 = vmatprep.mubr.bf16.mxu0 0
      %422 = vmatmul.mubr.bf16.gmra.mrb[0].mxu0 %v325
      %v423 = vpop.f32.mrb[0].mxu0
      %v424 = vadd.f32 %v218, %v423
      %v425 = vpop.f32.mrb[0].mxu0
      %v426 = vpop.f32.mrb[0].mxu0
      %v427 = vadd.f32 %v218, %v426
      %v428 = vpop.f32.mrb[0].mxu0
      %429 = vmatprep.mubr.bf16.mxu0 0
      %430 = vmatmul.mubr.bf16.gmra.mrb[0].mxu0 %v328
      %v431 = vpop.f32.mrb[0].mxu0
      %v432 = vadd.f32 %v218, %v431
      %v433 = vpop.f32.mrb[0].mxu0
      %v434 = vpop.f32.mrb[0].mxu0
      %v435 = vadd.f32 %v218, %v434
      %v436 = vpop.f32.mrb[0].mxu0
      %437 = vmatprep.mubr.bf16.mxu0 0
      %438 = vmatmul.mubr.bf16.gmra.mrb[0].mxu0 %v331
      %v439 = vpop.f32.mrb[0].mxu0
      %v440 = vadd.f32 %v218, %v439
      %v441 = vpop.f32.mrb[0].mxu0
      %v442 = vpop.f32.mrb[0].mxu0
      %v443 = vadd.f32 %v218, %v442
      %v444 = vpop.f32.mrb[0].mxu0
      %445 = vmatprep.mubr.bf16.mxu0 0
      %446 = vmatmul.mubr.bf16.gmra.mrb[0].mxu0 %v334
      %v447 = vpop.f32.mrb[0].mxu0
      %v448 = vadd.f32 %v218, %v447
      %v449 = vpop.f32.mrb[0].mxu0
      %v450 = vpop.f32.mrb[0].mxu0
      %v451 = vadd.f32 %v218, %v450
      %v452 = vpop.f32.mrb[0].mxu0
      %453 = vmatprep.mubr.bf16.mxu0 0
      %454 = vmatmul.mubr.bf16.gmra.mrb[0].mxu0 %v337
      %v455 = vpop.f32.mrb[0].mxu0
      %v456 = vadd.f32 %v218, %v455
      %v457 = vpop.f32.mrb[0].mxu0
      %v458 = vpop.f32.mrb[0].mxu0
      %v459 = vadd.f32 %v218, %v458
      %v460 = vpop.f32.mrb[0].mxu0
      %461 = vmatprep.mubr.bf16.mxu0 0
      %462 = vmatmul.mubr.bf16.gmra.mrb[0].mxu0 %v340
      %v463 = vpop.f32.mrb[0].mxu0
      %v464 = vadd.f32 %v218, %v463
      %v465 = vpop.f32.mrb[0].mxu0
      %v466 = vpop.f32.mrb[0].mxu0
      %v467 = vadd.f32 %v218, %v466
      %v468 = vpop.f32.mrb[0].mxu0
      %469 = vmatprep.mubr.bf16.mxu0 0
      %470 = vmatmul.mubr.bf16.gmra.mrb[0].mxu0 %v343
      %v471 = vpop.f32.mrb[0].mxu0
      %v472 = vadd.f32 %v218, %v471
      %v473 = vpop.f32.mrb[0].mxu0
      %v474 = vpop.f32.mrb[0].mxu0
      %v475 = vadd.f32 %v218, %v474
      %v476 = vpop.f32.mrb[0].mxu0
      %477 = vmatprep.mubr.bf16.mxu0 0
      %478 = vmatmul.mubr.bf16.gmra.mrb[0].mxu0 %v346
      %v479 = vpop.f32.mrb[0].mxu0
      %v480 = vadd.f32 %v218, %v479
      %v481 = vpop.f32.mrb[0].mxu0
      %v482 = vpop.f32.mrb[0].mxu0
      %v483 = vadd.f32 %v218, %v482
      %v484 = vpop.f32.mrb[0].mxu0
      %485 = vmatprep.mubr.bf16.mxu0 0
      %486 = vmatmul.mubr.bf16.gmra.mrb[0].mxu0 %v349
      %v487 = vpop.f32.mrb[0].mxu0
      %v488 = vadd.f32 %v218, %v487
      %v489 = vpop.f32.mrb[0].mxu0
      %v490 = vpop.f32.mrb[0].mxu0
      %v491 = vadd.f32 %v218, %v490
      %v492 = vpop.f32.mrb[0].mxu0
      %493 = vmatprep.mubr.bf16.mxu0 0
      %494 = vmatmul.mubr.bf16.gmra.mrb[0].mxu0 %v352
      %v495 = vpop.f32.mrb[0].mxu0
      %v496 = vadd.f32 %v218, %v495
      %v497 = vpop.f32.mrb[0].mxu0
      %v498 = vpop.f32.mrb[0].mxu0
      %v499 = vadd.f32 %v218, %v498
      %v500 = vpop.f32.mrb[0].mxu0
      %501 = vmatprep.mubr.bf16.mxu0 0
      %502 = vmatmul.mubr.bf16.gmra.mrb[0].mxu0 %v355
      %v503 = vpop.f32.mrb[0].mxu0
      %v504 = vadd.f32 %v218, %v503
      %v505 = vpop.f32.mrb[0].mxu0
      %v506 = vpop.f32.mrb[0].mxu0
      %v507 = vadd.f32 %v218, %v506
      %v508 = vpop.f32.mrb[0].mxu0
      %509 = vmatprep.mubr.bf16.mxu0 0
      %510 = vmatmul.mubr.bf16.gmra.mrb[0].mxu0 %v358
      %v511 = vpop.f32.mrb[0].mxu0
      %v512 = vadd.f32 %v218, %v511
      %v513 = vpop.f32.mrb[0].mxu0
      %v514 = vpop.f32.mrb[0].mxu0
      %v515 = vadd.f32 %v218, %v514
      %v516 = vpop.f32.mrb[0].mxu0
      %517 = vmatprep.mubr.bf16.mxu0 0
      %518 = vmatmul.mubr.bf16.gmra.mrb[0].mxu0 %v361
      %v519 = vpop.f32.mrb[0].mxu0
      %v520 = vadd.f32 %v218, %v519
      %v521 = vpop.f32.mrb[0].mxu0
      %v522 = vpop.f32.mrb[0].mxu0
      %v523 = vadd.f32 %v218, %v522
      %v524 = vpop.f32.mrb[0].mxu0
      %525 = vmatprep.mubr.bf16.mxu0 0
      %526 = vmatmul.mubr.bf16.gmra.mrb[0].mxu0 %v364
      %v527 = vpop.f32.mrb[0].mxu0
      %v528 = vadd.f32 %v218, %v527
      %v529 = vpop.f32.mrb[0].mxu0
      %v530 = vpop.f32.mrb[0].mxu0
      %v531 = vadd.f32 %v218, %v530
      %v532 = vpop.f32.mrb[0].mxu0
      %533 = vdwg.mxu0
      %vm534 = vcmp.gt.f32.partialorder %v408, 0.0
      %vm535 = vcmp.gt.f32.partialorder %v411, 0.0
      %vm536 = vcmp.gt.f32.partialorder %v416, 0.0
      %vm537 = vcmp.gt.f32.partialorder %v419, 0.0
      %vm538 = vcmp.gt.f32.partialorder %v424, 0.0
      %vm539 = vcmp.gt.f32.partialorder %v427, 0.0
      %vm540 = vcmp.gt.f32.partialorder %v432, 0.0
      %vm541 = vcmp.gt.f32.partialorder %v435, 0.0
      %vm542 = vcmp.gt.f32.partialorder %v440, 0.0
      %vm543 = vcmp.gt.f32.partialorder %v443, 0.0
      %vm544 = vcmp.gt.f32.partialorder %v448, 0.0
      %vm545 = vcmp.gt.f32.partialorder %v451, 0.0
      %vm546 = vcmp.gt.f32.partialorder %v456, 0.0
      %vm547 = vcmp.gt.f32.partialorder %v459, 0.0
      %vm548 = vcmp.gt.f32.partialorder %v464, 0.0
      %vm549 = vcmp.gt.f32.partialorder %v467, 0.0
      %vm550 = vcmp.gt.f32.partialorder %v472, 0.0
      %vm551 = vcmp.gt.f32.partialorder %v475, 0.0
      %vm552 = vcmp.gt.f32.partialorder %v480, 0.0
      %vm553 = vcmp.gt.f32.partialorder %v483, 0.0
      %vm554 = vcmp.gt.f32.partialorder %v488, 0.0
      %vm555 = vcmp.gt.f32.partialorder %v491, 0.0
      %vm556 = vcmp.gt.f32.partialorder %v496, 0.0
      %vm557 = vcmp.gt.f32.partialorder %v499, 0.0
      %vm558 = vcmp.gt.f32.partialorder %v504, 0.0
      %vm559 = vcmp.gt.f32.partialorder %v507, 0.0
      %vm560 = vcmp.gt.f32.partialorder %v512, 0.0
      %vm561 = vcmp.gt.f32.partialorder %v515, 0.0
      %vm562 = vcmp.gt.f32.partialorder %v520, 0.0
      %vm563 = vcmp.gt.f32.partialorder %v523, 0.0
      %vm564 = vcmp.gt.f32.partialorder %v528, 0.0
      %vm565 = vcmp.gt.f32.partialorder %v531, 0.0
      %v566 = vmul.f32 %v408, 0.01
      %v567 = vmul.f32 %v411, 0.01
      %v568 = vmul.f32 %v416, 0.01
      %v569 = vmul.f32 %v419, 0.01
      %v570 = vmul.f32 %v424, 0.01
      %v571 = vmul.f32 %v427, 0.01
      %v572 = vmul.f32 %v432, 0.01
      %v573 = vmul.f32 %v435, 0.01
      %v574 = vmul.f32 %v440, 0.01
      %v575 = vmul.f32 %v443, 0.01
      %v576 = vmul.f32 %v448, 0.01
      %v577 = vmul.f32 %v451, 0.01
      %v578 = vmul.f32 %v456, 0.01
      %v579 = vmul.f32 %v459, 0.01
      %v580 = vmul.f32 %v464, 0.01
      %v581 = vmul.f32 %v467, 0.01
      %v582 = vmul.f32 %v472, 0.01
      %v583 = vmul.f32 %v475, 0.01
      %v584 = vmul.f32 %v480, 0.01
      %v585 = vmul.f32 %v483, 0.01
      %v586 = vmul.f32 %v488, 0.01
      %v587 = vmul.f32 %v491, 0.01
      %v588 = vmul.f32 %v496, 0.01
      %v589 = vmul.f32 %v499, 0.01
      %v590 = vmul.f32 %v504, 0.01
      %v591 = vmul.f32 %v507, 0.01
      %v592 = vmul.f32 %v512, 0.01
      %v593 = vmul.f32 %v515, 0.01
      %v594 = vmul.f32 %v520, 0.01
      %v595 = vmul.f32 %v523, 0.01
      %v596 = vmul.f32 %v528, 0.01
      %v597 = vmul.f32 %v531, 0.01
      %v598 = vsel %vm534, %v408, %v566
      %v599 = vsel %vm535, %v411, %v567
      %v600 = vsel %vm536, %v416, %v568
      %v601 = vsel %vm537, %v419, %v569
      %v602 = vsel %vm538, %v424, %v570
      %v603 = vsel %vm539, %v427, %v571
      %v604 = vsel %vm540, %v432, %v572
      %v605 = vsel %vm541, %v435, %v573
      %v606 = vsel %vm542, %v440, %v574
      %v607 = vsel %vm543, %v443, %v575
      %v608 = vsel %vm544, %v448, %v576
      %v609 = vsel %vm545, %v451, %v577
      %v610 = vsel %vm546, %v456, %v578
      %v611 = vsel %vm547, %v459, %v579
      %v612 = vsel %vm548, %v464, %v580
      %v613 = vsel %vm549, %v467, %v581
      %v614 = vsel %vm550, %v472, %v582
      %v615 = vsel %vm551, %v475, %v583
      %v616 = vsel %vm552, %v480, %v584
      %v617 = vsel %vm553, %v483, %v585
      %v618 = vsel %vm554, %v488, %v586
      %v619 = vsel %vm555, %v491, %v587
      %v620 = vsel %vm556, %v496, %v588
      %v621 = vsel %vm557, %v499, %v589
      %v622 = vsel %vm558, %v504, %v590
      %v623 = vsel %vm559, %v507, %v591
      %v624 = vsel %vm560, %v512, %v592
      %v625 = vsel %vm561, %v515, %v593
      %v626 = vsel %vm562, %v520, %v594
      %v627 = vsel %vm563, %v523, %v595
      %v628 = vsel %vm564, %v528, %v596
      %v629 = vsel %vm565, %v531, %v597
      %630 = vst [vmem:[%s172] sm:$0xff] %v598
      %631 = vst [vmem:[%s172 + $0x8] sm:$0xff] %v599
      %632 = vst [vmem:[%s172 + $0x10] sm:$0xff] %v600
      %633 = vst [vmem:[%s172 + $0x18] sm:$0xff] %v601
      %634 = vst [vmem:[%s172 + $0x20] sm:$0xff] %v602
      %635 = vst [vmem:[%s172 + $0x28] sm:$0xff] %v603
      %636 = vst [vmem:[%s172 + $0x30] sm:$0xff] %v604
      %637 = vst [vmem:[%s172 + $0x38] sm:$0xff] %v605
      %638 = vst [vmem:[%s172 + $0x40] sm:$0xff] %v606
      %639 = vst [vmem:[%s172 + $0x48] sm:$0xff] %v607
      %640 = vst [vmem:[%s172 + $0x50] sm:$0xff] %v608
      %641 = vst [vmem:[%s172 + $0x58] sm:$0xff] %v609
      %642 = vst [vmem:[%s172 + $0x60] sm:$0xff] %v610
      %643 = vst [vmem:[%s172 + $0x68] sm:$0xff] %v611
      %644 = vst [vmem:[%s172 + $0x70] sm:$0xff] %v612
      %645 = vst [vmem:[%s172 + $0x78] sm:$0xff] %v613
      %646 = vst [vmem:[%s172 + $0x80] sm:$0xff] %v614
      %647 = vst [vmem:[%s172 + $0x88] sm:$0xff] %v615
      %648 = vst [vmem:[%s172 + $0x90] sm:$0xff] %v616
      %649 = vst [vmem:[%s172 + $0x98] sm:$0xff] %v617
      %650 = vst [vmem:[%s172 + $0xa0] sm:$0xff] %v618
      %651 = vst [vmem:[%s172 + $0xa8] sm:$0xff] %v619
      %652 = vst [vmem:[%s172 + $0xb0] sm:$0xff] %v620
      %653 = vst [vmem:[%s172 + $0xb8] sm:$0xff] %v621
      %654 = vst [vmem:[%s172 + $0xc0] sm:$0xff] %v622
      %655 = vst [vmem:[%s172 + $0xc8] sm:$0xff] %v623
      %656 = vst [vmem:[%s172 + $0xd0] sm:$0xff] %v624
      %657 = vst [vmem:[%s172 + $0xd8] sm:$0xff] %v625
      %658 = vst [vmem:[%s172 + $0xe0] sm:$0xff] %v626
      %659 = vst [vmem:[%s172 + $0xe8] sm:$0xff] %v627
      %660 = vst [vmem:[%s172 + $0xf0] sm:$0xff] %v628
      %661 = vst [vmem:[%s172 + $0xf8] sm:$0xff] %v629
      %s662 = smul.u32 32, %s14
      %p663 = scmp.lt.s32.totalorder %s662, 63
      %s664 = scalar_select %p663, %s662, 63
      %s665 = smul.addr %s664, 8
      %s666 = scalar_lea.vmem %s3, %s665
      // Predicated region
      $region33: #{unet_forward.10} parent=31 // pred_check
        %p667 = pneg %p100
      $region34: #{unet_forward.10} parent=31 // pred_check_branch
        %669 = sbr.rel (%p667) target = $region36
      $region35: #{unet_forward.10} parent=31 // pred_region
        %s670 = smul.u32 32, %s14
      $region36: #{unet_forward.10} parent=31 // pred_fallthru
        _
    $region32: #{unet_forward.10} parent=5 // pred_fallthru
      _
    %p671 = scmp.le.s32.totalorder 2, %s9
    // Predicated region
    $region37: #{unet_forward.10} parent=5 // pred_check
      %p672 = pneg %p671
    $region38: #{unet_forward.10} parent=5 // pred_check_branch
      %674 = sbr.rel (%p672) target = $region40
    $region39: #{unet_forward.10} parent=5 // pred_region
      %s675 = ssub.s32 %s9, 2
      // Predicated region
      $region41: #{unet_forward.10} parent=39 // pred_check
        %p676 = pneg %p106
      $region42: #{unet_forward.10} parent=39 // pred_check_branch
        %678 = sbr.rel (%p676) target = $region44
      $region43: #{unet_forward.10} parent=39 // pred_region
        %s679 = smul.u32 32, %s15
        %p680 = scmp.lt.s32.totalorder %s679, 63
        %s681 = scalar_select %p680, %s679, 63
        %s682 = smul.addr %s681, 8
        %s683 = scalar_lea.vmem %s3, %s682
      $region44: #{unet_forward.10} parent=39 // pred_fallthru
        _
    $region40: #{unet_forward.10} parent=5 // pred_fallthru
      _
  $region6: #{unet_forward.10} parent=0 // loop_footer
    %s13 = sadd.s32 1, %s9
  $region7: #{unet_forward.10} parent=0 // loop_footer_branch
    %8 = sbr.rel target = $region3
  $region8: #{unet_forward.10} parent=0 // loop_exit
    _

// kernel: unet_forward.11
$region0: #{unet_forward.11}
  #allocation0 [shape = 'u32[]', space=smem, size = 0x4, offset = 0x4, fixed_abs, tag = 'smem constant byte address 0x4 - core index']
  #allocation1 [shape = 'u32[144,128]{1,0:T(1,128)}', space=vmem, size = 0x12000, scoped, tag = 'internal scratch']
  %s0 = inlined_call_operand.vmem [shape: bf16[128,45], index: 0, kind: input, shape index: {}]
  %s1 = inlined_call_operand.vmem [shape: bf16[45,128], index: 1, kind: input, shape index: {}]
  %s2 = inlined_call_operand.vmem [shape: f32[1,128], index: 2, kind: input, shape index: {}]
  %s3 = inlined_call_operand.vmem [shape: f32[128,128], index: 3, kind: output, shape index: {}]
  %s4 = sld [smem:[#allocation0]]
  $region45: #{unet_forward.11} parent=0
    _
  %s6 = ssub.s32 1, %s4
  %s7 = scalar_select 0, %s6, %s4
  loop: start=0, step=1, limit=4
  $region2: #{unet_forward.11} parent=0 // loop_pre_header
    _
  $region3: #{unet_forward.11} parent=0 // loop_header
    %s9 = sphi 0, %s13
    %p10 = scmp.ge.s32.totalorder %s9, 4
    %s19 = sphi 0, %s21
    %s22 = sphi 0, %s19
    %s23 = sphi 0, %s22
    %s39 = sphi 0, %s23
    %s43 = sphi 0, %s43
    %s45 = sphi 0, %s43
    %s46 = sphi 0, %s45
    %s60 = sphi 0, %s46
    %s64 = sphi 0, %s64
    %s66 = sphi 0, %s64
    %s67 = sphi 0, %s66
    %s81 = sphi 0, %s67
    %s87 = sphi 0, %s89
    %s90 = sphi 0, %s87
    %s91 = sphi 0, %s90
    %s107 = sphi 0, %s91
  $region4: #{unet_forward.11} parent=0 // loop_header_branch
    %12 = sbr.rel (%p10) target = $region8
  $region5: #{unet_forward.11} parent=0 // loop_body
    %s14 = ssub.s32 %s9, 1
    %s15 = ssub.s32 %s9, 2
    %s16 = sadd.s32 %s9, 1
    %s17 = ssub.s32 %s9, %s16
    %p18 = scmp.eq.s32.totalorder %s17, 0
    %s20 = sadd.s32 %s19, 1
    %s21 = scalar_select %p18, %s19, %s20
    %p24 = pneg %p18
    %p25 = scmp.eq.s32.totalorder %s9, 1
    %p26 = por %p24, %p25
    %p27 = scmp.ne.s32.totalorder %s19, %s22
    %p28 = scmp.eq.s32.totalorder %s9, 0
    %p29 = por %p27, %p28
    %p30 = scmp.ne.s32.totalorder %s19, %s22
    %p31 = scmp.eq.s32.totalorder %s14, 1
    %p32 = por %p30, %p31
    %p33 = scmp.ne.s32.totalorder %s22, %s23
    %p34 = scmp.eq.s32.totalorder %s14, 0
    %p35 = por %p33, %p34
    %p36 = scmp.ne.s32.totalorder %s22, %s23
    %p37 = scmp.eq.s32.totalorder %s15, 1
    %p38 = por %p36, %p37
    %p40 = scmp.ne.s32.totalorder %s23, %s39
    %p41 = scmp.eq.s32.totalorder %s15, 0
    %p42 = por %p40, %p41
    %s44 = sadd.s32 %s43, 1
    %p47 = scmp.eq.s32.totalorder %s9, 1
    %p48 = scmp.ne.s32.totalorder %s43, %s45
    %p49 = scmp.eq.s32.totalorder %s9, 0
    %p50 = por %p48, %p49
    %p51 = scmp.ne.s32.totalorder %s43, %s45
    %p52 = scmp.eq.s32.totalorder %s14, 1
    %p53 = por %p51, %p52
    %p54 = scmp.ne.s32.totalorder %s45, %s46
    %p55 = scmp.eq.s32.totalorder %s14, 0
    %p56 = por %p54, %p55
    %p57 = scmp.ne.s32.totalorder %s45, %s46
    %p58 = scmp.eq.s32.totalorder %s15, 1
    %p59 = por %p57, %p58
    %p61 = scmp.ne.s32.totalorder %s46, %s60
    %p62 = scmp.eq.s32.totalorder %s15, 0
    %p63 = por %p61, %p62
    %s65 = sadd.s32 %s64, 1
    %p68 = scmp.eq.s32.totalorder %s9, 1
    %p69 = scmp.ne.s32.totalorder %s64, %s66
    %p70 = scmp.eq.s32.totalorder %s9, 0
    %p71 = por %p69, %p70
    %p72 = scmp.ne.s32.totalorder %s64, %s66
    %p73 = scmp.eq.s32.totalorder %s14, 1
    %p74 = por %p72, %p73
    %p75 = scmp.ne.s32.totalorder %s66, %s67
    %p76 = scmp.eq.s32.totalorder %s14, 0
    %p77 = por %p75, %p76
    %p78 = scmp.ne.s32.totalorder %s66, %s67
    %p79 = scmp.eq.s32.totalorder %s15, 1
    %p80 = por %p78, %p79
    %p82 = scmp.ne.s32.totalorder %s67, %s81
    %p83 = scmp.eq.s32.totalorder %s15, 0
    %p84 = por %p82, %p83
    %s85 = ssub.s32 %s9, %s16
    %p86 = scmp.eq.s32.totalorder %s85, 0
    %s88 = sadd.s32 %s87, 1
    %s89 = scalar_select %p86, %s87, %s88
    %p92 = pneg %p86
    %p93 = scmp.eq.s32.totalorder %s9, 1
    %p94 = por %p92, %p93
    %p95 = scmp.ne.s32.totalorder %s87, %s90
    %p96 = scmp.eq.s32.totalorder %s9, 0
    %p97 = por %p95, %p96
    %p98 = scmp.ne.s32.totalorder %s87, %s90
    %p99 = scmp.eq.s32.totalorder %s14, 1
    %p100 = por %p98, %p99
    %p101 = scmp.ne.s32.totalorder %s90, %s91
    %p102 = scmp.eq.s32.totalorder %s14, 0
    %p103 = por %p101, %p102
    %p104 = scmp.ne.s32.totalorder %s90, %s91
    %p105 = scmp.eq.s32.totalorder %s15, 1
    %p106 = por %p104, %p105
    %p108 = scmp.ne.s32.totalorder %s91, %s107
    %p109 = scmp.eq.s32.totalorder %s15, 0
    %p110 = por %p108, %p109
    %p111 = scmp.le.s32.totalorder 1, %s9
    %p112 = scmp.lt.s32.totalorder %s9, 3
    %p113 = pnand %p111, %p112
    %p114 = pneg %p113
    // Predicated region
    $region9: #{unet_forward.11} parent=5 // pred_check
      _
    $region10: #{unet_forward.11} parent=5 // pred_check_branch
      %116 = sbr.rel (%p113) target = $region12
    $region11: #{unet_forward.11} parent=5 // pred_region
      %s117 = ssub.s32 %s9, 1
      // Predicated region
      $region13: #{unet_forward.11} parent=11 // pred_check
        %p118 = pneg %p56
      $region14: #{unet_forward.11} parent=11 // pred_check_branch
        %120 = sbr.rel (%p118) target = $region16
      $region15: #{unet_forward.11} parent=11 // pred_region
        _
      $region16: #{unet_forward.11} parent=11 // pred_fallthru
        _
      // Predicated region
      $region17: #{unet_forward.11} parent=11 // pred_check
        %p121 = pneg %p77
      $region18: #{unet_forward.11} parent=11 // pred_check_branch
        %123 = sbr.rel (%p121) target = $region20
      $region19: #{unet_forward.11} parent=11 // pred_region
        _
      $region20: #{unet_forward.11} parent=11 // pred_fallthru
        _
    $region12: #{unet_forward.11} parent=5 // pred_fallthru
      _
    %p124 = scmp.lt.s32.totalorder %s9, 2
    // Predicated region
    $region21: #{unet_forward.11} parent=5 // pred_check
      %p125 = pneg %p124
    $region22: #{unet_forward.11} parent=5 // pred_check_branch
      %127 = sbr.rel (%p125) target = $region24
    $region23: #{unet_forward.11} parent=5 // pred_region
      // Predicated region
      $region25: #{unet_forward.11} parent=23 // pred_check
        %p128 = pneg %p29
      $region26: #{unet_forward.11} parent=23 // pred_check_branch
        %130 = sbr.rel (%p128) target = $region28
      $region27: #{unet_forward.11} parent=23 // pred_region
        %s131 = smul.u32 8, %s9
        %p132 = scmp.lt.s32.totalorder %s131, 15
        %s133 = scalar_select %p132, %s131, 15
        %s134 = smul.addr %s133, 4
        %s135 = scalar_lea.vmem %s0, %s134
        %s136 = smul.u32 8, %s9
      $region28: #{unet_forward.11} parent=23 // pred_fallthru
        _
    $region24: #{unet_forward.11} parent=5 // pred_fallthru
      _
    %p137 = scmp.le.s32.totalorder 1, %s9
    %p138 = scmp.lt.s32.totalorder %s9, 3
    %p139 = pnand %p137, %p138
    %p140 = pneg %p139
    // Predicated region
    $region29: #{unet_forward.11} parent=5 // pred_check
      _
    $region30: #{unet_forward.11} parent=5 // pred_check_branch
      %142 = sbr.rel (%p139) target = $region32
    $region31: #{unet_forward.11} parent=5 // pred_region
      %s143 = ssub.s32 %s9, 1
      %s144 = smul.u32 8, %s14
      %p145 = scmp.lt.s32.totalorder %s144, 15
      %s146 = scalar_select %p145, %s144, 15
      %s147 = smul.addr %s146, 4
      %s148 = scalar_lea.vmem %s0, %s147
      %p149 = pneg %p35
      %p150 = pneg %p32
      %p151 = pneg %p56
      %p152 = pneg %p53
      %p153 = pneg %p77
      %p154 = pneg %p74
      %p155 = pneg %p103
      %p156 = pneg %p100
      %s157 = smul.u32 8, %s14
      %p158 = scmp.lt.s32.totalorder %s157, 15
      %s159 = scalar_select %p158, %s157, 15
      %s160 = smul.addr %s159, 8
      %s161 = scalar_lea.vmem %s3, %s160
      %s162 = smul.u32 8, %s14
      %p163 = scmp.lt.s32.totalorder %s162, 15
      %s164 = scalar_select %p163, %s162, 15
      %s165 = smul.addr %s164, 4
      %s166 = scalar_lea.vmem %s0, %s165
      %s167 = smul.u32 8, %s14
      %s168 = smul.u32 8, %s14
      %p169 = scmp.lt.s32.totalorder %s168, 15
      %s170 = scalar_select %p169, %s168, 15
      %s171 = smul.addr %s170, 8
      %s172 = scalar_lea.vmem %s3, %s171
      %s173 = smul.u32 8, %s14
      %v175 = vld [vmem:[%s166] sm:$0xf]
      %v176 = vld [vmem:[%s166 + $0x4] sm:$0xf]
      %v177 = vld [vmem:[%s166 + $0x8] sm:$0xf]
      %v178 = vld [vmem:[%s166 + $0xc] sm:$0xf]
      %v179 = vld [vmem:[%s166 + $0x10] sm:$0xf]
      %v180 = vld [vmem:[%s166 + $0x14] sm:$0xf]
      %v181 = vld [vmem:[%s166 + $0x18] sm:$0xf]
      %v182 = vld [vmem:[%s166 + $0x1c] sm:$0xf]
      %v183 = vld [vmem:[%s1] sm:$0xf]
      %v184 = vld [vmem:[%s1 + $0x4] sm:$0xf]
      %v185 = vld [vmem:[%s1 + $0x8] sm:$0xf]
      %v186 = vld [vmem:[%s1 + $0xc] sm:$0xf]
      %v187 = vld [vmem:[%s1 + $0x10] sm:$0xf]
      %v188 = vld [vmem:[%s1 + $0x14] sm:$0x7]
      %v189 = vld [vmem:[%s2] sm:$0x1]
      %v191 = vlaneseq
      %v192 = vshrl.u32 %v191, 7
      %v193 = vsub.s32 0, %v192
      %v194 = vrot.slane %v189, %v193
      %v204 = vunpack.c.l.b16 %v175
      %v205 = vunpack.c.l.b16 %v176
      %v206 = vunpack.c.l.b16 %v177
      %v207 = vunpack.c.l.b16 %v178
      %v208 = vunpack.c.l.b16 %v179
      %v209 = vunpack.c.l.b16 %v180
      %v210 = vunpack.c.l.b16 %v181
      %v211 = vunpack.c.l.b16 %v182
      %v212 = vpack.c.b16 %v205, %v204
      %v213 = vpack.c.b16 %v207, %v206
      %v214 = vpack.c.b16 %v209, %v208
      %v215 = vpack.c.b16 %v211, %v210
      %v222 = vunpack.c.l.b16 %v183
      %v223 = vunpack.c.l.b16 %v184
      %v224 = vunpack.c.l.b16 %v185
      %v225 = vunpack.c.l.b16 %v186
      %v226 = vunpack.c.l.b16 %v187
      %v227 = vunpack.c.l.b16 %v188
      %v228 = vpack.c.b16 %v223, %v222
      %v229 = vpack.c.b16 %v225, %v224
      %v230 = vpack.c.b16 %v227, %v226
      %vm233 = vcmask 367616
      %v235 = vsel %vm233, %v212, 0
      %v238 = vsel %vm233, %v213, 0
      %v241 = vsel %vm233, %v214, 0
      %v244 = vsel %vm233, %v215, 0
      %vm246 = vcmask 1045504
      %vm247 = vcmask 1046528
      %v248 = vsel %vm246, 4294967295, 65535
      %v249 = vsel %vm247, %v248, 0
      %v251 = vand.u32 %v230, %v249
      %253 = vmatprep.subr.bf16.mxu0 0
      %254 = vmatpush1.bf16.msra.mxu0 %v228
      %255 = vmatprep.subr.bf16.mxu0 0
      %256 = vmatpush1.bf16.msra.mxu0 %v229
      %257 = vmatprep.subr.bf16.mxu0 0
      %258 = vmatpush1.bf16.msra.mxu0 %v251
      %259 = vmatprep.subr.bf16.mxu0 0
      %260 = vmatpush1.bf16.msra.mxu0 0
      %261 = vmatprep.subr.bf16.mxu0 0
      %262 = vmatpush1.bf16.msra.mxu0 0
      %263 = vmatprep.subr.bf16.mxu0 0
      %264 = vmatpush1.bf16.msra.mxu0 0
      %265 = vmatprep.subr.bf16.mxu0 0
      %266 = vmatpush1.bf16.msra.mxu0 0
      %267 = vmatprep.subr.bf16.mxu0 0
      %268 = vmatpush1.bf16.msra.mxu0 0
      %269 = vmatprep.subr.bf16.mxu0 0
      %270 = vmatpush1.bf16.msra.mxu0 0
      %271 = vmatprep.subr.bf16.mxu0 0
      %272 = vmatpush1.bf16.msra.mxu0 0
      %273 = vmatprep.subr.bf16.mxu0 0
      %274 = vmatpush1.bf16.msra.mxu0 0
      %275 = vmatprep.subr.bf16.mxu0 0
      %276 = vmatpush1.bf16.msra.mxu0 0
      %277 = vmatprep.subr.bf16.mxu0 0
      %278 = vmatpush1.bf16.msra.mxu0 0
      %279 = vmatprep.subr.bf16.mxu0 0
      %280 = vmatpush1.bf16.msra.mxu0 0
      %281 = vmatprep.subr.bf16.mxu0 0
      %282 = vmatpush1.bf16.msra.mxu0 0
      %283 = vmatprep.subr.bf16.mxu0 0
      %284 = vmatpush1.bf16.msra.mxu0 0
      %285 = vmatprep.mubr.bf16.mxu0 0
      %286 = vmatmul.mubr.bf16.gmra.mrb[0].mxu0 %v235
      %v287 = vpop.f32.mrb[0].mxu0
      %v288 = vadd.f32 %v194, %v287
      %v289 = vpop.f32.mrb[0].mxu0
      %v290 = vpop.f32.mrb[0].mxu0
      %v291 = vadd.f32 %v194, %v290
      %v292 = vpop.f32.mrb[0].mxu0
      %293 = vmatprep.mubr.bf16.mxu0 0
      %294 = vmatmul.mubr.bf16.gmra.mrb[0].mxu0 %v238
      %v295 = vpop.f32.mrb[0].mxu0
      %v296 = vadd.f32 %v194, %v295
      %v297 = vpop.f32.mrb[0].mxu0
      %v298 = vpop.f32.mrb[0].mxu0
      %v299 = vadd.f32 %v194, %v298
      %v300 = vpop.f32.mrb[0].mxu0
      %301 = vmatprep.mubr.bf16.mxu0 0
      %302 = vmatmul.mubr.bf16.gmra.mrb[0].mxu0 %v241
      %v303 = vpop.f32.mrb[0].mxu0
      %v304 = vadd.f32 %v194, %v303
      %v305 = vpop.f32.mrb[0].mxu0
      %v306 = vpop.f32.mrb[0].mxu0
      %v307 = vadd.f32 %v194, %v306
      %v308 = vpop.f32.mrb[0].mxu0
      %309 = vmatprep.mubr.bf16.mxu0 0
      %310 = vmatmul.mubr.bf16.gmra.mrb[0].mxu0 %v244
      %v311 = vpop.f32.mrb[0].mxu0
      %v312 = vadd.f32 %v194, %v311
      %v313 = vpop.f32.mrb[0].mxu0
      %v314 = vpop.f32.mrb[0].mxu0
      %v315 = vadd.f32 %v194, %v314
      %v316 = vpop.f32.mrb[0].mxu0
      %317 = vdwg.mxu0
      %vm318 = vcmp.gt.f32.partialorder %v288, 0.0
      %vm319 = vcmp.gt.f32.partialorder %v291, 0.0
      %vm320 = vcmp.gt.f32.partialorder %v296, 0.0
      %vm321 = vcmp.gt.f32.partialorder %v299, 0.0
      %vm322 = vcmp.gt.f32.partialorder %v304, 0.0
      %vm323 = vcmp.gt.f32.partialorder %v307, 0.0
      %vm324 = vcmp.gt.f32.partialorder %v312, 0.0
      %vm325 = vcmp.gt.f32.partialorder %v315, 0.0
      %v326 = vmul.f32 %v288, 0.01
      %v327 = vmul.f32 %v291, 0.01
      %v328 = vmul.f32 %v296, 0.01
      %v329 = vmul.f32 %v299, 0.01
      %v330 = vmul.f32 %v304, 0.01
      %v331 = vmul.f32 %v307, 0.01
      %v332 = vmul.f32 %v312, 0.01
      %v333 = vmul.f32 %v315, 0.01
      %v334 = vsel %vm318, %v288, %v326
      %v335 = vsel %vm319, %v291, %v327
      %v336 = vsel %vm320, %v296, %v328
      %v337 = vsel %vm321, %v299, %v329
      %v338 = vsel %vm322, %v304, %v330
      %v339 = vsel %vm323, %v307, %v331
      %v340 = vsel %vm324, %v312, %v332
      %v341 = vsel %vm325, %v315, %v333
      %342 = vst [vmem:[%s172] sm:$0xff] %v334
      %343 = vst [vmem:[%s172 + $0x8] sm:$0xff] %v335
      %344 = vst [vmem:[%s172 + $0x10] sm:$0xff] %v336
      %345 = vst [vmem:[%s172 + $0x18] sm:$0xff] %v337
      %346 = vst [vmem:[%s172 + $0x20] sm:$0xff] %v338
      %347 = vst [vmem:[%s172 + $0x28] sm:$0xff] %v339
      %348 = vst [vmem:[%s172 + $0x30] sm:$0xff] %v340
      %349 = vst [vmem:[%s172 + $0x38] sm:$0xff] %v341
      %s350 = smul.u32 8, %s14
      %p351 = scmp.lt.s32.totalorder %s350, 15
      %s352 = scalar_select %p351, %s350, 15
      %s353 = smul.addr %s352, 8
      %s354 = scalar_lea.vmem %s3, %s353
      // Predicated region
      $region33: #{unet_forward.11} parent=31 // pred_check
        %p355 = pneg %p100
      $region34: #{unet_forward.11} parent=31 // pred_check_branch
        %357 = sbr.rel (%p355) target = $region36
      $region35: #{unet_forward.11} parent=31 // pred_region
        %s358 = smul.u32 8, %s14
      $region36: #{unet_forward.11} parent=31 // pred_fallthru
        _
    $region32: #{unet_forward.11} parent=5 // pred_fallthru
      _
    %p359 = scmp.le.s32.totalorder 2, %s9
    // Predicated region
    $region37: #{unet_forward.11} parent=5 // pred_check
      %p360 = pneg %p359
    $region38: #{unet_forward.11} parent=5 // pred_check_branch
      %362 = sbr.rel (%p360) target = $region40
    $region39: #{unet_forward.11} parent=5 // pred_region
      %s363 = ssub.s32 %s9, 2
      // Predicated region
      $region41: #{unet_forward.11} parent=39 // pred_check
        %p364 = pneg %p106
      $region42: #{unet_forward.11} parent=39 // pred_check_branch
        %366 = sbr.rel (%p364) target = $region44
      $region43: #{unet_forward.11} parent=39 // pred_region
        %s367 = smul.u32 8, %s15
        %p368 = scmp.lt.s32.totalorder %s367, 15
        %s369 = scalar_select %p368, %s367, 15
        %s370 = smul.addr %s369, 8
        %s371 = scalar_lea.vmem %s3, %s370
      $region44: #{unet_forward.11} parent=39 // pred_fallthru
        _
    $region40: #{unet_forward.11} parent=5 // pred_fallthru
      _
  $region6: #{unet_forward.11} parent=0 // loop_footer
    %s13 = sadd.s32 1, %s9
  $region7: #{unet_forward.11} parent=0 // loop_footer_branch
    %8 = sbr.rel target = $region3
  $region8: #{unet_forward.11} parent=0 // loop_exit
    _

// kernel: unet_forward.13
$region0: #{unet_forward.13}
  #allocation0 [shape = 'u32[]', space=smem, size = 0x4, offset = 0x4, fixed_abs, tag = 'smem constant byte address 0x4 - core index']
  #allocation1 [shape = 'u32[144,128]{1,0:T(1,128)}', space=vmem, size = 0x12000, scoped, tag = 'internal scratch']
  %s0 = inlined_call_operand.vmem [shape: bf16[128,180], index: 0, kind: input, shape index: {}]
  %s1 = inlined_call_operand.vmem [shape: bf16[180,128], index: 1, kind: input, shape index: {}]
  %s2 = inlined_call_operand.vmem [shape: f32[1,128], index: 2, kind: input, shape index: {}]
  %s3 = inlined_call_operand.vmem [shape: f32[128,128], index: 3, kind: output, shape index: {}]
  %s4 = sld [smem:[#allocation0]]
  $region45: #{unet_forward.13} parent=0
    _
  %s6 = ssub.s32 1, %s4
  %s7 = scalar_select 0, %s6, %s4
  loop: start=0, step=1, limit=4
  $region2: #{unet_forward.13} parent=0 // loop_pre_header
    _
  $region3: #{unet_forward.13} parent=0 // loop_header
    %s9 = sphi 0, %s13
    %p10 = scmp.ge.s32.totalorder %s9, 4
    %s19 = sphi 0, %s21
    %s22 = sphi 0, %s19
    %s23 = sphi 0, %s22
    %s39 = sphi 0, %s23
    %s43 = sphi 0, %s43
    %s45 = sphi 0, %s43
    %s46 = sphi 0, %s45
    %s60 = sphi 0, %s46
    %s64 = sphi 0, %s64
    %s66 = sphi 0, %s64
    %s67 = sphi 0, %s66
    %s81 = sphi 0, %s67
    %s87 = sphi 0, %s89
    %s90 = sphi 0, %s87
    %s91 = sphi 0, %s90
    %s107 = sphi 0, %s91
  $region4: #{unet_forward.13} parent=0 // loop_header_branch
    %12 = sbr.rel (%p10) target = $region8
  $region5: #{unet_forward.13} parent=0 // loop_body
    %s14 = ssub.s32 %s9, 1
    %s15 = ssub.s32 %s9, 2
    %s16 = sadd.s32 %s9, 1
    %s17 = ssub.s32 %s9, %s16
    %p18 = scmp.eq.s32.totalorder %s17, 0
    %s20 = sadd.s32 %s19, 1
    %s21 = scalar_select %p18, %s19, %s20
    %p24 = pneg %p18
    %p25 = scmp.eq.s32.totalorder %s9, 1
    %p26 = por %p24, %p25
    %p27 = scmp.ne.s32.totalorder %s19, %s22
    %p28 = scmp.eq.s32.totalorder %s9, 0
    %p29 = por %p27, %p28
    %p30 = scmp.ne.s32.totalorder %s19, %s22
    %p31 = scmp.eq.s32.totalorder %s14, 1
    %p32 = por %p30, %p31
    %p33 = scmp.ne.s32.totalorder %s22, %s23
    %p34 = scmp.eq.s32.totalorder %s14, 0
    %p35 = por %p33, %p34
    %p36 = scmp.ne.s32.totalorder %s22, %s23
    %p37 = scmp.eq.s32.totalorder %s15, 1
    %p38 = por %p36, %p37
    %p40 = scmp.ne.s32.totalorder %s23, %s39
    %p41 = scmp.eq.s32.totalorder %s15, 0
    %p42 = por %p40, %p41
    %s44 = sadd.s32 %s43, 1
    %p47 = scmp.eq.s32.totalorder %s9, 1
    %p48 = scmp.ne.s32.totalorder %s43, %s45
    %p49 = scmp.eq.s32.totalorder %s9, 0
    %p50 = por %p48, %p49
    %p51 = scmp.ne.s32.totalorder %s43, %s45
    %p52 = scmp.eq.s32.totalorder %s14, 1
    %p53 = por %p51, %p52
    %p54 = scmp.ne.s32.totalorder %s45, %s46
    %p55 = scmp.eq.s32.totalorder %s14, 0
    %p56 = por %p54, %p55
    %p57 = scmp.ne.s32.totalorder %s45, %s46
    %p58 = scmp.eq.s32.totalorder %s15, 1
    %p59 = por %p57, %p58
    %p61 = scmp.ne.s32.totalorder %s46, %s60
    %p62 = scmp.eq.s32.totalorder %s15, 0
    %p63 = por %p61, %p62
    %s65 = sadd.s32 %s64, 1
    %p68 = scmp.eq.s32.totalorder %s9, 1
    %p69 = scmp.ne.s32.totalorder %s64, %s66
    %p70 = scmp.eq.s32.totalorder %s9, 0
    %p71 = por %p69, %p70
    %p72 = scmp.ne.s32.totalorder %s64, %s66
    %p73 = scmp.eq.s32.totalorder %s14, 1
    %p74 = por %p72, %p73
    %p75 = scmp.ne.s32.totalorder %s66, %s67
    %p76 = scmp.eq.s32.totalorder %s14, 0
    %p77 = por %p75, %p76
    %p78 = scmp.ne.s32.totalorder %s66, %s67
    %p79 = scmp.eq.s32.totalorder %s15, 1
    %p80 = por %p78, %p79
    %p82 = scmp.ne.s32.totalorder %s67, %s81
    %p83 = scmp.eq.s32.totalorder %s15, 0
    %p84 = por %p82, %p83
    %s85 = ssub.s32 %s9, %s16
    %p86 = scmp.eq.s32.totalorder %s85, 0
    %s88 = sadd.s32 %s87, 1
    %s89 = scalar_select %p86, %s87, %s88
    %p92 = pneg %p86
    %p93 = scmp.eq.s32.totalorder %s9, 1
    %p94 = por %p92, %p93
    %p95 = scmp.ne.s32.totalorder %s87, %s90
    %p96 = scmp.eq.s32.totalorder %s9, 0
    %p97 = por %p95, %p96
    %p98 = scmp.ne.s32.totalorder %s87, %s90
    %p99 = scmp.eq.s32.totalorder %s14, 1
    %p100 = por %p98, %p99
    %p101 = scmp.ne.s32.totalorder %s90, %s91
    %p102 = scmp.eq.s32.totalorder %s14, 0
    %p103 = por %p101, %p102
    %p104 = scmp.ne.s32.totalorder %s90, %s91
    %p105 = scmp.eq.s32.totalorder %s15, 1
    %p106 = por %p104, %p105
    %p108 = scmp.ne.s32.totalorder %s91, %s107
    %p109 = scmp.eq.s32.totalorder %s15, 0
    %p110 = por %p108, %p109
    %p111 = scmp.le.s32.totalorder 1, %s9
    %p112 = scmp.lt.s32.totalorder %s9, 3
    %p113 = pnand %p111, %p112
    %p114 = pneg %p113
    // Predicated region
    $region9: #{unet_forward.13} parent=5 // pred_check
      _
    $region10: #{unet_forward.13} parent=5 // pred_check_branch
      %116 = sbr.rel (%p113) target = $region12
    $region11: #{unet_forward.13} parent=5 // pred_region
      %s117 = ssub.s32 %s9, 1
      // Predicated region
      $region13: #{unet_forward.13} parent=11 // pred_check
        %p118 = pneg %p56
      $region14: #{unet_forward.13} parent=11 // pred_check_branch
        %120 = sbr.rel (%p118) target = $region16
      $region15: #{unet_forward.13} parent=11 // pred_region
        _
      $region16: #{unet_forward.13} parent=11 // pred_fallthru
        _
      // Predicated region
      $region17: #{unet_forward.13} parent=11 // pred_check
        %p121 = pneg %p77
      $region18: #{unet_forward.13} parent=11 // pred_check_branch
        %123 = sbr.rel (%p121) target = $region20
      $region19: #{unet_forward.13} parent=11 // pred_region
        _
      $region20: #{unet_forward.13} parent=11 // pred_fallthru
        _
    $region12: #{unet_forward.13} parent=5 // pred_fallthru
      _
    %p124 = scmp.lt.s32.totalorder %s9, 2
    // Predicated region
    $region21: #{unet_forward.13} parent=5 // pred_check
      %p125 = pneg %p124
    $region22: #{unet_forward.13} parent=5 // pred_check_branch
      %127 = sbr.rel (%p125) target = $region24
    $region23: #{unet_forward.13} parent=5 // pred_region
      // Predicated region
      $region25: #{unet_forward.13} parent=23 // pred_check
        %p128 = pneg %p29
      $region26: #{unet_forward.13} parent=23 // pred_check_branch
        %130 = sbr.rel (%p128) target = $region28
      $region27: #{unet_forward.13} parent=23 // pred_region
        %s131 = smul.u32 8, %s9
        %p132 = scmp.lt.s32.totalorder %s131, 15
        %s133 = scalar_select %p132, %s131, 15
        %s134 = smul.addr %s133, 2
        %s135 = smul.addr %s134, 4
        %s136 = scalar_lea.vmem %s0, %s135
        %s137 = smul.u32 8, %s9
      $region28: #{unet_forward.13} parent=23 // pred_fallthru
        _
    $region24: #{unet_forward.13} parent=5 // pred_fallthru
      _
    %p138 = scmp.le.s32.totalorder 1, %s9
    %p139 = scmp.lt.s32.totalorder %s9, 3
    %p140 = pnand %p138, %p139
    %p141 = pneg %p140
    // Predicated region
    $region29: #{unet_forward.13} parent=5 // pred_check
      _
    $region30: #{unet_forward.13} parent=5 // pred_check_branch
      %143 = sbr.rel (%p140) target = $region32
    $region31: #{unet_forward.13} parent=5 // pred_region
      %s144 = ssub.s32 %s9, 1
      %s145 = smul.u32 8, %s14
      %p146 = scmp.lt.s32.totalorder %s145, 15
      %s147 = scalar_select %p146, %s145, 15
      %s148 = smul.addr %s147, 2
      %s149 = smul.addr %s148, 4
      %s150 = scalar_lea.vmem %s0, %s149
      %p151 = pneg %p35
      %p152 = pneg %p32
      %p153 = pneg %p56
      %p154 = pneg %p53
      %p155 = pneg %p77
      %p156 = pneg %p74
      %p157 = pneg %p103
      %p158 = pneg %p100
      %s159 = smul.u32 8, %s14
      %p160 = scmp.lt.s32.totalorder %s159, 15
      %s161 = scalar_select %p160, %s159, 15
      %s162 = smul.addr %s161, 8
      %s163 = scalar_lea.vmem %s3, %s162
      %s164 = smul.u32 8, %s14
      %p165 = scmp.lt.s32.totalorder %s164, 15
      %s166 = scalar_select %p165, %s164, 15
      %s167 = smul.addr %s166, 2
      %s168 = smul.addr %s167, 4
      %s169 = scalar_lea.vmem %s0, %s168
      %s170 = smul.u32 8, %s14
      %s171 = smul.u32 8, %s14
      %p172 = scmp.lt.s32.totalorder %s171, 15
      %s173 = scalar_select %p172, %s171, 15
      %s174 = smul.addr %s173, 8
      %s175 = scalar_lea.vmem %s3, %s174
      %s176 = smul.u32 8, %s14
      %v178 = vld [vmem:[%s169] sm:$0xff]
      %v179 = vld [vmem:[%s169 + $0x8] sm:$0xff]
      %v180 = vld [vmem:[%s169 + $0x10] sm:$0xff]
      %v181 = vld [vmem:[%s169 + $0x18] sm:$0xff]
      %v182 = vld [vmem:[%s169 + $0x20] sm:$0xff]
      %v183 = vld [vmem:[%s169 + $0x28] sm:$0xff]
      %v184 = vld [vmem:[%s169 + $0x30] sm:$0xff]
      %v185 = vld [vmem:[%s169 + $0x38] sm:$0xff]
      %v186 = vld [vmem:[%s1] sm:$0xf]
      %v187 = vld [vmem:[%s1 + $0x4] sm:$0xf]
      %v188 = vld [vmem:[%s1 + $0x8] sm:$0xf]
      %v189 = vld [vmem:[%s1 + $0xc] sm:$0xf]
      %v190 = vld [vmem:[%s1 + $0x10] sm:$0xf]
      %v191 = vld [vmem:[%s1 + $0x14] sm:$0xf]
      %v192 = vld [vmem:[%s1 + $0x18] sm:$0xf]
      %v193 = vld [vmem:[%s1 + $0x1c] sm:$0xf]
      %v194 = vld [vmem:[%s1 + $0x20] sm:$0xf]
      %v195 = vld [vmem:[%s1 + $0x24] sm:$0xf]
      %v196 = vld [vmem:[%s1 + $0x28] sm:$0xf]
      %v197 = vld [vmem:[%s1 + $0x2c] sm:$0xf]
      %v198 = vld [vmem:[%s1 + $0x30] sm:$0xf]
      %v199 = vld [vmem:[%s1 + $0x34] sm:$0xf]
      %v200 = vld [vmem:[%s1 + $0x38] sm:$0xf]
      %v201 = vld [vmem:[%s1 + $0x3c] sm:$0xf]
      %v202 = vld [vmem:[%s1 + $0x40] sm:$0xf]
      %v203 = vld [vmem:[%s1 + $0x44] sm:$0xf]
      %v204 = vld [vmem:[%s1 + $0x48] sm:$0xf]
      %v205 = vld [vmem:[%s1 + $0x4c] sm:$0xf]
      %v206 = vld [vmem:[%s1 + $0x50] sm:$0xf]
      %v207 = vld [vmem:[%s1 + $0x54] sm:$0xf]
      %v208 = vld [vmem:[%s1 + $0x58] sm:$0x3]
      %v209 = vld [vmem:[%s2] sm:$0x1]
      %v211 = vlaneseq
      %v212 = vshrl.u32 %v211, 7
      %v213 = vsub.s32 0, %v212
      %v214 = vrot.slane %v209, %v213
      %v224 = vunpack.c.l.b16 %v178
      %v225 = vunpack.c.h.b16 %v178
      %v226 = vunpack.c.l.b16 %v179
      %v227 = vunpack.c.h.b16 %v179
      %v228 = vunpack.c.l.b16 %v180
      %v229 = vunpack.c.h.b16 %v180
      %v230 = vunpack.c.l.b16 %v181
      %v231 = vunpack.c.h.b16 %v181
      %v232 = vunpack.c.l.b16 %v182
      %v233 = vunpack.c.h.b16 %v182
      %v234 = vunpack.c.l.b16 %v183
      %v235 = vunpack.c.h.b16 %v183
      %v236 = vunpack.c.l.b16 %v184
      %v237 = vunpack.c.h.b16 %v184
      %v238 = vunpack.c.l.b16 %v185
      %v239 = vunpack.c.h.b16 %v185
      %v240 = vpack.c.b16 %v226, %v224
      %v241 = vpack.c.b16 %v227, %v225
      %v242 = vpack.c.b16 %v230, %v228
      %v243 = vpack.c.b16 %v231, %v229
      %v244 = vpack.c.b16 %v234, %v232
      %v245 = vpack.c.b16 %v235, %v233
      %v246 = vpack.c.b16 %v238, %v236
      %v247 = vpack.c.b16 %v239, %v237
      %v275 = vunpack.c.l.b16 %v186
      %v276 = vunpack.c.l.b16 %v187
      %v277 = vunpack.c.l.b16 %v188
      %v278 = vunpack.c.l.b16 %v189
      %v279 = vunpack.c.l.b16 %v190
      %v280 = vunpack.c.l.b16 %v191
      %v281 = vunpack.c.l.b16 %v192
      %v282 = vunpack.c.l.b16 %v193
      %v283 = vunpack.c.l.b16 %v194
      %v284 = vunpack.c.l.b16 %v195
      %v285 = vunpack.c.l.b16 %v196
      %v286 = vunpack.c.l.b16 %v197
      %v287 = vunpack.c.l.b16 %v198
      %v288 = vunpack.c.l.b16 %v199
      %v289 = vunpack.c.l.b16 %v200
      %v290 = vunpack.c.l.b16 %v201
      %v291 = vunpack.c.l.b16 %v202
      %v292 = vunpack.c.l.b16 %v203
      %v293 = vunpack.c.l.b16 %v204
      %v294 = vunpack.c.l.b16 %v205
      %v295 = vunpack.c.l.b16 %v206
      %v296 = vunpack.c.l.b16 %v207
      %v297 = vunpack.c.l.b16 %v208
      %v298 = vpack.c.b16 %v276, %v275
      %v299 = vpack.c.b16 %v278, %v277
      %v300 = vpack.c.b16 %v280, %v279
      %v301 = vpack.c.b16 %v282, %v281
      %v302 = vpack.c.b16 %v284, %v283
      %v303 = vpack.c.b16 %v286, %v285
      %v304 = vpack.c.b16 %v288, %v287
      %v305 = vpack.c.b16 %v290, %v289
      %v306 = vpack.c.b16 %v292, %v291
      %v307 = vpack.c.b16 %v294, %v293
      %v308 = vpack.c.b16 %v296, %v295
      %v309 = vpack.c.b16 %v297, %v297
      %vm321 = vcmask 424960
      %v323 = vsel %vm321, %v241, 0
      %v326 = vsel %vm321, %v243, 0
      %v329 = vsel %vm321, %v245, 0
      %v332 = vsel %vm321, %v247, 0
      %vm334 = vcmask 1041408
      %v336 = vsel %vm334, %v309, 0
      %338 = vmatprep.subr.bf16.mxu0 0
      %339 = vmatpush1.bf16.msra.mxu0 %v298
      %340 = vmatprep.subr.bf16.mxu0 0
      %341 = vmatpush1.bf16.msra.mxu0 %v299
      %342 = vmatprep.subr.bf16.mxu0 0
      %343 = vmatpush1.bf16.msra.mxu0 %v300
      %344 = vmatprep.subr.bf16.mxu0 0
      %345 = vmatpush1.bf16.msra.mxu0 %v301
      %346 = vmatprep.subr.bf16.mxu0 0
      %347 = vmatpush1.bf16.msra.mxu0 %v302
      %348 = vmatprep.subr.bf16.mxu0 0
      %349 = vmatpush1.bf16.msra.mxu0 %v303
      %350 = vmatprep.subr.bf16.mxu0 0
      %351 = vmatpush1.bf16.msra.mxu0 %v304
      %352 = vmatprep.subr.bf16.mxu0 0
      %353 = vmatpush1.bf16.msra.mxu0 %v305
      %354 = vmatprep.subr.bf16.mxu0 0
      %355 = vmatpush1.bf16.msra.mxu0 %v306
      %356 = vmatprep.subr.bf16.mxu0 0
      %357 = vmatpush1.bf16.msra.mxu0 %v307
      %358 = vmatprep.subr.bf16.mxu0 0
      %359 = vmatpush1.bf16.msra.mxu0 %v308
      %360 = vmatprep.subr.bf16.mxu0 0
      %361 = vmatpush1.bf16.msra.mxu0 %v336
      %362 = vmatprep.subr.bf16.mxu0 0
      %363 = vmatpush1.bf16.msra.mxu0 0
      %364 = vmatprep.subr.bf16.mxu0 0
      %365 = vmatpush1.bf16.msra.mxu0 0
      %366 = vmatprep.subr.bf16.mxu0 0
      %367 = vmatpush1.bf16.msra.mxu0 0
      %368 = vmatprep.subr.bf16.mxu0 0
      %369 = vmatpush1.bf16.msra.mxu0 0
      %370 = vmatprep.mubr.bf16.mxu0 %v323
      %371 = vmatmul.mubr.bf16.gmra.mrb[0].mxu0 %v240
      %v372 = vpop.f32.mrb[0].mxu0
      %v373 = vadd.f32 %v214, %v372
      %v374 = vpop.f32.mrb[0].mxu0
      %v375 = vpop.f32.mrb[0].mxu0
      %v376 = vadd.f32 %v214, %v375
      %v377 = vpop.f32.mrb[0].mxu0
      %378 = vmatprep.mubr.bf16.mxu0 %v326
      %379 = vmatmul.mubr.bf16.gmra.mrb[0].mxu0 %v242
      %v380 = vpop.f32.mrb[0].mxu0
      %v381 = vadd.f32 %v214, %v380
      %v382 = vpop.f32.mrb[0].mxu0
      %v383 = vpop.f32.mrb[0].mxu0
      %v384 = vadd.f32 %v214, %v383
      %v385 = vpop.f32.mrb[0].mxu0
      %386 = vmatprep.mubr.bf16.mxu0 %v329
      %387 = vmatmul.mubr.bf16.gmra.mrb[0].mxu0 %v244
      %v388 = vpop.f32.mrb[0].mxu0
      %v389 = vadd.f32 %v214, %v388
      %v390 = vpop.f32.mrb[0].mxu0
      %v391 = vpop.f32.mrb[0].mxu0
      %v392 = vadd.f32 %v214, %v391
      %v393 = vpop.f32.mrb[0].mxu0
      %394 = vmatprep.mubr.bf16.mxu0 %v332
      %395 = vmatmul.mubr.bf16.gmra.mrb[0].mxu0 %v246
      %v396 = vpop.f32.mrb[0].mxu0
      %v397 = vadd.f32 %v214, %v396
      %v398 = vpop.f32.mrb[0].mxu0
      %v399 = vpop.f32.mrb[0].mxu0
      %v400 = vadd.f32 %v214, %v399
      %v401 = vpop.f32.mrb[0].mxu0
      %402 = vdwg.mxu0
      %vm403 = vcmp.gt.f32.partialorder %v373, 0.0
      %vm404 = vcmp.gt.f32.partialorder %v376, 0.0
      %vm405 = vcmp.gt.f32.partialorder %v381, 0.0
      %vm406 = vcmp.gt.f32.partialorder %v384, 0.0
      %vm407 = vcmp.gt.f32.partialorder %v389, 0.0
      %vm408 = vcmp.gt.f32.partialorder %v392, 0.0
      %vm409 = vcmp.gt.f32.partialorder %v397, 0.0
      %vm410 = vcmp.gt.f32.partialorder %v400, 0.0
      %v411 = vmul.f32 %v373, 0.01
      %v412 = vmul.f32 %v376, 0.01
      %v413 = vmul.f32 %v381, 0.01
      %v414 = vmul.f32 %v384, 0.01
      %v415 = vmul.f32 %v389, 0.01
      %v416 = vmul.f32 %v392, 0.01
      %v417 = vmul.f32 %v397, 0.01
      %v418 = vmul.f32 %v400, 0.01
      %v419 = vsel %vm403, %v373, %v411
      %v420 = vsel %vm404, %v376, %v412
      %v421 = vsel %vm405, %v381, %v413
      %v422 = vsel %vm406, %v384, %v414
      %v423 = vsel %vm407, %v389, %v415
      %v424 = vsel %vm408, %v392, %v416
      %v425 = vsel %vm409, %v397, %v417
      %v426 = vsel %vm410, %v400, %v418
      %427 = vst [vmem:[%s175] sm:$0xff] %v419
      %428 = vst [vmem:[%s175 + $0x8] sm:$0xff] %v420
      %429 = vst [vmem:[%s175 + $0x10] sm:$0xff] %v421
      %430 = vst [vmem:[%s175 + $0x18] sm:$0xff] %v422
      %431 = vst [vmem:[%s175 + $0x20] sm:$0xff] %v423
      %432 = vst [vmem:[%s175 + $0x28] sm:$0xff] %v424
      %433 = vst [vmem:[%s175 + $0x30] sm:$0xff] %v425
      %434 = vst [vmem:[%s175 + $0x38] sm:$0xff] %v426
      %s435 = smul.u32 8, %s14
      %p436 = scmp.lt.s32.totalorder %s435, 15
      %s437 = scalar_select %p436, %s435, 15
      %s438 = smul.addr %s437, 8
      %s439 = scalar_lea.vmem %s3, %s438
      // Predicated region
      $region33: #{unet_forward.13} parent=31 // pred_check
        %p440 = pneg %p100
      $region34: #{unet_forward.13} parent=31 // pred_check_branch
        %442 = sbr.rel (%p440) target = $region36
      $region35: #{unet_forward.13} parent=31 // pred_region
        %s443 = smul.u32 8, %s14
      $region36: #{unet_forward.13} parent=31 // pred_fallthru
        _
    $region32: #{unet_forward.13} parent=5 // pred_fallthru
      _
    %p444 = scmp.le.s32.totalorder 2, %s9
    // Predicated region
    $region37: #{unet_forward.13} parent=5 // pred_check
      %p445 = pneg %p444
    $region38: #{unet_forward.13} parent=5 // pred_check_branch
      %447 = sbr.rel (%p445) target = $region40
    $region39: #{unet_forward.13} parent=5 // pred_region
      %s448 = ssub.s32 %s9, 2
      // Predicated region
      $region41: #{unet_forward.13} parent=39 // pred_check
        %p449 = pneg %p106
      $region42: #{unet_forward.13} parent=39 // pred_check_branch
        %451 = sbr.rel (%p449) target = $region44
      $region43: #{unet_forward.13} parent=39 // pred_region
        %s452 = smul.u32 8, %s15
        %p453 = scmp.lt.s32.totalorder %s452, 15
        %s454 = scalar_select %p453, %s452, 15
        %s455 = smul.addr %s454, 8
        %s456 = scalar_lea.vmem %s3, %s455
      $region44: #{unet_forward.13} parent=39 // pred_fallthru
        _
    $region40: #{unet_forward.13} parent=5 // pred_fallthru
      _
  $region6: #{unet_forward.13} parent=0 // loop_footer
    %s13 = sadd.s32 1, %s9
  $region7: #{unet_forward.13} parent=0 // loop_footer_branch
    %8 = sbr.rel target = $region3
  $region8: #{unet_forward.13} parent=0 // loop_exit
    _

// kernel: unet_forward.14
$region0: #{unet_forward.14}
  #allocation0 [shape = 'u32[]', space=smem, size = 0x4, offset = 0x4, fixed_abs, tag = 'smem constant byte address 0x4 - core index']
  #allocation1 [shape = 'u32[144,128]{1,0:T(1,128)}', space=vmem, size = 0x12000, scoped, tag = 'internal scratch']
  %s0 = inlined_call_operand.vmem [shape: bf16[128,20], index: 0, kind: input, shape index: {}]
  %s1 = inlined_call_operand.vmem [shape: bf16[20,128], index: 1, kind: input, shape index: {}]
  %s2 = inlined_call_operand.vmem [shape: f32[1,128], index: 2, kind: input, shape index: {}]
  %s3 = inlined_call_operand.vmem [shape: f32[128,128], index: 3, kind: output, shape index: {}]
  %s4 = sld [smem:[#allocation0]]
  $region45: #{unet_forward.14} parent=0
    _
  %s6 = ssub.s32 1, %s4
  %s7 = scalar_select 0, %s6, %s4
  loop: start=0, step=1, limit=4
  $region2: #{unet_forward.14} parent=0 // loop_pre_header
    _
  $region3: #{unet_forward.14} parent=0 // loop_header
    %s9 = sphi 0, %s13
    %p10 = scmp.ge.s32.totalorder %s9, 4
    %s19 = sphi 0, %s21
    %s22 = sphi 0, %s19
    %s23 = sphi 0, %s22
    %s39 = sphi 0, %s23
    %s43 = sphi 0, %s43
    %s45 = sphi 0, %s43
    %s46 = sphi 0, %s45
    %s60 = sphi 0, %s46
    %s64 = sphi 0, %s64
    %s66 = sphi 0, %s64
    %s67 = sphi 0, %s66
    %s81 = sphi 0, %s67
    %s87 = sphi 0, %s89
    %s90 = sphi 0, %s87
    %s91 = sphi 0, %s90
    %s107 = sphi 0, %s91
  $region4: #{unet_forward.14} parent=0 // loop_header_branch
    %12 = sbr.rel (%p10) target = $region8
  $region5: #{unet_forward.14} parent=0 // loop_body
    %s14 = ssub.s32 %s9, 1
    %s15 = ssub.s32 %s9, 2
    %s16 = sadd.s32 %s9, 1
    %s17 = ssub.s32 %s9, %s16
    %p18 = scmp.eq.s32.totalorder %s17, 0
    %s20 = sadd.s32 %s19, 1
    %s21 = scalar_select %p18, %s19, %s20
    %p24 = pneg %p18
    %p25 = scmp.eq.s32.totalorder %s9, 1
    %p26 = por %p24, %p25
    %p27 = scmp.ne.s32.totalorder %s19, %s22
    %p28 = scmp.eq.s32.totalorder %s9, 0
    %p29 = por %p27, %p28
    %p30 = scmp.ne.s32.totalorder %s19, %s22
    %p31 = scmp.eq.s32.totalorder %s14, 1
    %p32 = por %p30, %p31
    %p33 = scmp.ne.s32.totalorder %s22, %s23
    %p34 = scmp.eq.s32.totalorder %s14, 0
    %p35 = por %p33, %p34
    %p36 = scmp.ne.s32.totalorder %s22, %s23
    %p37 = scmp.eq.s32.totalorder %s15, 1
    %p38 = por %p36, %p37
    %p40 = scmp.ne.s32.totalorder %s23, %s39
    %p41 = scmp.eq.s32.totalorder %s15, 0
    %p42 = por %p40, %p41
    %s44 = sadd.s32 %s43, 1
    %p47 = scmp.eq.s32.totalorder %s9, 1
    %p48 = scmp.ne.s32.totalorder %s43, %s45
    %p49 = scmp.eq.s32.totalorder %s9, 0
    %p50 = por %p48, %p49
    %p51 = scmp.ne.s32.totalorder %s43, %s45
    %p52 = scmp.eq.s32.totalorder %s14, 1
    %p53 = por %p51, %p52
    %p54 = scmp.ne.s32.totalorder %s45, %s46
    %p55 = scmp.eq.s32.totalorder %s14, 0
    %p56 = por %p54, %p55
    %p57 = scmp.ne.s32.totalorder %s45, %s46
    %p58 = scmp.eq.s32.totalorder %s15, 1
    %p59 = por %p57, %p58
    %p61 = scmp.ne.s32.totalorder %s46, %s60
    %p62 = scmp.eq.s32.totalorder %s15, 0
    %p63 = por %p61, %p62
    %s65 = sadd.s32 %s64, 1
    %p68 = scmp.eq.s32.totalorder %s9, 1
    %p69 = scmp.ne.s32.totalorder %s64, %s66
    %p70 = scmp.eq.s32.totalorder %s9, 0
    %p71 = por %p69, %p70
    %p72 = scmp.ne.s32.totalorder %s64, %s66
    %p73 = scmp.eq.s32.totalorder %s14, 1
    %p74 = por %p72, %p73
    %p75 = scmp.ne.s32.totalorder %s66, %s67
    %p76 = scmp.eq.s32.totalorder %s14, 0
    %p77 = por %p75, %p76
    %p78 = scmp.ne.s32.totalorder %s66, %s67
    %p79 = scmp.eq.s32.totalorder %s15, 1
    %p80 = por %p78, %p79
    %p82 = scmp.ne.s32.totalorder %s67, %s81
    %p83 = scmp.eq.s32.totalorder %s15, 0
    %p84 = por %p82, %p83
    %s85 = ssub.s32 %s9, %s16
    %p86 = scmp.eq.s32.totalorder %s85, 0
    %s88 = sadd.s32 %s87, 1
    %s89 = scalar_select %p86, %s87, %s88
    %p92 = pneg %p86
    %p93 = scmp.eq.s32.totalorder %s9, 1
    %p94 = por %p92, %p93
    %p95 = scmp.ne.s32.totalorder %s87, %s90
    %p96 = scmp.eq.s32.totalorder %s9, 0
    %p97 = por %p95, %p96
    %p98 = scmp.ne.s32.totalorder %s87, %s90
    %p99 = scmp.eq.s32.totalorder %s14, 1
    %p100 = por %p98, %p99
    %p101 = scmp.ne.s32.totalorder %s90, %s91
    %p102 = scmp.eq.s32.totalorder %s14, 0
    %p103 = por %p101, %p102
    %p104 = scmp.ne.s32.totalorder %s90, %s91
    %p105 = scmp.eq.s32.totalorder %s15, 1
    %p106 = por %p104, %p105
    %p108 = scmp.ne.s32.totalorder %s91, %s107
    %p109 = scmp.eq.s32.totalorder %s15, 0
    %p110 = por %p108, %p109
    %p111 = scmp.le.s32.totalorder 1, %s9
    %p112 = scmp.lt.s32.totalorder %s9, 3
    %p113 = pnand %p111, %p112
    %p114 = pneg %p113
    // Predicated region
    $region9: #{unet_forward.14} parent=5 // pred_check
      _
    $region10: #{unet_forward.14} parent=5 // pred_check_branch
      %116 = sbr.rel (%p113) target = $region12
    $region11: #{unet_forward.14} parent=5 // pred_region
      %s117 = ssub.s32 %s9, 1
      // Predicated region
      $region13: #{unet_forward.14} parent=11 // pred_check
        %p118 = pneg %p56
      $region14: #{unet_forward.14} parent=11 // pred_check_branch
        %120 = sbr.rel (%p118) target = $region16
      $region15: #{unet_forward.14} parent=11 // pred_region
        _
      $region16: #{unet_forward.14} parent=11 // pred_fallthru
        _
      // Predicated region
      $region17: #{unet_forward.14} parent=11 // pred_check
        %p121 = pneg %p77
      $region18: #{unet_forward.14} parent=11 // pred_check_branch
        %123 = sbr.rel (%p121) target = $region20
      $region19: #{unet_forward.14} parent=11 // pred_region
        _
      $region20: #{unet_forward.14} parent=11 // pred_fallthru
        _
    $region12: #{unet_forward.14} parent=5 // pred_fallthru
      _
    %p124 = scmp.lt.s32.totalorder %s9, 2
    // Predicated region
    $region21: #{unet_forward.14} parent=5 // pred_check
      %p125 = pneg %p124
    $region22: #{unet_forward.14} parent=5 // pred_check_branch
      %127 = sbr.rel (%p125) target = $region24
    $region23: #{unet_forward.14} parent=5 // pred_region
      // Predicated region
      $region25: #{unet_forward.14} parent=23 // pred_check
        %p128 = pneg %p29
      $region26: #{unet_forward.14} parent=23 // pred_check_branch
        %130 = sbr.rel (%p128) target = $region28
      $region27: #{unet_forward.14} parent=23 // pred_region
        %s131 = smul.u32 8, %s9
        %p132 = scmp.lt.s32.totalorder %s131, 15
        %s133 = scalar_select %p132, %s131, 15
        %s134 = smul.addr %s133, 4
        %s135 = scalar_lea.vmem %s0, %s134
        %s136 = smul.u32 8, %s9
      $region28: #{unet_forward.14} parent=23 // pred_fallthru
        _
    $region24: #{unet_forward.14} parent=5 // pred_fallthru
      _
    %p137 = scmp.le.s32.totalorder 1, %s9
    %p138 = scmp.lt.s32.totalorder %s9, 3
    %p139 = pnand %p137, %p138
    %p140 = pneg %p139
    // Predicated region
    $region29: #{unet_forward.14} parent=5 // pred_check
      _
    $region30: #{unet_forward.14} parent=5 // pred_check_branch
      %142 = sbr.rel (%p139) target = $region32
    $region31: #{unet_forward.14} parent=5 // pred_region
      %s143 = ssub.s32 %s9, 1
      %s144 = smul.u32 8, %s14
      %p145 = scmp.lt.s32.totalorder %s144, 15
      %s146 = scalar_select %p145, %s144, 15
      %s147 = smul.addr %s146, 4
      %s148 = scalar_lea.vmem %s0, %s147
      %p149 = pneg %p35
      %p150 = pneg %p32
      %p151 = pneg %p56
      %p152 = pneg %p53
      %p153 = pneg %p77
      %p154 = pneg %p74
      %p155 = pneg %p103
      %p156 = pneg %p100
      %s157 = smul.u32 8, %s14
      %p158 = scmp.lt.s32.totalorder %s157, 15
      %s159 = scalar_select %p158, %s157, 15
      %s160 = smul.addr %s159, 8
      %s161 = scalar_lea.vmem %s3, %s160
      %s162 = smul.u32 8, %s14
      %p163 = scmp.lt.s32.totalorder %s162, 15
      %s164 = scalar_select %p163, %s162, 15
      %s165 = smul.addr %s164, 4
      %s166 = scalar_lea.vmem %s0, %s165
      %s167 = smul.u32 8, %s14
      %s168 = smul.u32 8, %s14
      %p169 = scmp.lt.s32.totalorder %s168, 15
      %s170 = scalar_select %p169, %s168, 15
      %s171 = smul.addr %s170, 8
      %s172 = scalar_lea.vmem %s3, %s171
      %s173 = smul.u32 8, %s14
      %v175 = vld [vmem:[%s166] sm:$0xf]
      %v176 = vld [vmem:[%s166 + $0x4] sm:$0xf]
      %v177 = vld [vmem:[%s166 + $0x8] sm:$0xf]
      %v178 = vld [vmem:[%s166 + $0xc] sm:$0xf]
      %v179 = vld [vmem:[%s166 + $0x10] sm:$0xf]
      %v180 = vld [vmem:[%s166 + $0x14] sm:$0xf]
      %v181 = vld [vmem:[%s166 + $0x18] sm:$0xf]
      %v182 = vld [vmem:[%s166 + $0x1c] sm:$0xf]
      %v183 = vld [vmem:[%s1] sm:$0xf]
      %v184 = vld [vmem:[%s1 + $0x4] sm:$0xf]
      %v185 = vld [vmem:[%s1 + $0x8] sm:$0x3]
      %v186 = vld [vmem:[%s2] sm:$0x1]
      %v188 = vlaneseq
      %v189 = vshrl.u32 %v188, 7
      %v190 = vsub.s32 0, %v189
      %v191 = vrot.slane %v186, %v190
      %v201 = vunpack.c.l.b16 %v175
      %v202 = vunpack.c.l.b16 %v176
      %v203 = vunpack.c.l.b16 %v177
      %v204 = vunpack.c.l.b16 %v178
      %v205 = vunpack.c.l.b16 %v179
      %v206 = vunpack.c.l.b16 %v180
      %v207 = vunpack.c.l.b16 %v181
      %v208 = vunpack.c.l.b16 %v182
      %v209 = vpack.c.b16 %v202, %v201
      %v210 = vpack.c.b16 %v204, %v203
      %v211 = vpack.c.b16 %v206, %v205
      %v212 = vpack.c.b16 %v208, %v207
      %v216 = vunpack.c.l.b16 %v183
      %v217 = vunpack.c.l.b16 %v184
      %v218 = vunpack.c.l.b16 %v185
      %v219 = vpack.c.b16 %v217, %v216
      %v220 = vpack.c.b16 %v218, %v218
      %vm222 = vcmask 162816
      %v224 = vsel %vm222, %v209, 0
      %v227 = vsel %vm222, %v210, 0
      %v230 = vsel %vm222, %v211, 0
      %v233 = vsel %vm222, %v212, 0
      %vm235 = vcmask 1041408
      %v237 = vsel %vm235, %v220, 0
      %239 = vmatprep.subr.bf16.mxu0 0
      %240 = vmatpush1.bf16.msra.mxu0 %v219
      %241 = vmatprep.subr.bf16.mxu0 0
      %242 = vmatpush1.bf16.msra.mxu0 %v237
      %243 = vmatprep.subr.bf16.mxu0 0
      %244 = vmatpush1.bf16.msra.mxu0 0
      %245 = vmatprep.subr.bf16.mxu0 0
      %246 = vmatpush1.bf16.msra.mxu0 0
      %247 = vmatprep.subr.bf16.mxu0 0
      %248 = vmatpush1.bf16.msra.mxu0 0
      %249 = vmatprep.subr.bf16.mxu0 0
      %250 = vmatpush1.bf16.msra.mxu0 0
      %251 = vmatprep.subr.bf16.mxu0 0
      %252 = vmatpush1.bf16.msra.mxu0 0
      %253 = vmatprep.subr.bf16.mxu0 0
      %254 = vmatpush1.bf16.msra.mxu0 0
      %255 = vmatprep.subr.bf16.mxu0 0
      %256 = vmatpush1.bf16.msra.mxu0 0
      %257 = vmatprep.subr.bf16.mxu0 0
      %258 = vmatpush1.bf16.msra.mxu0 0
      %259 = vmatprep.subr.bf16.mxu0 0
      %260 = vmatpush1.bf16.msra.mxu0 0
      %261 = vmatprep.subr.bf16.mxu0 0
      %262 = vmatpush1.bf16.msra.mxu0 0
      %263 = vmatprep.subr.bf16.mxu0 0
      %264 = vmatpush1.bf16.msra.mxu0 0
      %265 = vmatprep.subr.bf16.mxu0 0
      %266 = vmatpush1.bf16.msra.mxu0 0
      %267 = vmatprep.subr.bf16.mxu0 0
      %268 = vmatpush1.bf16.msra.mxu0 0
      %269 = vmatprep.subr.bf16.mxu0 0
      %270 = vmatpush1.bf16.msra.mxu0 0
      %271 = vmatprep.mubr.bf16.mxu0 0
      %272 = vmatmul.mubr.bf16.gmra.mrb[0].mxu0 %v224
      %v273 = vpop.f32.mrb[0].mxu0
      %v274 = vadd.f32 %v191, %v273
      %v275 = vpop.f32.mrb[0].mxu0
      %v276 = vpop.f32.mrb[0].mxu0
      %v277 = vadd.f32 %v191, %v276
      %v278 = vpop.f32.mrb[0].mxu0
      %279 = vmatprep.mubr.bf16.mxu0 0
      %280 = vmatmul.mubr.bf16.gmra.mrb[0].mxu0 %v227
      %v281 = vpop.f32.mrb[0].mxu0
      %v282 = vadd.f32 %v191, %v281
      %v283 = vpop.f32.mrb[0].mxu0
      %v284 = vpop.f32.mrb[0].mxu0
      %v285 = vadd.f32 %v191, %v284
      %v286 = vpop.f32.mrb[0].mxu0
      %287 = vmatprep.mubr.bf16.mxu0 0
      %288 = vmatmul.mubr.bf16.gmra.mrb[0].mxu0 %v230
      %v289 = vpop.f32.mrb[0].mxu0
      %v290 = vadd.f32 %v191, %v289
      %v291 = vpop.f32.mrb[0].mxu0
      %v292 = vpop.f32.mrb[0].mxu0
      %v293 = vadd.f32 %v191, %v292
      %v294 = vpop.f32.mrb[0].mxu0
      %295 = vmatprep.mubr.bf16.mxu0 0
      %296 = vmatmul.mubr.bf16.gmra.mrb[0].mxu0 %v233
      %v297 = vpop.f32.mrb[0].mxu0
      %v298 = vadd.f32 %v191, %v297
      %v299 = vpop.f32.mrb[0].mxu0
      %v300 = vpop.f32.mrb[0].mxu0
      %v301 = vadd.f32 %v191, %v300
      %v302 = vpop.f32.mrb[0].mxu0
      %303 = vdwg.mxu0
      %304 = vst [vmem:[%s172] sm:$0xff] %v274
      %305 = vst [vmem:[%s172 + $0x8] sm:$0xff] %v277
      %306 = vst [vmem:[%s172 + $0x10] sm:$0xff] %v282
      %307 = vst [vmem:[%s172 + $0x18] sm:$0xff] %v285
      %308 = vst [vmem:[%s172 + $0x20] sm:$0xff] %v290
      %309 = vst [vmem:[%s172 + $0x28] sm:$0xff] %v293
      %310 = vst [vmem:[%s172 + $0x30] sm:$0xff] %v298
      %311 = vst [vmem:[%s172 + $0x38] sm:$0xff] %v301
      %s312 = smul.u32 8, %s14
      %p313 = scmp.lt.s32.totalorder %s312, 15
      %s314 = scalar_select %p313, %s312, 15
      %s315 = smul.addr %s314, 8
      %s316 = scalar_lea.vmem %s3, %s315
      // Predicated region
      $region33: #{unet_forward.14} parent=31 // pred_check
        %p317 = pneg %p100
      $region34: #{unet_forward.14} parent=31 // pred_check_branch
        %319 = sbr.rel (%p317) target = $region36
      $region35: #{unet_forward.14} parent=31 // pred_region
        %s320 = smul.u32 8, %s14
      $region36: #{unet_forward.14} parent=31 // pred_fallthru
        _
    $region32: #{unet_forward.14} parent=5 // pred_fallthru
      _
    %p321 = scmp.le.s32.totalorder 2, %s9
    // Predicated region
    $region37: #{unet_forward.14} parent=5 // pred_check
      %p322 = pneg %p321
    $region38: #{unet_forward.14} parent=5 // pred_check_branch
      %324 = sbr.rel (%p322) target = $region40
    $region39: #{unet_forward.14} parent=5 // pred_region
      %s325 = ssub.s32 %s9, 2
      // Predicated region
      $region41: #{unet_forward.14} parent=39 // pred_check
        %p326 = pneg %p106
      $region42: #{unet_forward.14} parent=39 // pred_check_branch
        %328 = sbr.rel (%p326) target = $region44
      $region43: #{unet_forward.14} parent=39 // pred_region
        %s329 = smul.u32 8, %s15
        %p330 = scmp.lt.s32.totalorder %s329, 15
        %s331 = scalar_select %p330, %s329, 15
        %s332 = smul.addr %s331, 8
        %s333 = scalar_lea.vmem %s3, %s332
      $region44: #{unet_forward.14} parent=39 // pred_fallthru
        _
    $region40: #{unet_forward.14} parent=5 // pred_fallthru
      _
  $region6: #{unet_forward.14} parent=0 // loop_footer
    %s13 = sadd.s32 1, %s9
  $region7: #{unet_forward.14} parent=0 // loop_footer_branch
    %8 = sbr.rel target = $region3
  $region8: #{unet_forward.14} parent=0 // loop_exit
    _

// kernel: unet_forward.15
$region0: #{unet_forward.15}
  #allocation0 [shape = 'u32[]', space=smem, size = 0x4, offset = 0x4, fixed_abs, tag = 'smem constant byte address 0x4 - core index']
  #allocation1 [shape = 'u32[144,128]{1,0:T(1,128)}', space=vmem, size = 0x12000, scoped, tag = 'internal scratch']
  %s0 = inlined_call_operand.vmem [shape: bf16[512,225], index: 0, kind: input, shape index: {}]
  %s1 = inlined_call_operand.vmem [shape: bf16[225,128], index: 1, kind: input, shape index: {}]
  %s2 = inlined_call_operand.vmem [shape: f32[1,128], index: 2, kind: input, shape index: {}]
  %s3 = inlined_call_operand.vmem [shape: f32[512,128], index: 3, kind: output, shape index: {}]
  %s4 = sld [smem:[#allocation0]]
  $region45: #{unet_forward.15} parent=0
    _
  %s6 = ssub.s32 1, %s4
  %s7 = scalar_select 0, %s6, %s4
  loop: start=0, step=1, limit=4
  $region2: #{unet_forward.15} parent=0 // loop_pre_header
    _
  $region3: #{unet_forward.15} parent=0 // loop_header
    %s9 = sphi 0, %s13
    %p10 = scmp.ge.s32.totalorder %s9, 4
    %s19 = sphi 0, %s21
    %s22 = sphi 0, %s19
    %s23 = sphi 0, %s22
    %s39 = sphi 0, %s23
    %s43 = sphi 0, %s43
    %s45 = sphi 0, %s43
    %s46 = sphi 0, %s45
    %s60 = sphi 0, %s46
    %s64 = sphi 0, %s64
    %s66 = sphi 0, %s64
    %s67 = sphi 0, %s66
    %s81 = sphi 0, %s67
    %s87 = sphi 0, %s89
    %s90 = sphi 0, %s87
    %s91 = sphi 0, %s90
    %s107 = sphi 0, %s91
  $region4: #{unet_forward.15} parent=0 // loop_header_branch
    %12 = sbr.rel (%p10) target = $region8
  $region5: #{unet_forward.15} parent=0 // loop_body
    %s14 = ssub.s32 %s9, 1
    %s15 = ssub.s32 %s9, 2
    %s16 = sadd.s32 %s9, 1
    %s17 = ssub.s32 %s9, %s16
    %p18 = scmp.eq.s32.totalorder %s17, 0
    %s20 = sadd.s32 %s19, 1
    %s21 = scalar_select %p18, %s19, %s20
    %p24 = pneg %p18
    %p25 = scmp.eq.s32.totalorder %s9, 1
    %p26 = por %p24, %p25
    %p27 = scmp.ne.s32.totalorder %s19, %s22
    %p28 = scmp.eq.s32.totalorder %s9, 0
    %p29 = por %p27, %p28
    %p30 = scmp.ne.s32.totalorder %s19, %s22
    %p31 = scmp.eq.s32.totalorder %s14, 1
    %p32 = por %p30, %p31
    %p33 = scmp.ne.s32.totalorder %s22, %s23
    %p34 = scmp.eq.s32.totalorder %s14, 0
    %p35 = por %p33, %p34
    %p36 = scmp.ne.s32.totalorder %s22, %s23
    %p37 = scmp.eq.s32.totalorder %s15, 1
    %p38 = por %p36, %p37
    %p40 = scmp.ne.s32.totalorder %s23, %s39
    %p41 = scmp.eq.s32.totalorder %s15, 0
    %p42 = por %p40, %p41
    %s44 = sadd.s32 %s43, 1
    %p47 = scmp.eq.s32.totalorder %s9, 1
    %p48 = scmp.ne.s32.totalorder %s43, %s45
    %p49 = scmp.eq.s32.totalorder %s9, 0
    %p50 = por %p48, %p49
    %p51 = scmp.ne.s32.totalorder %s43, %s45
    %p52 = scmp.eq.s32.totalorder %s14, 1
    %p53 = por %p51, %p52
    %p54 = scmp.ne.s32.totalorder %s45, %s46
    %p55 = scmp.eq.s32.totalorder %s14, 0
    %p56 = por %p54, %p55
    %p57 = scmp.ne.s32.totalorder %s45, %s46
    %p58 = scmp.eq.s32.totalorder %s15, 1
    %p59 = por %p57, %p58
    %p61 = scmp.ne.s32.totalorder %s46, %s60
    %p62 = scmp.eq.s32.totalorder %s15, 0
    %p63 = por %p61, %p62
    %s65 = sadd.s32 %s64, 1
    %p68 = scmp.eq.s32.totalorder %s9, 1
    %p69 = scmp.ne.s32.totalorder %s64, %s66
    %p70 = scmp.eq.s32.totalorder %s9, 0
    %p71 = por %p69, %p70
    %p72 = scmp.ne.s32.totalorder %s64, %s66
    %p73 = scmp.eq.s32.totalorder %s14, 1
    %p74 = por %p72, %p73
    %p75 = scmp.ne.s32.totalorder %s66, %s67
    %p76 = scmp.eq.s32.totalorder %s14, 0
    %p77 = por %p75, %p76
    %p78 = scmp.ne.s32.totalorder %s66, %s67
    %p79 = scmp.eq.s32.totalorder %s15, 1
    %p80 = por %p78, %p79
    %p82 = scmp.ne.s32.totalorder %s67, %s81
    %p83 = scmp.eq.s32.totalorder %s15, 0
    %p84 = por %p82, %p83
    %s85 = ssub.s32 %s9, %s16
    %p86 = scmp.eq.s32.totalorder %s85, 0
    %s88 = sadd.s32 %s87, 1
    %s89 = scalar_select %p86, %s87, %s88
    %p92 = pneg %p86
    %p93 = scmp.eq.s32.totalorder %s9, 1
    %p94 = por %p92, %p93
    %p95 = scmp.ne.s32.totalorder %s87, %s90
    %p96 = scmp.eq.s32.totalorder %s9, 0
    %p97 = por %p95, %p96
    %p98 = scmp.ne.s32.totalorder %s87, %s90
    %p99 = scmp.eq.s32.totalorder %s14, 1
    %p100 = por %p98, %p99
    %p101 = scmp.ne.s32.totalorder %s90, %s91
    %p102 = scmp.eq.s32.totalorder %s14, 0
    %p103 = por %p101, %p102
    %p104 = scmp.ne.s32.totalorder %s90, %s91
    %p105 = scmp.eq.s32.totalorder %s15, 1
    %p106 = por %p104, %p105
    %p108 = scmp.ne.s32.totalorder %s91, %s107
    %p109 = scmp.eq.s32.totalorder %s15, 0
    %p110 = por %p108, %p109
    %p111 = scmp.le.s32.totalorder 1, %s9
    %p112 = scmp.lt.s32.totalorder %s9, 3
    %p113 = pnand %p111, %p112
    %p114 = pneg %p113
    // Predicated region
    $region9: #{unet_forward.15} parent=5 // pred_check
      _
    $region10: #{unet_forward.15} parent=5 // pred_check_branch
      %116 = sbr.rel (%p113) target = $region12
    $region11: #{unet_forward.15} parent=5 // pred_region
      %s117 = ssub.s32 %s9, 1
      // Predicated region
      $region13: #{unet_forward.15} parent=11 // pred_check
        %p118 = pneg %p56
      $region14: #{unet_forward.15} parent=11 // pred_check_branch
        %120 = sbr.rel (%p118) target = $region16
      $region15: #{unet_forward.15} parent=11 // pred_region
        _
      $region16: #{unet_forward.15} parent=11 // pred_fallthru
        _
      // Predicated region
      $region17: #{unet_forward.15} parent=11 // pred_check
        %p121 = pneg %p77
      $region18: #{unet_forward.15} parent=11 // pred_check_branch
        %123 = sbr.rel (%p121) target = $region20
      $region19: #{unet_forward.15} parent=11 // pred_region
        _
      $region20: #{unet_forward.15} parent=11 // pred_fallthru
        _
    $region12: #{unet_forward.15} parent=5 // pred_fallthru
      _
    %p124 = scmp.lt.s32.totalorder %s9, 2
    // Predicated region
    $region21: #{unet_forward.15} parent=5 // pred_check
      %p125 = pneg %p124
    $region22: #{unet_forward.15} parent=5 // pred_check_branch
      %127 = sbr.rel (%p125) target = $region24
    $region23: #{unet_forward.15} parent=5 // pred_region
      // Predicated region
      $region25: #{unet_forward.15} parent=23 // pred_check
        %p128 = pneg %p29
      $region26: #{unet_forward.15} parent=23 // pred_check_branch
        %130 = sbr.rel (%p128) target = $region28
      $region27: #{unet_forward.15} parent=23 // pred_region
        %s131 = smul.u32 32, %s9
        %p132 = scmp.lt.s32.totalorder %s131, 63
        %s133 = scalar_select %p132, %s131, 63
        %s134 = smul.addr %s133, 2
        %s135 = smul.addr %s134, 4
        %s136 = scalar_lea.vmem %s0, %s135
        %s137 = smul.u32 32, %s9
      $region28: #{unet_forward.15} parent=23 // pred_fallthru
        _
    $region24: #{unet_forward.15} parent=5 // pred_fallthru
      _
    %p138 = scmp.le.s32.totalorder 1, %s9
    %p139 = scmp.lt.s32.totalorder %s9, 3
    %p140 = pnand %p138, %p139
    %p141 = pneg %p140
    // Predicated region
    $region29: #{unet_forward.15} parent=5 // pred_check
      _
    $region30: #{unet_forward.15} parent=5 // pred_check_branch
      %143 = sbr.rel (%p140) target = $region32
    $region31: #{unet_forward.15} parent=5 // pred_region
      %s144 = ssub.s32 %s9, 1
      %s145 = smul.u32 32, %s14
      %p146 = scmp.lt.s32.totalorder %s145, 63
      %s147 = scalar_select %p146, %s145, 63
      %s148 = smul.addr %s147, 2
      %s149 = smul.addr %s148, 4
      %s150 = scalar_lea.vmem %s0, %s149
      %p151 = pneg %p35
      %p152 = pneg %p32
      %p153 = pneg %p56
      %p154 = pneg %p53
      %p155 = pneg %p77
      %p156 = pneg %p74
      %p157 = pneg %p103
      %p158 = pneg %p100
      %s159 = smul.u32 32, %s14
      %p160 = scmp.lt.s32.totalorder %s159, 63
      %s161 = scalar_select %p160, %s159, 63
      %s162 = smul.addr %s161, 8
      %s163 = scalar_lea.vmem %s3, %s162
      %s164 = smul.u32 32, %s14
      %p165 = scmp.lt.s32.totalorder %s164, 63
      %s166 = scalar_select %p165, %s164, 63
      %s167 = smul.addr %s166, 2
      %s168 = smul.addr %s167, 4
      %s169 = scalar_lea.vmem %s0, %s168
      %s170 = smul.u32 32, %s14
      %s171 = smul.u32 32, %s14
      %p172 = scmp.lt.s32.totalorder %s171, 63
      %s173 = scalar_select %p172, %s171, 63
      %s174 = smul.addr %s173, 8
      %s175 = scalar_lea.vmem %s3, %s174
      %s176 = smul.u32 32, %s14
      %v178 = vld [vmem:[%s169] sm:$0xff]
      %v179 = vld [vmem:[%s169 + $0x8] sm:$0xff]
      %v180 = vld [vmem:[%s169 + $0x10] sm:$0xff]
      %v181 = vld [vmem:[%s169 + $0x18] sm:$0xff]
      %v182 = vld [vmem:[%s169 + $0x20] sm:$0xff]
      %v183 = vld [vmem:[%s169 + $0x28] sm:$0xff]
      %v184 = vld [vmem:[%s169 + $0x30] sm:$0xff]
      %v185 = vld [vmem:[%s169 + $0x38] sm:$0xff]
      %v186 = vld [vmem:[%s169 + $0x40] sm:$0xff]
      %v187 = vld [vmem:[%s169 + $0x48] sm:$0xff]
      %v188 = vld [vmem:[%s169 + $0x50] sm:$0xff]
      %v189 = vld [vmem:[%s169 + $0x58] sm:$0xff]
      %v190 = vld [vmem:[%s169 + $0x60] sm:$0xff]
      %v191 = vld [vmem:[%s169 + $0x68] sm:$0xff]
      %v192 = vld [vmem:[%s169 + $0x70] sm:$0xff]
      %v193 = vld [vmem:[%s169 + $0x78] sm:$0xff]
      %v194 = vld [vmem:[%s169 + $0x80] sm:$0xff]
      %v195 = vld [vmem:[%s169 + $0x88] sm:$0xff]
      %v196 = vld [vmem:[%s169 + $0x90] sm:$0xff]
      %v197 = vld [vmem:[%s169 + $0x98] sm:$0xff]
      %v198 = vld [vmem:[%s169 + $0xa0] sm:$0xff]
      %v199 = vld [vmem:[%s169 + $0xa8] sm:$0xff]
      %v200 = vld [vmem:[%s169 + $0xb0] sm:$0xff]
      %v201 = vld [vmem:[%s169 + $0xb8] sm:$0xff]
      %v202 = vld [vmem:[%s169 + $0xc0] sm:$0xff]
      %v203 = vld [vmem:[%s169 + $0xc8] sm:$0xff]
      %v204 = vld [vmem:[%s169 + $0xd0] sm:$0xff]
      %v205 = vld [vmem:[%s169 + $0xd8] sm:$0xff]
      %v206 = vld [vmem:[%s169 + $0xe0] sm:$0xff]
      %v207 = vld [vmem:[%s169 + $0xe8] sm:$0xff]
      %v208 = vld [vmem:[%s169 + $0xf0] sm:$0xff]
      %v209 = vld [vmem:[%s169 + $0xf8] sm:$0xff]
      %v210 = vld [vmem:[%s1] sm:$0xf]
      %v211 = vld [vmem:[%s1 + $0x4] sm:$0xf]
      %v212 = vld [vmem:[%s1 + $0x8] sm:$0xf]
      %v213 = vld [vmem:[%s1 + $0xc] sm:$0xf]
      %v214 = vld [vmem:[%s1 + $0x10] sm:$0xf]
      %v215 = vld [vmem:[%s1 + $0x14] sm:$0xf]
      %v216 = vld [vmem:[%s1 + $0x18] sm:$0xf]
      %v217 = vld [vmem:[%s1 + $0x1c] sm:$0xf]
      %v218 = vld [vmem:[%s1 + $0x20] sm:$0xf]
      %v219 = vld [vmem:[%s1 + $0x24] sm:$0xf]
      %v220 = vld [vmem:[%s1 + $0x28] sm:$0xf]
      %v221 = vld [vmem:[%s1 + $0x2c] sm:$0xf]
      %v222 = vld [vmem:[%s1 + $0x30] sm:$0xf]
      %v223 = vld [vmem:[%s1 + $0x34] sm:$0xf]
      %v224 = vld [vmem:[%s1 + $0x38] sm:$0xf]
      %v225 = vld [vmem:[%s1 + $0x3c] sm:$0xf]
      %v226 = vld [vmem:[%s1 + $0x40] sm:$0xf]
      %v227 = vld [vmem:[%s1 + $0x44] sm:$0xf]
      %v228 = vld [vmem:[%s1 + $0x48] sm:$0xf]
      %v229 = vld [vmem:[%s1 + $0x4c] sm:$0xf]
      %v230 = vld [vmem:[%s1 + $0x50] sm:$0xf]
      %v231 = vld [vmem:[%s1 + $0x54] sm:$0xf]
      %v232 = vld [vmem:[%s1 + $0x58] sm:$0xf]
      %v233 = vld [vmem:[%s1 + $0x5c] sm:$0xf]
      %v234 = vld [vmem:[%s1 + $0x60] sm:$0xf]
      %v235 = vld [vmem:[%s1 + $0x64] sm:$0xf]
      %v236 = vld [vmem:[%s1 + $0x68] sm:$0xf]
      %v237 = vld [vmem:[%s1 + $0x6c] sm:$0xf]
      %v238 = vld [vmem:[%s1 + $0x70] sm:$0x1]
      %v239 = vld [vmem:[%s2] sm:$0x1]
      %v241 = vlaneseq
      %v242 = vshrl.u32 %v241, 7
      %v243 = vsub.s32 0, %v242
      %v244 = vrot.slane %v239, %v243
      %v278 = vunpack.c.l.b16 %v178
      %v279 = vunpack.c.h.b16 %v178
      %v280 = vunpack.c.l.b16 %v179
      %v281 = vunpack.c.h.b16 %v179
      %v282 = vunpack.c.l.b16 %v180
      %v283 = vunpack.c.h.b16 %v180
      %v284 = vunpack.c.l.b16 %v181
      %v285 = vunpack.c.h.b16 %v181
      %v286 = vunpack.c.l.b16 %v182
      %v287 = vunpack.c.h.b16 %v182
      %v288 = vunpack.c.l.b16 %v183
      %v289 = vunpack.c.h.b16 %v183
      %v290 = vunpack.c.l.b16 %v184
      %v291 = vunpack.c.h.b16 %v184
      %v292 = vunpack.c.l.b16 %v185
      %v293 = vunpack.c.h.b16 %v185
      %v294 = vunpack.c.l.b16 %v186
      %v295 = vunpack.c.h.b16 %v186
      %v296 = vunpack.c.l.b16 %v187
      %v297 = vunpack.c.h.b16 %v187
      %v298 = vunpack.c.l.b16 %v188
      %v299 = vunpack.c.h.b16 %v188
      %v300 = vunpack.c.l.b16 %v189
      %v301 = vunpack.c.h.b16 %v189
      %v302 = vunpack.c.l.b16 %v190
      %v303 = vunpack.c.h.b16 %v190
      %v304 = vunpack.c.l.b16 %v191
      %v305 = vunpack.c.h.b16 %v191
      %v306 = vunpack.c.l.b16 %v192
      %v307 = vunpack.c.h.b16 %v192
      %v308 = vunpack.c.l.b16 %v193
      %v309 = vunpack.c.h.b16 %v193
      %v310 = vunpack.c.l.b16 %v194
      %v311 = vunpack.c.h.b16 %v194
      %v312 = vunpack.c.l.b16 %v195
      %v313 = vunpack.c.h.b16 %v195
      %v314 = vunpack.c.l.b16 %v196
      %v315 = vunpack.c.h.b16 %v196
      %v316 = vunpack.c.l.b16 %v197
      %v317 = vunpack.c.h.b16 %v197
      %v318 = vunpack.c.l.b16 %v198
      %v319 = vunpack.c.h.b16 %v198
      %v320 = vunpack.c.l.b16 %v199
      %v321 = vunpack.c.h.b16 %v199
      %v322 = vunpack.c.l.b16 %v200
      %v323 = vunpack.c.h.b16 %v200
      %v324 = vunpack.c.l.b16 %v201
      %v325 = vunpack.c.h.b16 %v201
      %v326 = vunpack.c.l.b16 %v202
      %v327 = vunpack.c.h.b16 %v202
      %v328 = vunpack.c.l.b16 %v203
      %v329 = vunpack.c.h.b16 %v203
      %v330 = vunpack.c.l.b16 %v204
      %v331 = vunpack.c.h.b16 %v204
      %v332 = vunpack.c.l.b16 %v205
      %v333 = vunpack.c.h.b16 %v205
      %v334 = vunpack.c.l.b16 %v206
      %v335 = vunpack.c.h.b16 %v206
      %v336 = vunpack.c.l.b16 %v207
      %v337 = vunpack.c.h.b16 %v207
      %v338 = vunpack.c.l.b16 %v208
      %v339 = vunpack.c.h.b16 %v208
      %v340 = vunpack.c.l.b16 %v209
      %v341 = vunpack.c.h.b16 %v209
      %v342 = vpack.c.b16 %v280, %v278
      %v343 = vpack.c.b16 %v281, %v279
      %v344 = vpack.c.b16 %v284, %v282
      %v345 = vpack.c.b16 %v285, %v283
      %v346 = vpack.c.b16 %v288, %v286
      %v347 = vpack.c.b16 %v289, %v287
      %v348 = vpack.c.b16 %v292, %v290
      %v349 = vpack.c.b16 %v293, %v291
      %v350 = vpack.c.b16 %v296, %v294
      %v351 = vpack.c.b16 %v297, %v295
      %v352 = vpack.c.b16 %v300, %v298
      %v353 = vpack.c.b16 %v301, %v299
      %v354 = vpack.c.b16 %v304, %v302
      %v355 = vpack.c.b16 %v305, %v303
      %v356 = vpack.c.b16 %v308, %v306
      %v357 = vpack.c.b16 %v309, %v307
      %v358 = vpack.c.b16 %v312, %v310
      %v359 = vpack.c.b16 %v313, %v311
      %v360 = vpack.c.b16 %v316, %v314
      %v361 = vpack.c.b16 %v317, %v315
      %v362 = vpack.c.b16 %v320, %v318
      %v363 = vpack.c.b16 %v321, %v319
      %v364 = vpack.c.b16 %v324, %v322
      %v365 = vpack.c.b16 %v325, %v323
      %v366 = vpack.c.b16 %v328, %v326
      %v367 = vpack.c.b16 %v329, %v327
      %v368 = vpack.c.b16 %v332, %v330
      %v369 = vpack.c.b16 %v333, %v331
      %v370 = vpack.c.b16 %v336, %v334
      %v371 = vpack.c.b16 %v337, %v335
      %v372 = vpack.c.b16 %v340, %v338
      %v373 = vpack.c.b16 %v341, %v339
      %v419 = vunpack.c.l.b16 %v210
      %v420 = vunpack.c.l.b16 %v211
      %v421 = vunpack.c.l.b16 %v212
      %v422 = vunpack.c.l.b16 %v213
      %v423 = vunpack.c.l.b16 %v214
      %v424 = vunpack.c.l.b16 %v215
      %v425 = vunpack.c.l.b16 %v216
      %v426 = vunpack.c.l.b16 %v217
      %v427 = vunpack.c.l.b16 %v218
      %v428 = vunpack.c.l.b16 %v219
      %v429 = vunpack.c.l.b16 %v220
      %v430 = vunpack.c.l.b16 %v221
      %v431 = vunpack.c.l.b16 %v222
      %v432 = vunpack.c.l.b16 %v223
      %v433 = vunpack.c.l.b16 %v224
      %v434 = vunpack.c.l.b16 %v225
      %v435 = vunpack.c.l.b16 %v226
      %v436 = vunpack.c.l.b16 %v227
      %v437 = vunpack.c.l.b16 %v228
      %v438 = vunpack.c.l.b16 %v229
      %v439 = vunpack.c.l.b16 %v230
      %v440 = vunpack.c.l.b16 %v231
      %v441 = vunpack.c.l.b16 %v232
      %v442 = vunpack.c.l.b16 %v233
      %v443 = vunpack.c.l.b16 %v234
      %v444 = vunpack.c.l.b16 %v235
      %v445 = vunpack.c.l.b16 %v236
      %v446 = vunpack.c.l.b16 %v237
      %v447 = vunpack.c.l.b16 %v238
      %v448 = vpack.c.b16 %v420, %v419
      %v449 = vpack.c.b16 %v422, %v421
      %v450 = vpack.c.b16 %v424, %v423
      %v451 = vpack.c.b16 %v426, %v425
      %v452 = vpack.c.b16 %v428, %v427
      %v453 = vpack.c.b16 %v430, %v429
      %v454 = vpack.c.b16 %v432, %v431
      %v455 = vpack.c.b16 %v434, %v433
      %v456 = vpack.c.b16 %v436, %v435
      %v457 = vpack.c.b16 %v438, %v437
      %v458 = vpack.c.b16 %v440, %v439
      %v459 = vpack.c.b16 %v442, %v441
      %v460 = vpack.c.b16 %v444, %v443
      %v461 = vpack.c.b16 %v446, %v445
      %v462 = vpack.c.b16 %v447, %v447
      %vm477 = vcmask 793600
      %v479 = vsel %vm477, %v343, 0
      %v482 = vsel %vm477, %v345, 0
      %v485 = vsel %vm477, %v347, 0
      %v488 = vsel %vm477, %v349, 0
      %v491 = vsel %vm477, %v351, 0
      %v494 = vsel %vm477, %v353, 0
      %v497 = vsel %vm477, %v355, 0
      %v500 = vsel %vm477, %v357, 0
      %v503 = vsel %vm477, %v359, 0
      %v506 = vsel %vm477, %v361, 0
      %v509 = vsel %vm477, %v363, 0
      %v512 = vsel %vm477, %v365, 0
      %v515 = vsel %vm477, %v367, 0
      %v518 = vsel %vm477, %v369, 0
      %v521 = vsel %vm477, %v371, 0
      %v524 = vsel %vm477, %v373, 0
      %vm526 = vcmask 1040384
      %v527 = vsel 0, 4294967295, 65535
      %v528 = vsel %vm526, %v527, 0
      %v530 = vand.u32 %v462, %v528
      %532 = vmatprep.subr.bf16.mxu0 0
      %533 = vmatpush1.bf16.msra.mxu0 %v448
      %534 = vmatprep.subr.bf16.mxu0 0
      %535 = vmatpush1.bf16.msra.mxu0 %v449
      %536 = vmatprep.subr.bf16.mxu0 0
      %537 = vmatpush1.bf16.msra.mxu0 %v450
      %538 = vmatprep.subr.bf16.mxu0 0
      %539 = vmatpush1.bf16.msra.mxu0 %v451
      %540 = vmatprep.subr.bf16.mxu0 0
      %541 = vmatpush1.bf16.msra.mxu0 %v452
      %542 = vmatprep.subr.bf16.mxu0 0
      %543 = vmatpush1.bf16.msra.mxu0 %v453
      %544 = vmatprep.subr.bf16.mxu0 0
      %545 = vmatpush1.bf16.msra.mxu0 %v454
      %546 = vmatprep.subr.bf16.mxu0 0
      %547 = vmatpush1.bf16.msra.mxu0 %v455
      %548 = vmatprep.subr.bf16.mxu0 0
      %549 = vmatpush1.bf16.msra.mxu0 %v456
      %550 = vmatprep.subr.bf16.mxu0 0
      %551 = vmatpush1.bf16.msra.mxu0 %v457
      %552 = vmatprep.subr.bf16.mxu0 0
      %553 = vmatpush1.bf16.msra.mxu0 %v458
      %554 = vmatprep.subr.bf16.mxu0 0
      %555 = vmatpush1.bf16.msra.mxu0 %v459
      %556 = vmatprep.subr.bf16.mxu0 0
      %557 = vmatpush1.bf16.msra.mxu0 %v460
      %558 = vmatprep.subr.bf16.mxu0 0
      %559 = vmatpush1.bf16.msra.mxu0 %v461
      %560 = vmatprep.subr.bf16.mxu0 0
      %561 = vmatpush1.bf16.msra.mxu0 %v530
      %562 = vmatprep.subr.bf16.mxu0 0
      %563 = vmatpush1.bf16.msra.mxu0 0
      %564 = vmatprep.mubr.bf16.mxu0 %v479
      %565 = vmatmul.mubr.bf16.gmra.mrb[0].mxu0 %v342
      %v566 = vpop.f32.mrb[0].mxu0
      %v567 = vadd.f32 %v244, %v566
      %v568 = vpop.f32.mrb[0].mxu0
      %v569 = vpop.f32.mrb[0].mxu0
      %v570 = vadd.f32 %v244, %v569
      %v571 = vpop.f32.mrb[0].mxu0
      %572 = vmatprep.mubr.bf16.mxu0 %v482
      %573 = vmatmul.mubr.bf16.gmra.mrb[0].mxu0 %v344
      %v574 = vpop.f32.mrb[0].mxu0
      %v575 = vadd.f32 %v244, %v574
      %v576 = vpop.f32.mrb[0].mxu0
      %v577 = vpop.f32.mrb[0].mxu0
      %v578 = vadd.f32 %v244, %v577
      %v579 = vpop.f32.mrb[0].mxu0
      %580 = vmatprep.mubr.bf16.mxu0 %v485
      %581 = vmatmul.mubr.bf16.gmra.mrb[0].mxu0 %v346
      %v582 = vpop.f32.mrb[0].mxu0
      %v583 = vadd.f32 %v244, %v582
      %v584 = vpop.f32.mrb[0].mxu0
      %v585 = vpop.f32.mrb[0].mxu0
      %v586 = vadd.f32 %v244, %v585
      %v587 = vpop.f32.mrb[0].mxu0
      %588 = vmatprep.mubr.bf16.mxu0 %v488
      %589 = vmatmul.mubr.bf16.gmra.mrb[0].mxu0 %v348
      %v590 = vpop.f32.mrb[0].mxu0
      %v591 = vadd.f32 %v244, %v590
      %v592 = vpop.f32.mrb[0].mxu0
      %v593 = vpop.f32.mrb[0].mxu0
      %v594 = vadd.f32 %v244, %v593
      %v595 = vpop.f32.mrb[0].mxu0
      %596 = vmatprep.mubr.bf16.mxu0 %v491
      %597 = vmatmul.mubr.bf16.gmra.mrb[0].mxu0 %v350
      %v598 = vpop.f32.mrb[0].mxu0
      %v599 = vadd.f32 %v244, %v598
      %v600 = vpop.f32.mrb[0].mxu0
      %v601 = vpop.f32.mrb[0].mxu0
      %v602 = vadd.f32 %v244, %v601
      %v603 = vpop.f32.mrb[0].mxu0
      %604 = vmatprep.mubr.bf16.mxu0 %v494
      %605 = vmatmul.mubr.bf16.gmra.mrb[0].mxu0 %v352
      %v606 = vpop.f32.mrb[0].mxu0
      %v607 = vadd.f32 %v244, %v606
      %v608 = vpop.f32.mrb[0].mxu0
      %v609 = vpop.f32.mrb[0].mxu0
      %v610 = vadd.f32 %v244, %v609
      %v611 = vpop.f32.mrb[0].mxu0
      %612 = vmatprep.mubr.bf16.mxu0 %v497
      %613 = vmatmul.mubr.bf16.gmra.mrb[0].mxu0 %v354
      %v614 = vpop.f32.mrb[0].mxu0
      %v615 = vadd.f32 %v244, %v614
      %v616 = vpop.f32.mrb[0].mxu0
      %v617 = vpop.f32.mrb[0].mxu0
      %v618 = vadd.f32 %v244, %v617
      %v619 = vpop.f32.mrb[0].mxu0
      %620 = vmatprep.mubr.bf16.mxu0 %v500
      %621 = vmatmul.mubr.bf16.gmra.mrb[0].mxu0 %v356
      %v622 = vpop.f32.mrb[0].mxu0
      %v623 = vadd.f32 %v244, %v622
      %v624 = vpop.f32.mrb[0].mxu0
      %v625 = vpop.f32.mrb[0].mxu0
      %v626 = vadd.f32 %v244, %v625
      %v627 = vpop.f32.mrb[0].mxu0
      %628 = vmatprep.mubr.bf16.mxu0 %v503
      %629 = vmatmul.mubr.bf16.gmra.mrb[0].mxu0 %v358
      %v630 = vpop.f32.mrb[0].mxu0
      %v631 = vadd.f32 %v244, %v630
      %v632 = vpop.f32.mrb[0].mxu0
      %v633 = vpop.f32.mrb[0].mxu0
      %v634 = vadd.f32 %v244, %v633
      %v635 = vpop.f32.mrb[0].mxu0
      %636 = vmatprep.mubr.bf16.mxu0 %v506
      %637 = vmatmul.mubr.bf16.gmra.mrb[0].mxu0 %v360
      %v638 = vpop.f32.mrb[0].mxu0
      %v639 = vadd.f32 %v244, %v638
      %v640 = vpop.f32.mrb[0].mxu0
      %v641 = vpop.f32.mrb[0].mxu0
      %v642 = vadd.f32 %v244, %v641
      %v643 = vpop.f32.mrb[0].mxu0
      %644 = vmatprep.mubr.bf16.mxu0 %v509
      %645 = vmatmul.mubr.bf16.gmra.mrb[0].mxu0 %v362
      %v646 = vpop.f32.mrb[0].mxu0
      %v647 = vadd.f32 %v244, %v646
      %v648 = vpop.f32.mrb[0].mxu0
      %v649 = vpop.f32.mrb[0].mxu0
      %v650 = vadd.f32 %v244, %v649
      %v651 = vpop.f32.mrb[0].mxu0
      %652 = vmatprep.mubr.bf16.mxu0 %v512
      %653 = vmatmul.mubr.bf16.gmra.mrb[0].mxu0 %v364
      %v654 = vpop.f32.mrb[0].mxu0
      %v655 = vadd.f32 %v244, %v654
      %v656 = vpop.f32.mrb[0].mxu0
      %v657 = vpop.f32.mrb[0].mxu0
      %v658 = vadd.f32 %v244, %v657
      %v659 = vpop.f32.mrb[0].mxu0
      %660 = vmatprep.mubr.bf16.mxu0 %v515
      %661 = vmatmul.mubr.bf16.gmra.mrb[0].mxu0 %v366
      %v662 = vpop.f32.mrb[0].mxu0
      %v663 = vadd.f32 %v244, %v662
      %v664 = vpop.f32.mrb[0].mxu0
      %v665 = vpop.f32.mrb[0].mxu0
      %v666 = vadd.f32 %v244, %v665
      %v667 = vpop.f32.mrb[0].mxu0
      %668 = vmatprep.mubr.bf16.mxu0 %v518
      %669 = vmatmul.mubr.bf16.gmra.mrb[0].mxu0 %v368
      %v670 = vpop.f32.mrb[0].mxu0
      %v671 = vadd.f32 %v244, %v670
      %v672 = vpop.f32.mrb[0].mxu0
      %v673 = vpop.f32.mrb[0].mxu0
      %v674 = vadd.f32 %v244, %v673
      %v675 = vpop.f32.mrb[0].mxu0
      %676 = vmatprep.mubr.bf16.mxu0 %v521
      %677 = vmatmul.mubr.bf16.gmra.mrb[0].mxu0 %v370
      %v678 = vpop.f32.mrb[0].mxu0
      %v679 = vadd.f32 %v244, %v678
      %v680 = vpop.f32.mrb[0].mxu0
      %v681 = vpop.f32.mrb[0].mxu0
      %v682 = vadd.f32 %v244, %v681
      %v683 = vpop.f32.mrb[0].mxu0
      %684 = vmatprep.mubr.bf16.mxu0 %v524
      %685 = vmatmul.mubr.bf16.gmra.mrb[0].mxu0 %v372
      %v686 = vpop.f32.mrb[0].mxu0
      %v687 = vadd.f32 %v244, %v686
      %v688 = vpop.f32.mrb[0].mxu0
      %v689 = vpop.f32.mrb[0].mxu0
      %v690 = vadd.f32 %v244, %v689
      %v691 = vpop.f32.mrb[0].mxu0
      %692 = vdwg.mxu0
      %vm693 = vcmp.gt.f32.partialorder %v567, 0.0
      %vm694 = vcmp.gt.f32.partialorder %v570, 0.0
      %vm695 = vcmp.gt.f32.partialorder %v575, 0.0
      %vm696 = vcmp.gt.f32.partialorder %v578, 0.0
      %vm697 = vcmp.gt.f32.partialorder %v583, 0.0
      %vm698 = vcmp.gt.f32.partialorder %v586, 0.0
      %vm699 = vcmp.gt.f32.partialorder %v591, 0.0
      %vm700 = vcmp.gt.f32.partialorder %v594, 0.0
      %vm701 = vcmp.gt.f32.partialorder %v599, 0.0
      %vm702 = vcmp.gt.f32.partialorder %v602, 0.0
      %vm703 = vcmp.gt.f32.partialorder %v607, 0.0
      %vm704 = vcmp.gt.f32.partialorder %v610, 0.0
      %vm705 = vcmp.gt.f32.partialorder %v615, 0.0
      %vm706 = vcmp.gt.f32.partialorder %v618, 0.0
      %vm707 = vcmp.gt.f32.partialorder %v623, 0.0
      %vm708 = vcmp.gt.f32.partialorder %v626, 0.0
      %vm709 = vcmp.gt.f32.partialorder %v631, 0.0
      %vm710 = vcmp.gt.f32.partialorder %v634, 0.0
      %vm711 = vcmp.gt.f32.partialorder %v639, 0.0
      %vm712 = vcmp.gt.f32.partialorder %v642, 0.0
      %vm713 = vcmp.gt.f32.partialorder %v647, 0.0
      %vm714 = vcmp.gt.f32.partialorder %v650, 0.0
      %vm715 = vcmp.gt.f32.partialorder %v655, 0.0
      %vm716 = vcmp.gt.f32.partialorder %v658, 0.0
      %vm717 = vcmp.gt.f32.partialorder %v663, 0.0
      %vm718 = vcmp.gt.f32.partialorder %v666, 0.0
      %vm719 = vcmp.gt.f32.partialorder %v671, 0.0
      %vm720 = vcmp.gt.f32.partialorder %v674, 0.0
      %vm721 = vcmp.gt.f32.partialorder %v679, 0.0
      %vm722 = vcmp.gt.f32.partialorder %v682, 0.0
      %vm723 = vcmp.gt.f32.partialorder %v687, 0.0
      %vm724 = vcmp.gt.f32.partialorder %v690, 0.0
      %v725 = vmul.f32 %v567, 0.01
      %v726 = vmul.f32 %v570, 0.01
      %v727 = vmul.f32 %v575, 0.01
      %v728 = vmul.f32 %v578, 0.01
      %v729 = vmul.f32 %v583, 0.01
      %v730 = vmul.f32 %v586, 0.01
      %v731 = vmul.f32 %v591, 0.01
      %v732 = vmul.f32 %v594, 0.01
      %v733 = vmul.f32 %v599, 0.01
      %v734 = vmul.f32 %v602, 0.01
      %v735 = vmul.f32 %v607, 0.01
      %v736 = vmul.f32 %v610, 0.01
      %v737 = vmul.f32 %v615, 0.01
      %v738 = vmul.f32 %v618, 0.01
      %v739 = vmul.f32 %v623, 0.01
      %v740 = vmul.f32 %v626, 0.01
      %v741 = vmul.f32 %v631, 0.01
      %v742 = vmul.f32 %v634, 0.01
      %v743 = vmul.f32 %v639, 0.01
      %v744 = vmul.f32 %v642, 0.01
      %v745 = vmul.f32 %v647, 0.01
      %v746 = vmul.f32 %v650, 0.01
      %v747 = vmul.f32 %v655, 0.01
      %v748 = vmul.f32 %v658, 0.01
      %v749 = vmul.f32 %v663, 0.01
      %v750 = vmul.f32 %v666, 0.01
      %v751 = vmul.f32 %v671, 0.01
      %v752 = vmul.f32 %v674, 0.01
      %v753 = vmul.f32 %v679, 0.01
      %v754 = vmul.f32 %v682, 0.01
      %v755 = vmul.f32 %v687, 0.01
      %v756 = vmul.f32 %v690, 0.01
      %v757 = vsel %vm693, %v567, %v725
      %v758 = vsel %vm694, %v570, %v726
      %v759 = vsel %vm695, %v575, %v727
      %v760 = vsel %vm696, %v578, %v728
      %v761 = vsel %vm697, %v583, %v729
      %v762 = vsel %vm698, %v586, %v730
      %v763 = vsel %vm699, %v591, %v731
      %v764 = vsel %vm700, %v594, %v732
      %v765 = vsel %vm701, %v599, %v733
      %v766 = vsel %vm702, %v602, %v734
      %v767 = vsel %vm703, %v607, %v735
      %v768 = vsel %vm704, %v610, %v736
      %v769 = vsel %vm705, %v615, %v737
      %v770 = vsel %vm706, %v618, %v738
      %v771 = vsel %vm707, %v623, %v739
      %v772 = vsel %vm708, %v626, %v740
      %v773 = vsel %vm709, %v631, %v741
      %v774 = vsel %vm710, %v634, %v742
      %v775 = vsel %vm711, %v639, %v743
      %v776 = vsel %vm712, %v642, %v744
      %v777 = vsel %vm713, %v647, %v745
      %v778 = vsel %vm714, %v650, %v746
      %v779 = vsel %vm715, %v655, %v747
      %v780 = vsel %vm716, %v658, %v748
      %v781 = vsel %vm717, %v663, %v749
      %v782 = vsel %vm718, %v666, %v750
      %v783 = vsel %vm719, %v671, %v751
      %v784 = vsel %vm720, %v674, %v752
      %v785 = vsel %vm721, %v679, %v753
      %v786 = vsel %vm722, %v682, %v754
      %v787 = vsel %vm723, %v687, %v755
      %v788 = vsel %vm724, %v690, %v756
      %789 = vst [vmem:[%s175] sm:$0xff] %v757
      %790 = vst [vmem:[%s175 + $0x8] sm:$0xff] %v758
      %791 = vst [vmem:[%s175 + $0x10] sm:$0xff] %v759
      %792 = vst [vmem:[%s175 + $0x18] sm:$0xff] %v760
      %793 = vst [vmem:[%s175 + $0x20] sm:$0xff] %v761
      %794 = vst [vmem:[%s175 + $0x28] sm:$0xff] %v762
      %795 = vst [vmem:[%s175 + $0x30] sm:$0xff] %v763
      %796 = vst [vmem:[%s175 + $0x38] sm:$0xff] %v764
      %797 = vst [vmem:[%s175 + $0x40] sm:$0xff] %v765
      %798 = vst [vmem:[%s175 + $0x48] sm:$0xff] %v766
      %799 = vst [vmem:[%s175 + $0x50] sm:$0xff] %v767
      %800 = vst [vmem:[%s175 + $0x58] sm:$0xff] %v768
      %801 = vst [vmem:[%s175 + $0x60] sm:$0xff] %v769
      %802 = vst [vmem:[%s175 + $0x68] sm:$0xff] %v770
      %803 = vst [vmem:[%s175 + $0x70] sm:$0xff] %v771
      %804 = vst [vmem:[%s175 + $0x78] sm:$0xff] %v772
      %805 = vst [vmem:[%s175 + $0x80] sm:$0xff] %v773
      %806 = vst [vmem:[%s175 + $0x88] sm:$0xff] %v774
      %807 = vst [vmem:[%s175 + $0x90] sm:$0xff] %v775
      %808 = vst [vmem:[%s175 + $0x98] sm:$0xff] %v776
      %809 = vst [vmem:[%s175 + $0xa0] sm:$0xff] %v777
      %810 = vst [vmem:[%s175 + $0xa8] sm:$0xff] %v778
      %811 = vst [vmem:[%s175 + $0xb0] sm:$0xff] %v779
      %812 = vst [vmem:[%s175 + $0xb8] sm:$0xff] %v780
      %813 = vst [vmem:[%s175 + $0xc0] sm:$0xff] %v781
      %814 = vst [vmem:[%s175 + $0xc8] sm:$0xff] %v782
      %815 = vst [vmem:[%s175 + $0xd0] sm:$0xff] %v783
      %816 = vst [vmem:[%s175 + $0xd8] sm:$0xff] %v784
      %817 = vst [vmem:[%s175 + $0xe0] sm:$0xff] %v785
      %818 = vst [vmem:[%s175 + $0xe8] sm:$0xff] %v786
      %819 = vst [vmem:[%s175 + $0xf0] sm:$0xff] %v787
      %820 = vst [vmem:[%s175 + $0xf8] sm:$0xff] %v788
      %s821 = smul.u32 32, %s14
      %p822 = scmp.lt.s32.totalorder %s821, 63
      %s823 = scalar_select %p822, %s821, 63
      %s824 = smul.addr %s823, 8
      %s825 = scalar_lea.vmem %s3, %s824
      // Predicated region
      $region33: #{unet_forward.15} parent=31 // pred_check
        %p826 = pneg %p100
      $region34: #{unet_forward.15} parent=31 // pred_check_branch
        %828 = sbr.rel (%p826) target = $region36
      $region35: #{unet_forward.15} parent=31 // pred_region
        %s829 = smul.u32 32, %s14
      $region36: #{unet_forward.15} parent=31 // pred_fallthru
        _
    $region32: #{unet_forward.15} parent=5 // pred_fallthru
      _
    %p830 = scmp.le.s32.totalorder 2, %s9
    // Predicated region
    $region37: #{unet_forward.15} parent=5 // pred_check
      %p831 = pneg %p830
    $region38: #{unet_forward.15} parent=5 // pred_check_branch
      %833 = sbr.rel (%p831) target = $region40
    $region39: #{unet_forward.15} parent=5 // pred_region
      %s834 = ssub.s32 %s9, 2
      // Predicated region
      $region41: #{unet_forward.15} parent=39 // pred_check
        %p835 = pneg %p106
      $region42: #{unet_forward.15} parent=39 // pred_check_branch
        %837 = sbr.rel (%p835) target = $region44
      $region43: #{unet_forward.15} parent=39 // pred_region
        %s838 = smul.u32 32, %s15
        %p839 = scmp.lt.s32.totalorder %s838, 63
        %s840 = scalar_select %p839, %s838, 63
        %s841 = smul.addr %s840, 8
        %s842 = scalar_lea.vmem %s3, %s841
      $region44: #{unet_forward.15} parent=39 // pred_fallthru
        _
    $region40: #{unet_forward.15} parent=5 // pred_fallthru
      _
  $region6: #{unet_forward.15} parent=0 // loop_footer
    %s13 = sadd.s32 1, %s9
  $region7: #{unet_forward.15} parent=0 // loop_footer_branch
    %8 = sbr.rel target = $region3
  $region8: #{unet_forward.15} parent=0 // loop_exit
    _

// kernel: unet_forward.17
$region0: #{unet_forward.17}
  #allocation0 [shape = 'u32[]', space=smem, size = 0x4, offset = 0x4, fixed_abs, tag = 'smem constant byte address 0x4 - core index']
  #allocation1 [shape = 'u32[144,128]{1,0:T(1,128)}', space=vmem, size = 0x12000, scoped, tag = 'internal scratch']
  %s0 = inlined_call_operand.vmem [shape: bf16[512,45], index: 0, kind: input, shape index: {}]
  %s1 = inlined_call_operand.vmem [shape: bf16[45,128], index: 1, kind: input, shape index: {}]
  %s2 = inlined_call_operand.vmem [shape: f32[1,128], index: 2, kind: input, shape index: {}]
  %s3 = inlined_call_operand.vmem [shape: f32[512,128], index: 3, kind: output, shape index: {}]
  %s4 = sld [smem:[#allocation0]]
  $region45: #{unet_forward.17} parent=0
    _
  %s6 = ssub.s32 1, %s4
  %s7 = scalar_select 0, %s6, %s4
  loop: start=0, step=1, limit=4
  $region2: #{unet_forward.17} parent=0 // loop_pre_header
    _
  $region3: #{unet_forward.17} parent=0 // loop_header
    %s9 = sphi 0, %s13
    %p10 = scmp.ge.s32.totalorder %s9, 4
    %s19 = sphi 0, %s21
    %s22 = sphi 0, %s19
    %s23 = sphi 0, %s22
    %s39 = sphi 0, %s23
    %s43 = sphi 0, %s43
    %s45 = sphi 0, %s43
    %s46 = sphi 0, %s45
    %s60 = sphi 0, %s46
    %s64 = sphi 0, %s64
    %s66 = sphi 0, %s64
    %s67 = sphi 0, %s66
    %s81 = sphi 0, %s67
    %s87 = sphi 0, %s89
    %s90 = sphi 0, %s87
    %s91 = sphi 0, %s90
    %s107 = sphi 0, %s91
  $region4: #{unet_forward.17} parent=0 // loop_header_branch
    %12 = sbr.rel (%p10) target = $region8
  $region5: #{unet_forward.17} parent=0 // loop_body
    %s14 = ssub.s32 %s9, 1
    %s15 = ssub.s32 %s9, 2
    %s16 = sadd.s32 %s9, 1
    %s17 = ssub.s32 %s9, %s16
    %p18 = scmp.eq.s32.totalorder %s17, 0
    %s20 = sadd.s32 %s19, 1
    %s21 = scalar_select %p18, %s19, %s20
    %p24 = pneg %p18
    %p25 = scmp.eq.s32.totalorder %s9, 1
    %p26 = por %p24, %p25
    %p27 = scmp.ne.s32.totalorder %s19, %s22
    %p28 = scmp.eq.s32.totalorder %s9, 0
    %p29 = por %p27, %p28
    %p30 = scmp.ne.s32.totalorder %s19, %s22
    %p31 = scmp.eq.s32.totalorder %s14, 1
    %p32 = por %p30, %p31
    %p33 = scmp.ne.s32.totalorder %s22, %s23
    %p34 = scmp.eq.s32.totalorder %s14, 0
    %p35 = por %p33, %p34
    %p36 = scmp.ne.s32.totalorder %s22, %s23
    %p37 = scmp.eq.s32.totalorder %s15, 1
    %p38 = por %p36, %p37
    %p40 = scmp.ne.s32.totalorder %s23, %s39
    %p41 = scmp.eq.s32.totalorder %s15, 0
    %p42 = por %p40, %p41
    %s44 = sadd.s32 %s43, 1
    %p47 = scmp.eq.s32.totalorder %s9, 1
    %p48 = scmp.ne.s32.totalorder %s43, %s45
    %p49 = scmp.eq.s32.totalorder %s9, 0
    %p50 = por %p48, %p49
    %p51 = scmp.ne.s32.totalorder %s43, %s45
    %p52 = scmp.eq.s32.totalorder %s14, 1
    %p53 = por %p51, %p52
    %p54 = scmp.ne.s32.totalorder %s45, %s46
    %p55 = scmp.eq.s32.totalorder %s14, 0
    %p56 = por %p54, %p55
    %p57 = scmp.ne.s32.totalorder %s45, %s46
    %p58 = scmp.eq.s32.totalorder %s15, 1
    %p59 = por %p57, %p58
    %p61 = scmp.ne.s32.totalorder %s46, %s60
    %p62 = scmp.eq.s32.totalorder %s15, 0
    %p63 = por %p61, %p62
    %s65 = sadd.s32 %s64, 1
    %p68 = scmp.eq.s32.totalorder %s9, 1
    %p69 = scmp.ne.s32.totalorder %s64, %s66
    %p70 = scmp.eq.s32.totalorder %s9, 0
    %p71 = por %p69, %p70
    %p72 = scmp.ne.s32.totalorder %s64, %s66
    %p73 = scmp.eq.s32.totalorder %s14, 1
    %p74 = por %p72, %p73
    %p75 = scmp.ne.s32.totalorder %s66, %s67
    %p76 = scmp.eq.s32.totalorder %s14, 0
    %p77 = por %p75, %p76
    %p78 = scmp.ne.s32.totalorder %s66, %s67
    %p79 = scmp.eq.s32.totalorder %s15, 1
    %p80 = por %p78, %p79
    %p82 = scmp.ne.s32.totalorder %s67, %s81
    %p83 = scmp.eq.s32.totalorder %s15, 0
    %p84 = por %p82, %p83
    %s85 = ssub.s32 %s9, %s16
    %p86 = scmp.eq.s32.totalorder %s85, 0
    %s88 = sadd.s32 %s87, 1
    %s89 = scalar_select %p86, %s87, %s88
    %p92 = pneg %p86
    %p93 = scmp.eq.s32.totalorder %s9, 1
    %p94 = por %p92, %p93
    %p95 = scmp.ne.s32.totalorder %s87, %s90
    %p96 = scmp.eq.s32.totalorder %s9, 0
    %p97 = por %p95, %p96
    %p98 = scmp.ne.s32.totalorder %s87, %s90
    %p99 = scmp.eq.s32.totalorder %s14, 1
    %p100 = por %p98, %p99
    %p101 = scmp.ne.s32.totalorder %s90, %s91
    %p102 = scmp.eq.s32.totalorder %s14, 0
    %p103 = por %p101, %p102
    %p104 = scmp.ne.s32.totalorder %s90, %s91
    %p105 = scmp.eq.s32.totalorder %s15, 1
    %p106 = por %p104, %p105
    %p108 = scmp.ne.s32.totalorder %s91, %s107
    %p109 = scmp.eq.s32.totalorder %s15, 0
    %p110 = por %p108, %p109
    %p111 = scmp.le.s32.totalorder 1, %s9
    %p112 = scmp.lt.s32.totalorder %s9, 3
    %p113 = pnand %p111, %p112
    %p114 = pneg %p113
    // Predicated region
    $region9: #{unet_forward.17} parent=5 // pred_check
      _
    $region10: #{unet_forward.17} parent=5 // pred_check_branch
      %116 = sbr.rel (%p113) target = $region12
    $region11: #{unet_forward.17} parent=5 // pred_region
      %s117 = ssub.s32 %s9, 1
      // Predicated region
      $region13: #{unet_forward.17} parent=11 // pred_check
        %p118 = pneg %p56
      $region14: #{unet_forward.17} parent=11 // pred_check_branch
        %120 = sbr.rel (%p118) target = $region16
      $region15: #{unet_forward.17} parent=11 // pred_region
        _
      $region16: #{unet_forward.17} parent=11 // pred_fallthru
        _
      // Predicated region
      $region17: #{unet_forward.17} parent=11 // pred_check
        %p121 = pneg %p77
      $region18: #{unet_forward.17} parent=11 // pred_check_branch
        %123 = sbr.rel (%p121) target = $region20
      $region19: #{unet_forward.17} parent=11 // pred_region
        _
      $region20: #{unet_forward.17} parent=11 // pred_fallthru
        _
    $region12: #{unet_forward.17} parent=5 // pred_fallthru
      _
    %p124 = scmp.lt.s32.totalorder %s9, 2
    // Predicated region
    $region21: #{unet_forward.17} parent=5 // pred_check
      %p125 = pneg %p124
    $region22: #{unet_forward.17} parent=5 // pred_check_branch
      %127 = sbr.rel (%p125) target = $region24
    $region23: #{unet_forward.17} parent=5 // pred_region
      // Predicated region
      $region25: #{unet_forward.17} parent=23 // pred_check
        %p128 = pneg %p29
      $region26: #{unet_forward.17} parent=23 // pred_check_branch
        %130 = sbr.rel (%p128) target = $region28
      $region27: #{unet_forward.17} parent=23 // pred_region
        %s131 = smul.u32 32, %s9
        %p132 = scmp.lt.s32.totalorder %s131, 63
        %s133 = scalar_select %p132, %s131, 63
        %s134 = smul.addr %s133, 4
        %s135 = scalar_lea.vmem %s0, %s134
        %s136 = smul.u32 32, %s9
      $region28: #{unet_forward.17} parent=23 // pred_fallthru
        _
    $region24: #{unet_forward.17} parent=5 // pred_fallthru
      _
    %p137 = scmp.le.s32.totalorder 1, %s9
    %p138 = scmp.lt.s32.totalorder %s9, 3
    %p139 = pnand %p137, %p138
    %p140 = pneg %p139
    // Predicated region
    $region29: #{unet_forward.17} parent=5 // pred_check
      _
    $region30: #{unet_forward.17} parent=5 // pred_check_branch
      %142 = sbr.rel (%p139) target = $region32
    $region31: #{unet_forward.17} parent=5 // pred_region
      %s143 = ssub.s32 %s9, 1
      %s144 = smul.u32 32, %s14
      %p145 = scmp.lt.s32.totalorder %s144, 63
      %s146 = scalar_select %p145, %s144, 63
      %s147 = smul.addr %s146, 4
      %s148 = scalar_lea.vmem %s0, %s147
      %p149 = pneg %p35
      %p150 = pneg %p32
      %p151 = pneg %p56
      %p152 = pneg %p53
      %p153 = pneg %p77
      %p154 = pneg %p74
      %p155 = pneg %p103
      %p156 = pneg %p100
      %s157 = smul.u32 32, %s14
      %p158 = scmp.lt.s32.totalorder %s157, 63
      %s159 = scalar_select %p158, %s157, 63
      %s160 = smul.addr %s159, 8
      %s161 = scalar_lea.vmem %s3, %s160
      %s162 = smul.u32 32, %s14
      %p163 = scmp.lt.s32.totalorder %s162, 63
      %s164 = scalar_select %p163, %s162, 63
      %s165 = smul.addr %s164, 4
      %s166 = scalar_lea.vmem %s0, %s165
      %s167 = smul.u32 32, %s14
      %s168 = smul.u32 32, %s14
      %p169 = scmp.lt.s32.totalorder %s168, 63
      %s170 = scalar_select %p169, %s168, 63
      %s171 = smul.addr %s170, 8
      %s172 = scalar_lea.vmem %s3, %s171
      %s173 = smul.u32 32, %s14
      %v175 = vld [vmem:[%s166] sm:$0xf]
      %v176 = vld [vmem:[%s166 + $0x4] sm:$0xf]
      %v177 = vld [vmem:[%s166 + $0x8] sm:$0xf]
      %v178 = vld [vmem:[%s166 + $0xc] sm:$0xf]
      %v179 = vld [vmem:[%s166 + $0x10] sm:$0xf]
      %v180 = vld [vmem:[%s166 + $0x14] sm:$0xf]
      %v181 = vld [vmem:[%s166 + $0x18] sm:$0xf]
      %v182 = vld [vmem:[%s166 + $0x1c] sm:$0xf]
      %v183 = vld [vmem:[%s166 + $0x20] sm:$0xf]
      %v184 = vld [vmem:[%s166 + $0x24] sm:$0xf]
      %v185 = vld [vmem:[%s166 + $0x28] sm:$0xf]
      %v186 = vld [vmem:[%s166 + $0x2c] sm:$0xf]
      %v187 = vld [vmem:[%s166 + $0x30] sm:$0xf]
      %v188 = vld [vmem:[%s166 + $0x34] sm:$0xf]
      %v189 = vld [vmem:[%s166 + $0x38] sm:$0xf]
      %v190 = vld [vmem:[%s166 + $0x3c] sm:$0xf]
      %v191 = vld [vmem:[%s166 + $0x40] sm:$0xf]
      %v192 = vld [vmem:[%s166 + $0x44] sm:$0xf]
      %v193 = vld [vmem:[%s166 + $0x48] sm:$0xf]
      %v194 = vld [vmem:[%s166 + $0x4c] sm:$0xf]
      %v195 = vld [vmem:[%s166 + $0x50] sm:$0xf]
      %v196 = vld [vmem:[%s166 + $0x54] sm:$0xf]
      %v197 = vld [vmem:[%s166 + $0x58] sm:$0xf]
      %v198 = vld [vmem:[%s166 + $0x5c] sm:$0xf]
      %v199 = vld [vmem:[%s166 + $0x60] sm:$0xf]
      %v200 = vld [vmem:[%s166 + $0x64] sm:$0xf]
      %v201 = vld [vmem:[%s166 + $0x68] sm:$0xf]
      %v202 = vld [vmem:[%s166 + $0x6c] sm:$0xf]
      %v203 = vld [vmem:[%s166 + $0x70] sm:$0xf]
      %v204 = vld [vmem:[%s166 + $0x74] sm:$0xf]
      %v205 = vld [vmem:[%s166 + $0x78] sm:$0xf]
      %v206 = vld [vmem:[%s166 + $0x7c] sm:$0xf]
      %v207 = vld [vmem:[%s1] sm:$0xf]
      %v208 = vld [vmem:[%s1 + $0x4] sm:$0xf]
      %v209 = vld [vmem:[%s1 + $0x8] sm:$0xf]
      %v210 = vld [vmem:[%s1 + $0xc] sm:$0xf]
      %v211 = vld [vmem:[%s1 + $0x10] sm:$0xf]
      %v212 = vld [vmem:[%s1 + $0x14] sm:$0x7]
      %v213 = vld [vmem:[%s2] sm:$0x1]
      %v215 = vlaneseq
      %v216 = vshrl.u32 %v215, 7
      %v217 = vsub.s32 0, %v216
      %v218 = vrot.slane %v213, %v217
      %v252 = vunpack.c.l.b16 %v175
      %v253 = vunpack.c.l.b16 %v176
      %v254 = vunpack.c.l.b16 %v177
      %v255 = vunpack.c.l.b16 %v178
      %v256 = vunpack.c.l.b16 %v179
      %v257 = vunpack.c.l.b16 %v180
      %v258 = vunpack.c.l.b16 %v181
      %v259 = vunpack.c.l.b16 %v182
      %v260 = vunpack.c.l.b16 %v183
      %v261 = vunpack.c.l.b16 %v184
      %v262 = vunpack.c.l.b16 %v185
      %v263 = vunpack.c.l.b16 %v186
      %v264 = vunpack.c.l.b16 %v187
      %v265 = vunpack.c.l.b16 %v188
      %v266 = vunpack.c.l.b16 %v189
      %v267 = vunpack.c.l.b16 %v190
      %v268 = vunpack.c.l.b16 %v191
      %v269 = vunpack.c.l.b16 %v192
      %v270 = vunpack.c.l.b16 %v193
      %v271 = vunpack.c.l.b16 %v194
      %v272 = vunpack.c.l.b16 %v195
      %v273 = vunpack.c.l.b16 %v196
      %v274 = vunpack.c.l.b16 %v197
      %v275 = vunpack.c.l.b16 %v198
      %v276 = vunpack.c.l.b16 %v199
      %v277 = vunpack.c.l.b16 %v200
      %v278 = vunpack.c.l.b16 %v201
      %v279 = vunpack.c.l.b16 %v202
      %v280 = vunpack.c.l.b16 %v203
      %v281 = vunpack.c.l.b16 %v204
      %v282 = vunpack.c.l.b16 %v205
      %v283 = vunpack.c.l.b16 %v206
      %v284 = vpack.c.b16 %v253, %v252
      %v285 = vpack.c.b16 %v255, %v254
      %v286 = vpack.c.b16 %v257, %v256
      %v287 = vpack.c.b16 %v259, %v258
      %v288 = vpack.c.b16 %v261, %v260
      %v289 = vpack.c.b16 %v263, %v262
      %v290 = vpack.c.b16 %v265, %v264
      %v291 = vpack.c.b16 %v267, %v266
      %v292 = vpack.c.b16 %v269, %v268
      %v293 = vpack.c.b16 %v271, %v270
      %v294 = vpack.c.b16 %v273, %v272
      %v295 = vpack.c.b16 %v275, %v274
      %v296 = vpack.c.b16 %v277, %v276
      %v297 = vpack.c.b16 %v279, %v278
      %v298 = vpack.c.b16 %v281, %v280
      %v299 = vpack.c.b16 %v283, %v282
      %v306 = vunpack.c.l.b16 %v207
      %v307 = vunpack.c.l.b16 %v208
      %v308 = vunpack.c.l.b16 %v209
      %v309 = vunpack.c.l.b16 %v210
      %v310 = vunpack.c.l.b16 %v211
      %v311 = vunpack.c.l.b16 %v212
      %v312 = vpack.c.b16 %v307, %v306
      %v313 = vpack.c.b16 %v309, %v308
      %v314 = vpack.c.b16 %v311, %v310
      %vm317 = vcmask 367616
      %v319 = vsel %vm317, %v284, 0
      %v322 = vsel %vm317, %v285, 0
      %v325 = vsel %vm317, %v286, 0
      %v328 = vsel %vm317, %v287, 0
      %v331 = vsel %vm317, %v288, 0
      %v334 = vsel %vm317, %v289, 0
      %v337 = vsel %vm317, %v290, 0
      %v340 = vsel %vm317, %v291, 0
      %v343 = vsel %vm317, %v292, 0
      %v346 = vsel %vm317, %v293, 0
      %v349 = vsel %vm317, %v294, 0
      %v352 = vsel %vm317, %v295, 0
      %v355 = vsel %vm317, %v296, 0
      %v358 = vsel %vm317, %v297, 0
      %v361 = vsel %vm317, %v298, 0
      %v364 = vsel %vm317, %v299, 0
      %vm366 = vcmask 1045504
      %vm367 = vcmask 1046528
      %v368 = vsel %vm366, 4294967295, 65535
      %v369 = vsel %vm367, %v368, 0
      %v371 = vand.u32 %v314, %v369
      %373 = vmatprep.subr.bf16.mxu0 0
      %374 = vmatpush1.bf16.msra.mxu0 %v312
      %375 = vmatprep.subr.bf16.mxu0 0
      %376 = vmatpush1.bf16.msra.mxu0 %v313
      %377 = vmatprep.subr.bf16.mxu0 0
      %378 = vmatpush1.bf16.msra.mxu0 %v371
      %379 = vmatprep.subr.bf16.mxu0 0
      %380 = vmatpush1.bf16.msra.mxu0 0
      %381 = vmatprep.subr.bf16.mxu0 0
      %382 = vmatpush1.bf16.msra.mxu0 0
      %383 = vmatprep.subr.bf16.mxu0 0
      %384 = vmatpush1.bf16.msra.mxu0 0
      %385 = vmatprep.subr.bf16.mxu0 0
      %386 = vmatpush1.bf16.msra.mxu0 0
      %387 = vmatprep.subr.bf16.mxu0 0
      %388 = vmatpush1.bf16.msra.mxu0 0
      %389 = vmatprep.subr.bf16.mxu0 0
      %390 = vmatpush1.bf16.msra.mxu0 0
      %391 = vmatprep.subr.bf16.mxu0 0
      %392 = vmatpush1.bf16.msra.mxu0 0
      %393 = vmatprep.subr.bf16.mxu0 0
      %394 = vmatpush1.bf16.msra.mxu0 0
      %395 = vmatprep.subr.bf16.mxu0 0
      %396 = vmatpush1.bf16.msra.mxu0 0
      %397 = vmatprep.subr.bf16.mxu0 0
      %398 = vmatpush1.bf16.msra.mxu0 0
      %399 = vmatprep.subr.bf16.mxu0 0
      %400 = vmatpush1.bf16.msra.mxu0 0
      %401 = vmatprep.subr.bf16.mxu0 0
      %402 = vmatpush1.bf16.msra.mxu0 0
      %403 = vmatprep.subr.bf16.mxu0 0
      %404 = vmatpush1.bf16.msra.mxu0 0
      %405 = vmatprep.mubr.bf16.mxu0 0
      %406 = vmatmul.mubr.bf16.gmra.mrb[0].mxu0 %v319
      %v407 = vpop.f32.mrb[0].mxu0
      %v408 = vadd.f32 %v218, %v407
      %v409 = vpop.f32.mrb[0].mxu0
      %v410 = vpop.f32.mrb[0].mxu0
      %v411 = vadd.f32 %v218, %v410
      %v412 = vpop.f32.mrb[0].mxu0
      %413 = vmatprep.mubr.bf16.mxu0 0
      %414 = vmatmul.mubr.bf16.gmra.mrb[0].mxu0 %v322
      %v415 = vpop.f32.mrb[0].mxu0
      %v416 = vadd.f32 %v218, %v415
      %v417 = vpop.f32.mrb[0].mxu0
      %v418 = vpop.f32.mrb[0].mxu0
      %v419 = vadd.f32 %v218, %v418
      %v420 = vpop.f32.mrb[0].mxu0
      %421 = vmatprep.mubr.bf16.mxu0 0
      %422 = vmatmul.mubr.bf16.gmra.mrb[0].mxu0 %v325
      %v423 = vpop.f32.mrb[0].mxu0
      %v424 = vadd.f32 %v218, %v423
      %v425 = vpop.f32.mrb[0].mxu0
      %v426 = vpop.f32.mrb[0].mxu0
      %v427 = vadd.f32 %v218, %v426
      %v428 = vpop.f32.mrb[0].mxu0
      %429 = vmatprep.mubr.bf16.mxu0 0
      %430 = vmatmul.mubr.bf16.gmra.mrb[0].mxu0 %v328
      %v431 = vpop.f32.mrb[0].mxu0
      %v432 = vadd.f32 %v218, %v431
      %v433 = vpop.f32.mrb[0].mxu0
      %v434 = vpop.f32.mrb[0].mxu0
      %v435 = vadd.f32 %v218, %v434
      %v436 = vpop.f32.mrb[0].mxu0
      %437 = vmatprep.mubr.bf16.mxu0 0
      %438 = vmatmul.mubr.bf16.gmra.mrb[0].mxu0 %v331
      %v439 = vpop.f32.mrb[0].mxu0
      %v440 = vadd.f32 %v218, %v439
      %v441 = vpop.f32.mrb[0].mxu0
      %v442 = vpop.f32.mrb[0].mxu0
      %v443 = vadd.f32 %v218, %v442
      %v444 = vpop.f32.mrb[0].mxu0
      %445 = vmatprep.mubr.bf16.mxu0 0
      %446 = vmatmul.mubr.bf16.gmra.mrb[0].mxu0 %v334
      %v447 = vpop.f32.mrb[0].mxu0
      %v448 = vadd.f32 %v218, %v447
      %v449 = vpop.f32.mrb[0].mxu0
      %v450 = vpop.f32.mrb[0].mxu0
      %v451 = vadd.f32 %v218, %v450
      %v452 = vpop.f32.mrb[0].mxu0
      %453 = vmatprep.mubr.bf16.mxu0 0
      %454 = vmatmul.mubr.bf16.gmra.mrb[0].mxu0 %v337
      %v455 = vpop.f32.mrb[0].mxu0
      %v456 = vadd.f32 %v218, %v455
      %v457 = vpop.f32.mrb[0].mxu0
      %v458 = vpop.f32.mrb[0].mxu0
      %v459 = vadd.f32 %v218, %v458
      %v460 = vpop.f32.mrb[0].mxu0
      %461 = vmatprep.mubr.bf16.mxu0 0
      %462 = vmatmul.mubr.bf16.gmra.mrb[0].mxu0 %v340
      %v463 = vpop.f32.mrb[0].mxu0
      %v464 = vadd.f32 %v218, %v463
      %v465 = vpop.f32.mrb[0].mxu0
      %v466 = vpop.f32.mrb[0].mxu0
      %v467 = vadd.f32 %v218, %v466
      %v468 = vpop.f32.mrb[0].mxu0
      %469 = vmatprep.mubr.bf16.mxu0 0
      %470 = vmatmul.mubr.bf16.gmra.mrb[0].mxu0 %v343
      %v471 = vpop.f32.mrb[0].mxu0
      %v472 = vadd.f32 %v218, %v471
      %v473 = vpop.f32.mrb[0].mxu0
      %v474 = vpop.f32.mrb[0].mxu0
      %v475 = vadd.f32 %v218, %v474
      %v476 = vpop.f32.mrb[0].mxu0
      %477 = vmatprep.mubr.bf16.mxu0 0
      %478 = vmatmul.mubr.bf16.gmra.mrb[0].mxu0 %v346
      %v479 = vpop.f32.mrb[0].mxu0
      %v480 = vadd.f32 %v218, %v479
      %v481 = vpop.f32.mrb[0].mxu0
      %v482 = vpop.f32.mrb[0].mxu0
      %v483 = vadd.f32 %v218, %v482
      %v484 = vpop.f32.mrb[0].mxu0
      %485 = vmatprep.mubr.bf16.mxu0 0
      %486 = vmatmul.mubr.bf16.gmra.mrb[0].mxu0 %v349
      %v487 = vpop.f32.mrb[0].mxu0
      %v488 = vadd.f32 %v218, %v487
      %v489 = vpop.f32.mrb[0].mxu0
      %v490 = vpop.f32.mrb[0].mxu0
      %v491 = vadd.f32 %v218, %v490
      %v492 = vpop.f32.mrb[0].mxu0
      %493 = vmatprep.mubr.bf16.mxu0 0
      %494 = vmatmul.mubr.bf16.gmra.mrb[0].mxu0 %v352
      %v495 = vpop.f32.mrb[0].mxu0
      %v496 = vadd.f32 %v218, %v495
      %v497 = vpop.f32.mrb[0].mxu0
      %v498 = vpop.f32.mrb[0].mxu0
      %v499 = vadd.f32 %v218, %v498
      %v500 = vpop.f32.mrb[0].mxu0
      %501 = vmatprep.mubr.bf16.mxu0 0
      %502 = vmatmul.mubr.bf16.gmra.mrb[0].mxu0 %v355
      %v503 = vpop.f32.mrb[0].mxu0
      %v504 = vadd.f32 %v218, %v503
      %v505 = vpop.f32.mrb[0].mxu0
      %v506 = vpop.f32.mrb[0].mxu0
      %v507 = vadd.f32 %v218, %v506
      %v508 = vpop.f32.mrb[0].mxu0
      %509 = vmatprep.mubr.bf16.mxu0 0
      %510 = vmatmul.mubr.bf16.gmra.mrb[0].mxu0 %v358
      %v511 = vpop.f32.mrb[0].mxu0
      %v512 = vadd.f32 %v218, %v511
      %v513 = vpop.f32.mrb[0].mxu0
      %v514 = vpop.f32.mrb[0].mxu0
      %v515 = vadd.f32 %v218, %v514
      %v516 = vpop.f32.mrb[0].mxu0
      %517 = vmatprep.mubr.bf16.mxu0 0
      %518 = vmatmul.mubr.bf16.gmra.mrb[0].mxu0 %v361
      %v519 = vpop.f32.mrb[0].mxu0
      %v520 = vadd.f32 %v218, %v519
      %v521 = vpop.f32.mrb[0].mxu0
      %v522 = vpop.f32.mrb[0].mxu0
      %v523 = vadd.f32 %v218, %v522
      %v524 = vpop.f32.mrb[0].mxu0
      %525 = vmatprep.mubr.bf16.mxu0 0
      %526 = vmatmul.mubr.bf16.gmra.mrb[0].mxu0 %v364
      %v527 = vpop.f32.mrb[0].mxu0
      %v528 = vadd.f32 %v218, %v527
      %v529 = vpop.f32.mrb[0].mxu0
      %v530 = vpop.f32.mrb[0].mxu0
      %v531 = vadd.f32 %v218, %v530
      %v532 = vpop.f32.mrb[0].mxu0
      %533 = vdwg.mxu0
      %v534 = vxor.u32 %v408, 2147483648
      %v535 = vxor.u32 %v411, 2147483648
      %v536 = vxor.u32 %v416, 2147483648
      %v537 = vxor.u32 %v419, 2147483648
      %v538 = vxor.u32 %v424, 2147483648
      %v539 = vxor.u32 %v427, 2147483648
      %v540 = vxor.u32 %v432, 2147483648
      %v541 = vxor.u32 %v435, 2147483648
      %v542 = vxor.u32 %v440, 2147483648
      %v543 = vxor.u32 %v443, 2147483648
      %v544 = vxor.u32 %v448, 2147483648
      %v545 = vxor.u32 %v451, 2147483648
      %v546 = vxor.u32 %v456, 2147483648
      %v547 = vxor.u32 %v459, 2147483648
      %v548 = vxor.u32 %v464, 2147483648
      %v549 = vxor.u32 %v467, 2147483648
      %v550 = vxor.u32 %v472, 2147483648
      %v551 = vxor.u32 %v475, 2147483648
      %v552 = vxor.u32 %v480, 2147483648
      %v553 = vxor.u32 %v483, 2147483648
      %v554 = vxor.u32 %v488, 2147483648
      %v555 = vxor.u32 %v491, 2147483648
      %v556 = vxor.u32 %v496, 2147483648
      %v557 = vxor.u32 %v499, 2147483648
      %v558 = vxor.u32 %v504, 2147483648
      %v559 = vxor.u32 %v507, 2147483648
      %v560 = vxor.u32 %v512, 2147483648
      %v561 = vxor.u32 %v515, 2147483648
      %v562 = vxor.u32 %v520, 2147483648
      %v563 = vxor.u32 %v523, 2147483648
      %v564 = vxor.u32 %v528, 2147483648
      %v565 = vxor.u32 %v531, 2147483648
      %v566 = vmul.f32 %v534, 1.442695
      %v567 = vpow.pop %v566
      %v568 = vmul.f32 %v535, 1.442695
      %v569 = vpow.pop %v568
      %v570 = vmul.f32 %v536, 1.442695
      %v571 = vpow.pop %v570
      %v572 = vmul.f32 %v537, 1.442695
      %v573 = vpow.pop %v572
      %v574 = vmul.f32 %v538, 1.442695
      %v575 = vpow.pop %v574
      %v576 = vmul.f32 %v539, 1.442695
      %v577 = vpow.pop %v576
      %v578 = vmul.f32 %v540, 1.442695
      %v579 = vpow.pop %v578
      %v580 = vmul.f32 %v541, 1.442695
      %v581 = vpow.pop %v580
      %v582 = vmul.f32 %v542, 1.442695
      %v583 = vpow.pop %v582
      %v584 = vmul.f32 %v543, 1.442695
      %v585 = vpow.pop %v584
      %v586 = vmul.f32 %v544, 1.442695
      %v587 = vpow.pop %v586
      %v588 = vmul.f32 %v545, 1.442695
      %v589 = vpow.pop %v588
      %v590 = vmul.f32 %v546, 1.442695
      %v591 = vpow.pop %v590
      %v592 = vmul.f32 %v547, 1.442695
      %v593 = vpow.pop %v592
      %v594 = vmul.f32 %v548, 1.442695
      %v595 = vpow.pop %v594
      %v596 = vmul.f32 %v549, 1.442695
      %v597 = vpow.pop %v596
      %v598 = vmul.f32 %v550, 1.442695
      %v599 = vpow.pop %v598
      %v600 = vmul.f32 %v551, 1.442695
      %v601 = vpow.pop %v600
      %v602 = vmul.f32 %v552, 1.442695
      %v603 = vpow.pop %v602
      %v604 = vmul.f32 %v553, 1.442695
      %v605 = vpow.pop %v604
      %v606 = vmul.f32 %v554, 1.442695
      %v607 = vpow.pop %v606
      %v608 = vmul.f32 %v555, 1.442695
      %v609 = vpow.pop %v608
      %v610 = vmul.f32 %v556, 1.442695
      %v611 = vpow.pop %v610
      %v612 = vmul.f32 %v557, 1.442695
      %v613 = vpow.pop %v612
      %v614 = vmul.f32 %v558, 1.442695
      %v615 = vpow.pop %v614
      %v616 = vmul.f32 %v559, 1.442695
      %v617 = vpow.pop %v616
      %v618 = vmul.f32 %v560, 1.442695
      %v619 = vpow.pop %v618
      %v620 = vmul.f32 %v561, 1.442695
      %v621 = vpow.pop %v620
      %v622 = vmul.f32 %v562, 1.442695
      %v623 = vpow.pop %v622
      %v624 = vmul.f32 %v563, 1.442695
      %v625 = vpow.pop %v624
      %v626 = vmul.f32 %v564, 1.442695
      %v627 = vpow.pop %v626
      %v628 = vmul.f32 %v565, 1.442695
      %v629 = vpow.pop %v628
      %v630 = vadd.f32 %v567, 1.0
      %v631 = vadd.f32 %v569, 1.0
      %v632 = vadd.f32 %v571, 1.0
      %v633 = vadd.f32 %v573, 1.0
      %v634 = vadd.f32 %v575, 1.0
      %v635 = vadd.f32 %v577, 1.0
      %v636 = vadd.f32 %v579, 1.0
      %v637 = vadd.f32 %v581, 1.0
      %v638 = vadd.f32 %v583, 1.0
      %v639 = vadd.f32 %v585, 1.0
      %v640 = vadd.f32 %v587, 1.0
      %v641 = vadd.f32 %v589, 1.0
      %v642 = vadd.f32 %v591, 1.0
      %v643 = vadd.f32 %v593, 1.0
      %v644 = vadd.f32 %v595, 1.0
      %v645 = vadd.f32 %v597, 1.0
      %v646 = vadd.f32 %v599, 1.0
      %v647 = vadd.f32 %v601, 1.0
      %v648 = vadd.f32 %v603, 1.0
      %v649 = vadd.f32 %v605, 1.0
      %v650 = vadd.f32 %v607, 1.0
      %v651 = vadd.f32 %v609, 1.0
      %v652 = vadd.f32 %v611, 1.0
      %v653 = vadd.f32 %v613, 1.0
      %v654 = vadd.f32 %v615, 1.0
      %v655 = vadd.f32 %v617, 1.0
      %v656 = vadd.f32 %v619, 1.0
      %v657 = vadd.f32 %v621, 1.0
      %v658 = vadd.f32 %v623, 1.0
      %v659 = vadd.f32 %v625, 1.0
      %v660 = vadd.f32 %v627, 1.0
      %v661 = vadd.f32 %v629, 1.0
      %v662 = vrcp.pop %v630
      %v663 = vmul.f32 1.0, %v662
      %v664 = vrcp.pop %v631
      %v665 = vmul.f32 1.0, %v664
      %v666 = vrcp.pop %v632
      %v667 = vmul.f32 1.0, %v666
      %v668 = vrcp.pop %v633
      %v669 = vmul.f32 1.0, %v668
      %v670 = vrcp.pop %v634
      %v671 = vmul.f32 1.0, %v670
      %v672 = vrcp.pop %v635
      %v673 = vmul.f32 1.0, %v672
      %v674 = vrcp.pop %v636
      %v675 = vmul.f32 1.0, %v674
      %v676 = vrcp.pop %v637
      %v677 = vmul.f32 1.0, %v676
      %v678 = vrcp.pop %v638
      %v679 = vmul.f32 1.0, %v678
      %v680 = vrcp.pop %v639
      %v681 = vmul.f32 1.0, %v680
      %v682 = vrcp.pop %v640
      %v683 = vmul.f32 1.0, %v682
      %v684 = vrcp.pop %v641
      %v685 = vmul.f32 1.0, %v684
      %v686 = vrcp.pop %v642
      %v687 = vmul.f32 1.0, %v686
      %v688 = vrcp.pop %v643
      %v689 = vmul.f32 1.0, %v688
      %v690 = vrcp.pop %v644
      %v691 = vmul.f32 1.0, %v690
      %v692 = vrcp.pop %v645
      %v693 = vmul.f32 1.0, %v692
      %v694 = vrcp.pop %v646
      %v695 = vmul.f32 1.0, %v694
      %v696 = vrcp.pop %v647
      %v697 = vmul.f32 1.0, %v696
      %v698 = vrcp.pop %v648
      %v699 = vmul.f32 1.0, %v698
      %v700 = vrcp.pop %v649
      %v701 = vmul.f32 1.0, %v700
      %v702 = vrcp.pop %v650
      %v703 = vmul.f32 1.0, %v702
      %v704 = vrcp.pop %v651
      %v705 = vmul.f32 1.0, %v704
      %v706 = vrcp.pop %v652
      %v707 = vmul.f32 1.0, %v706
      %v708 = vrcp.pop %v653
      %v709 = vmul.f32 1.0, %v708
      %v710 = vrcp.pop %v654
      %v711 = vmul.f32 1.0, %v710
      %v712 = vrcp.pop %v655
      %v713 = vmul.f32 1.0, %v712
      %v714 = vrcp.pop %v656
      %v715 = vmul.f32 1.0, %v714
      %v716 = vrcp.pop %v657
      %v717 = vmul.f32 1.0, %v716
      %v718 = vrcp.pop %v658
      %v719 = vmul.f32 1.0, %v718
      %v720 = vrcp.pop %v659
      %v721 = vmul.f32 1.0, %v720
      %v722 = vrcp.pop %v660
      %v723 = vmul.f32 1.0, %v722
      %v724 = vrcp.pop %v661
      %v725 = vmul.f32 1.0, %v724
      %726 = vst [vmem:[%s172] sm:$0xff] %v663
      %727 = vst [vmem:[%s172 + $0x8] sm:$0xff] %v665
      %728 = vst [vmem:[%s172 + $0x10] sm:$0xff] %v667
      %729 = vst [vmem:[%s172 + $0x18] sm:$0xff] %v669
      %730 = vst [vmem:[%s172 + $0x20] sm:$0xff] %v671
      %731 = vst [vmem:[%s172 + $0x28] sm:$0xff] %v673
      %732 = vst [vmem:[%s172 + $0x30] sm:$0xff] %v675
      %733 = vst [vmem:[%s172 + $0x38] sm:$0xff] %v677
      %734 = vst [vmem:[%s172 + $0x40] sm:$0xff] %v679
      %735 = vst [vmem:[%s172 + $0x48] sm:$0xff] %v681
      %736 = vst [vmem:[%s172 + $0x50] sm:$0xff] %v683
      %737 = vst [vmem:[%s172 + $0x58] sm:$0xff] %v685
      %738 = vst [vmem:[%s172 + $0x60] sm:$0xff] %v687
      %739 = vst [vmem:[%s172 + $0x68] sm:$0xff] %v689
      %740 = vst [vmem:[%s172 + $0x70] sm:$0xff] %v691
      %741 = vst [vmem:[%s172 + $0x78] sm:$0xff] %v693
      %742 = vst [vmem:[%s172 + $0x80] sm:$0xff] %v695
      %743 = vst [vmem:[%s172 + $0x88] sm:$0xff] %v697
      %744 = vst [vmem:[%s172 + $0x90] sm:$0xff] %v699
      %745 = vst [vmem:[%s172 + $0x98] sm:$0xff] %v701
      %746 = vst [vmem:[%s172 + $0xa0] sm:$0xff] %v703
      %747 = vst [vmem:[%s172 + $0xa8] sm:$0xff] %v705
      %748 = vst [vmem:[%s172 + $0xb0] sm:$0xff] %v707
      %749 = vst [vmem:[%s172 + $0xb8] sm:$0xff] %v709
      %750 = vst [vmem:[%s172 + $0xc0] sm:$0xff] %v711
      %751 = vst [vmem:[%s172 + $0xc8] sm:$0xff] %v713
      %752 = vst [vmem:[%s172 + $0xd0] sm:$0xff] %v715
      %753 = vst [vmem:[%s172 + $0xd8] sm:$0xff] %v717
      %754 = vst [vmem:[%s172 + $0xe0] sm:$0xff] %v719
      %755 = vst [vmem:[%s172 + $0xe8] sm:$0xff] %v721
      %756 = vst [vmem:[%s172 + $0xf0] sm:$0xff] %v723
      %757 = vst [vmem:[%s172 + $0xf8] sm:$0xff] %v725
      %s758 = smul.u32 32, %s14
      %p759 = scmp.lt.s32.totalorder %s758, 63
      %s760 = scalar_select %p759, %s758, 63
      %s761 = smul.addr %s760, 8
      %s762 = scalar_lea.vmem %s3, %s761
      // Predicated region
      $region33: #{unet_forward.17} parent=31 // pred_check
        %p763 = pneg %p100
      $region34: #{unet_forward.17} parent=31 // pred_check_branch
        %765 = sbr.rel (%p763) target = $region36
      $region35: #{unet_forward.17} parent=31 // pred_region
        %s766 = smul.u32 32, %s14
      $region36: #{unet_forward.17} parent=31 // pred_fallthru
        _
    $region32: #{unet_forward.17} parent=5 // pred_fallthru
      _
    %p767 = scmp.le.s32.totalorder 2, %s9
    // Predicated region
    $region37: #{unet_forward.17} parent=5 // pred_check
      %p768 = pneg %p767
    $region38: #{unet_forward.17} parent=5 // pred_check_branch
      %770 = sbr.rel (%p768) target = $region40
    $region39: #{unet_forward.17} parent=5 // pred_region
      %s771 = ssub.s32 %s9, 2
      // Predicated region
      $region41: #{unet_forward.17} parent=39 // pred_check
        %p772 = pneg %p106
      $region42: #{unet_forward.17} parent=39 // pred_check_branch
        %774 = sbr.rel (%p772) target = $region44
      $region43: #{unet_forward.17} parent=39 // pred_region
        %s775 = smul.u32 32, %s15
        %p776 = scmp.lt.s32.totalorder %s775, 63
        %s777 = scalar_select %p776, %s775, 63
        %s778 = smul.addr %s777, 8
        %s779 = scalar_lea.vmem %s3, %s778
      $region44: #{unet_forward.17} parent=39 // pred_fallthru
        _
    $region40: #{unet_forward.17} parent=5 // pred_fallthru
      _
  $region6: #{unet_forward.17} parent=0 // loop_footer
    %s13 = sadd.s32 1, %s9
  $region7: #{unet_forward.17} parent=0 // loop_footer_branch
    %8 = sbr.rel target = $region3
  $region8: #{unet_forward.17} parent=0 // loop_exit
    _

</llo_original>
